<compile_context>
chip_gen: v7x
topology: tpu7x:2x2x1
jax: 0.10.0
libtpu: 0.0.40
codegen_flags: <defaults>
</compile_context>

<pallas_src>
import functools

import jax
import jax.numpy as jnp
from jax.experimental import pallas as pl
from jax.experimental.pallas import tpu as pltpu

NEG_INF = -1e9
_VMEM_LIMIT = 48 * 1024 * 1024   # safe double-buffering budget even on v7x (64 MiB VMEM)


def _pick_tile(dim, pref):
    """Use the (8/128-aligned) preferred tile if it divides `dim`, else the full dim."""
    return pref if dim % pref == 0 else dim


# ---------------------------------------------------------------------------- Pallas kernels

def _matmul_kernel(x_ref, w_ref, b_ref, o_ref, acc_ref, *, relu):
    """Tiled y = x @ w + b (optional ReLU); bf16 operands, f32 accumulation."""
    @pl.when(pl.program_id(2) == 0)
    def _():
        acc_ref[...] = jnp.zeros_like(acc_ref)

    acc_ref[...] += jnp.dot(x_ref[...], w_ref[...],
                            preferred_element_type=jnp.float32)

    @pl.when(pl.program_id(2) == pl.num_programs(2) - 1)
    def _():
        y = acc_ref[...] + b_ref[...]
        if relu:
            y = jnp.maximum(y, 0.0)
        o_ref[...] = y.astype(o_ref.dtype)


def _ln_kernel(x_ref, g_ref, b_ref, o_ref, *, eps):
    """Plain LayerNorm with f32 statistics (used by the generator)."""
    s = x_ref[...].astype(jnp.float32)
    mu = jnp.mean(s, axis=-1, keepdims=True)
    var = jnp.mean((s - mu) ** 2, axis=-1, keepdims=True)
    y = (s - mu) * jax.lax.rsqrt(var + eps)
    o_ref[...] = (y * g_ref[...] + b_ref[...]).astype(o_ref.dtype)


def _ffn_add_ln_kernel(h_ref, w1_ref, b1_ref, w2_ref, b2_ref, g_ref, bb_ref,
                       o_ref, *, eps):
    """LayerNorm(h + W2 @ relu(W1 @ h + b1) + b2) fused in one VMEM pass."""
    h = h_ref[...]                                                     # (tm, D) bf16
    u = jnp.dot(h, w1_ref[...], preferred_element_type=jnp.float32) + b1_ref[...]
    u = jnp.maximum(u, 0.0).astype(jnp.bfloat16)                       # (tm, F)
    ff = jnp.dot(u, w2_ref[...], preferred_element_type=jnp.float32) + b2_ref[...]
    s = h.astype(jnp.float32) + ff
    mu = jnp.mean(s, axis=-1, keepdims=True)
    var = jnp.mean((s - mu) ** 2, axis=-1, keepdims=True)
    y = (s - mu) * jax.lax.rsqrt(var + eps)
    o_ref[...] = (y * g_ref[...] + bb_ref[...]).astype(o_ref.dtype)


def _mha_proj_ln_kernel(q_ref, kv_ref, bias_ref, kpm_ref, wo_ref, bo_ref,
                        res_ref, g_ref, b_ref, o_ref, *,
                        H, dh, q_off, k_off, v_off, scale, eps):
    """Per-batch: LayerNorm(residual + W_o @ MHA(q, kv) + b_o) fully fused in VMEM.

    Bias = per-head rel-pos bias (+causal mask, folded in) + key-padding additive mask,
    combined in VMEM (never materialized as (B*H,Sq,Sk) in HBM).  Per-head contexts are
    folded into the output projection via the matching dh-row slice of W_o, so there is
    a single lane-dense (Sq,D) output store per batch."""
    q_all = q_ref[0]            # (Sq, Wq)  bf16
    kv_all = kv_ref[0]          # (Sk, Wkv) bf16
    kpm = kpm_ref[0]            # (1, Sk)   f32 additive key-padding mask

    # residual + output-projection bias, accumulated in f32
    acc = res_ref[0].astype(jnp.float32) + bo_ref[...]                 # (Sq, D)

    for h in range(H):          # H is small and static -> unrolled
        qh = q_all[:, q_off + h * dh: q_off + (h + 1) * dh]
        kh = kv_all[:, k_off + h * dh: k_off + (h + 1) * dh]
        vh = kv_all[:, v_off + h * dh: v_off + (h + 1) * dh]
        s = jax.lax.dot_general(qh, kh, (((1,), (1,)), ((), ())),
                                preferred_element_type=jnp.float32)
        s = s * scale + bias_ref[h] + kpm
        m = jnp.max(s, axis=-1, keepdims=True)
        e = jnp.exp(s - m)
        p = e * pl.reciprocal(jnp.sum(e, axis=-1, keepdims=True), approx=True)
        ctx_h = jnp.dot(p.astype(jnp.bfloat16), vh,
                        preferred_element_type=jnp.float32)            # (Sq, dh)
        # ctx @ W_o == sum_h ctx_h @ W_o[h*dh:(h+1)*dh, :]  (no concat, no partial stores)
        acc = acc + jnp.dot(ctx_h.astype(jnp.bfloat16),
                            wo_ref[h * dh:(h + 1) * dh, :],
                            preferred_element_type=jnp.float32)

    mu = jnp.mean(acc, axis=-1, keepdims=True)
    var = jnp.mean((acc - mu) ** 2, axis=-1, keepdims=True)
    y = (acc - mu) * jax.lax.rsqrt(var + eps)
    o_ref[0] = (y * g_ref[...] + b_ref[...]).astype(o_ref.dtype)


# ---------------------------------------------------------------------------- kernel wrappers

def linear(x, w, b, *, relu=False, out_dtype=jnp.bfloat16, tm=256, tn=256, tk=256):
    """x:(M,K) @ w:(K,N) + b:(N,). Tiled with a VMEM f32 accumulator."""
    M, K = x.shape
    N = w.shape[1]
    tm, tn, tk = _pick_tile(M, tm), _pick_tile(N, tn), _pick_tile(K, tk)
    grid = (M // tm, N // tn, K // tk)
    return pl.pallas_call(
        functools.partial(_matmul_kernel, relu=relu),
        grid=grid,
        in_specs=[pl.BlockSpec((tm, tk), lambda i, j, k: (i, k)),
                  pl.BlockSpec((tk, tn), lambda i, j, k: (k, j)),
                  pl.BlockSpec((1, tn), lambda i, j, k: (0, j))],
        out_specs=pl.BlockSpec((tm, tn), lambda i, j, k: (i, j)),
        out_shape=jax.ShapeDtypeStruct((M, N), out_dtype),
        scratch_shapes=[pltpu.VMEM((tm, tn), jnp.float32)],
        compiler_params=pltpu.CompilerParams(
            dimension_semantics=("parallel", "parallel", "arbitrary"),
            vmem_limit_bytes=_VMEM_LIMIT),
    )(x, w, b.reshape(1, N))


def layer_norm(x, g, b, eps, tm=256):
    M, D = x.shape
    tm = _pick_tile(M, tm)
    return pl.pallas_call(
        functools.partial(_ln_kernel, eps=eps),
        grid=(M // tm,),
        in_specs=[pl.BlockSpec((tm, D), lambda i: (i, 0)),
                  pl.BlockSpec((1, D), lambda i: (0, 0)),
                  pl.BlockSpec((1, D), lambda i: (0, 0))],
        out_specs=pl.BlockSpec((tm, D), lambda i: (i, 0)),
        out_shape=jax.ShapeDtypeStruct((M, D), jnp.bfloat16),
        compiler_params=pltpu.CompilerParams(
            dimension_semantics=("parallel",), vmem_limit_bytes=_VMEM_LIMIT),
    )(x, g.reshape(1, D), b.reshape(1, D))


def ffn_add_layernorm(h, w1, b1, w2, b2, g, b, eps, tm=256):
    M, D = h.shape
    F = w1.shape[1]
    tm = _pick_tile(M, tm)
    return pl.pallas_call(
        functools.partial(_ffn_add_ln_kernel, eps=eps),
        grid=(M // tm,),
        in_specs=[pl.BlockSpec((tm, D), lambda i: (i, 0)),
                  pl.BlockSpec((D, F), lambda i: (0, 0)),
                  pl.BlockSpec((1, F), lambda i: (0, 0)),
                  pl.BlockSpec((F, D), lambda i: (0, 0)),
                  pl.BlockSpec((1, D), lambda i: (0, 0)),
                  pl.BlockSpec((1, D), lambda i: (0, 0)),
                  pl.BlockSpec((1, D), lambda i: (0, 0))],
        out_specs=pl.BlockSpec((tm, D), lambda i: (i, 0)),
        out_shape=jax.ShapeDtypeStruct((M, D), jnp.bfloat16),
        compiler_params=pltpu.CompilerParams(
            dimension_semantics=("parallel",), vmem_limit_bytes=_VMEM_LIMIT),
    )(h, w1, b1.reshape(1, F), w2, b2.reshape(1, D), g.reshape(1, D), b.reshape(1, D))


def attention_block(q_slab, kv_slab, rel_bias, kpm_add, wo, bo, residual, ln_g, ln_b, *,
                    H, dh, q_off, k_off, v_off, eps):
    """Fused MHA + out-projection + residual + LayerNorm.

    q_slab:(B,Sq,Wq), kv_slab:(B,Sk,Wkv), residual:(B,Sq,D) bf16; rel_bias:(H,Sq,Sk) f32
    (causal mask folded in); kpm_add:(B,1,Sk) f32 additive.  Grid over the batch; heads
    unrolled in-kernel.  Returns LayerNorm(residual + MHA_out) as a (B,Sq,D) bf16 slab."""
    B, Sq, Wq = q_slab.shape
    _, Sk, Wkv = kv_slab.shape
    D = wo.shape[1]
    kern = functools.partial(_mha_proj_ln_kernel, H=H, dh=dh, q_off=q_off, k_off=k_off,
                             v_off=v_off, scale=1.0 / (dh ** 0.5), eps=eps)
    return pl.pallas_call(
        kern,
        grid=(B,),
        in_specs=[pl.BlockSpec((1, Sq, Wq), lambda i: (i, 0, 0)),
                  pl.BlockSpec((1, Sk, Wkv), lambda i: (i, 0, 0)),
                  pl.BlockSpec((H, Sq, Sk), lambda i: (0, 0, 0)),
                  pl.BlockSpec((1, 1, Sk), lambda i: (i, 0, 0)),
                  pl.BlockSpec((D, D), lambda i: (0, 0)),
                  pl.BlockSpec((1, D), lambda i: (0, 0)),
                  pl.BlockSpec((1, Sq, D), lambda i: (i, 0, 0)),
                  pl.BlockSpec((1, D), lambda i: (0, 0)),
                  pl.BlockSpec((1, D), lambda i: (0, 0))],
        out_specs=pl.BlockSpec((1, Sq, D), lambda i: (i, 0, 0)),
        out_shape=jax.ShapeDtypeStruct((B, Sq, D), jnp.bfloat16),
        compiler_params=pltpu.CompilerParams(
            dimension_semantics=("parallel",), vmem_limit_bytes=_VMEM_LIMIT),
    )(q_slab, kv_slab, rel_bias, kpm_add, wo, bo.reshape(1, D),
      residual, ln_g.reshape(1, D), ln_b.reshape(1, D))


# ---------------------------------------------------------------------------- model glue (plain JAX)

def rel_pos_bias(rel_emb, sq, sk, max_rel):
    """T5-style bucketed relative-position bias -> (H, sq, sk) f32."""
    qpos = jnp.arange(sq)[:, None]
    kpos = jnp.arange(sk)[None, :]
    bucket = jnp.clip(qpos - kpos, -max_rel, max_rel) + max_rel   # in [0, 2*max_rel]
    return rel_emb[bucket].transpose(2, 0, 1).astype(jnp.float32)


def encoder_layer(lp, x, rel_bias, kpm_add, cfg):
    B, S, D = x.shape
    H, dh, eps = cfg["H"], cfg["dh"], cfg["eps"]
    x2 = x.reshape(B * S, D)
    qkv = linear(x2, lp["w_qkv"], lp["b_qkv"]).reshape(B, S, 3 * D)   # fused [k|v|q]
    h = attention_block(qkv, qkv, rel_bias, kpm_add, lp["wo"], lp["bo"],
                        x, lp["ln1_g"], lp["ln1_b"],
                        H=H, dh=dh, q_off=2 * D, k_off=0, v_off=D, eps=eps)
    h = ffn_add_layernorm(h.reshape(B * S, D), lp["ff1_w"], lp["ff1_b"],
                          lp["ff2_w"], lp["ff2_b"], lp["ln2_g"], lp["ln2_b"], eps)
    return h.reshape(B, S, D)


def decoder_layer(lp, y, memory, self_bias, cross_bias, tgt_kpm_add, src_kpm_add, cfg):
    B, St, D = y.shape
    Ss = memory.shape[1]
    H, dh, eps = cfg["H"], cfg["dh"], cfg["eps"]

    y2 = y.reshape(B * St, D)
    qkv = linear(y2, lp["sa_w_qkv"], lp["sa_b_qkv"]).reshape(B, St, 3 * D)
    h1 = attention_block(qkv, qkv, self_bias, tgt_kpm_add, lp["sa_wo"], lp["sa_bo"],
                         y, lp["ln1_g"], lp["ln1_b"],
                         H=H, dh=dh, q_off=2 * D, k_off=0, v_off=D, eps=eps)

    q = linear(h1.reshape(B * St, D), lp["ca_wq"], lp["ca_bq"]).reshape(B, St, D)
    kv = linear(memory.reshape(B * Ss, D), lp["ca_w_kv"], lp["ca_b_kv"]).reshape(B, Ss, 2 * D)
    h2 = attention_block(q, kv, cross_bias, src_kpm_add, lp["ca_wo"], lp["ca_bo"],
                         h1, lp["ln2_g"], lp["ln2_b"],
                         H=H, dh=dh, q_off=0, k_off=0, v_off=D, eps=eps)

    h3 = ffn_add_layernorm(h2.reshape(B * St, D), lp["ff1_w"], lp["ff1_b"],
                           lp["ff2_w"], lp["ff2_b"], lp["ln3_g"], lp["ln3_b"], eps)
    return h3.reshape(B, St, D)


def forward(params, cfg, src_ids, tgt_ids, src_kpm, tgt_kpm, decoder_mask):
    D, H, eps, max_rel, V = cfg["D"], cfg["H"], cfg["eps"], cfg["max_rel"], cfg["V"]
    B, S_src = src_ids.shape
    _, S_tgt = tgt_ids.shape

    # token embeddings (padding row zeroed), batch-major bf16 slabs
    enc_x = params["src_emb"][src_ids]                       # (B, S_src, D) bf16
    dec_x = params["tgt_emb"][tgt_ids]                       # (B, S_tgt, D) bf16

    # per-head relative-position biases; causal mask folded into the decoder self bias
    enc_bias = rel_pos_bias(params["src_rel_emb"], S_src, S_src, max_rel)
    dec_bias = rel_pos_bias(params["tgt_rel_emb"], S_tgt, S_tgt, max_rel) + decoder_mask[None]
    cross_bias = rel_pos_bias(params["cross_rel_emb"], S_tgt, S_src, max_rel)  # use_cross_pos_attn

    src_kpm_add = jnp.where(src_kpm, NEG_INF, 0.0).astype(jnp.float32).reshape(B, 1, S_src)
    tgt_kpm_add = jnp.where(tgt_kpm, NEG_INF, 0.0).astype(jnp.float32).reshape(B, 1, S_tgt)

    x = enc_x
    for lp in params["enc_layers"]:
        x = encoder_layer(lp, x, enc_bias, src_kpm_add, cfg)
    memory = x

    y = dec_x
    for lp in params["dec_layers"]:
        y = decoder_layer(lp, y, memory, dec_bias, cross_bias,
                          tgt_kpm_add, src_kpm_add, cfg)

    # generator: LayerNorm + tied (pre-transposed) embedding projection -> token scores
    h = layer_norm(y.reshape(B * S_tgt, D), params["gen_ln_g"], params["gen_ln_b"], eps)
    logits = linear(h, params["tgt_emb_T"], params["gen_bias"], out_dtype=jnp.float32)
    return logits.reshape(B, S_tgt, V).transpose(1, 0, 2)    # seq-major (S_tgt, B, V)


# ---------------------------------------------------------------------------- deterministic init

def init_params(key, cfg):
    D, H, F, V = cfg["D"], cfg["H"], cfg["F"], cfg["V"]
    bins = 2 * cfg["max_rel"] + 1
    keys = iter(jax.random.split(key, 256))
    bf16 = jnp.bfloat16

    def w(shape, dtype=bf16):
        return (jax.random.normal(next(keys), shape, jnp.float32) * 0.02).astype(dtype)

    zeros = lambda s: jnp.zeros(s, jnp.float32)
    ones = lambda s: jnp.ones(s, jnp.float32)

    def enc_layer_p():
        return dict(
            w_qkv=w((D, 3 * D)), b_qkv=zeros((3 * D,)),      # fused [k | v | q]
            wo=w((D, D)), bo=zeros((D,)),
            ln1_g=ones((D,)), ln1_b=zeros((D,)),
            ff1_w=w((D, F)), ff1_b=zeros((F,)),
            ff2_w=w((F, D)), ff2_b=zeros((D,)),
            ln2_g=ones((D,)), ln2_b=zeros((D,)))

    def dec_layer_p():
        return dict(
            sa_w_qkv=w((D, 3 * D)), sa_b_qkv=zeros((3 * D,)),
            sa_wo=w((D, D)), sa_bo=zeros((D,)),
            ln1_g=ones((D,)), ln1_b=zeros((D,)),
            ca_wq=w((D, D)), ca_bq=zeros((D,)),
            ca_w_kv=w((D, 2 * D)), ca_b_kv=zeros((2 * D,)),  # fused [k | v]
            ca_wo=w((D, D)), ca_bo=zeros((D,)),
            ln2_g=ones((D,)), ln2_b=zeros((D,)),
            ff1_w=w((D, F)), ff1_b=zeros((F,)),
            ff2_w=w((F, D)), ff2_b=zeros((D,)),
            ln3_g=ones((D,)), ln3_b=zeros((D,)))

    src_emb = w((V, D), jnp.float32).at[cfg["pad_idx"]].set(0.0)
    tgt_emb = w((V, D), jnp.float32).at[cfg["pad_idx"]].set(0.0)

    return dict(
        src_emb=src_emb.astype(bf16),
        tgt_emb=tgt_emb.astype(bf16),
        tgt_emb_T=tgt_emb.T.astype(bf16),                    # tied generator weight, pre-transposed once
        src_rel_emb=w((bins, H), jnp.float32),
        tgt_rel_emb=w((bins, H), jnp.float32),
        cross_rel_emb=w((bins, H), jnp.float32),
        enc_layers=[enc_layer_p() for _ in range(cfg["n_enc"])],
        dec_layers=[dec_layer_p() for _ in range(cfg["n_dec"])],
        gen_ln_g=ones((D,)), gen_ln_b=zeros((D,)), gen_bias=zeros((V,)))


# ---------------------------------------------------------------------------- demo

if __name__ == "__main__":
    cfg = dict(D=64, H=4, dh=16, F=128, V=128, n_enc=2, n_dec=2,
               max_rel=8, eps=1e-6, pad_idx=1)
    B, S_src, S_tgt = 2, 8, 8

    root = jax.random.PRNGKey(0)
    kp, ks, kt = jax.random.split(root, 3)
    params = init_params(kp, cfg)

    src_ids = jax.random.randint(ks, (B, S_src), 2, cfg["V"])
    tgt_ids = jax.random.randint(kt, (B, S_tgt), 2, cfg["V"])
    src_kpm = jnp.zeros((B, S_src), bool)          # True = padding position
    tgt_kpm = jnp.zeros((B, S_tgt), bool)
    causal = jnp.where(jnp.triu(jnp.ones((S_tgt, S_tgt), jnp.float32), k=1) > 0,
                       NEG_INF, 0.0)               # decoder_mask (additive)

    fwd = jax.jit(functools.partial(forward, params, cfg))
    logits = fwd(src_ids, tgt_ids, src_kpm, tgt_kpm, causal)
    jax.block_until_ready(logits)

    assert logits.shape == (S_tgt, B, cfg["V"])
    assert bool(jnp.all(jnp.isfinite(logits)))
    print("KERNEL_OK")
</pallas_src>

<mosaic_0001>
module attributes {stable_mosaic.version = 11 : i64} {
  func.func @_matmul_kernel(%arg0: i32, %arg1: i32, %arg2: i32, %arg3: memref<16x64xbf16, #tpu.memory_space<vmem>>, %arg4: memref<64x192xbf16, #tpu.memory_space<vmem>>, %arg5: memref<1x192xf32, #tpu.memory_space<vmem>>, %arg6: memref<16x192xbf16, #tpu.memory_space<vmem>>, %arg7: memref<16x192xf32, #tpu.memory_space<vmem>>) attributes {dimension_semantics = [#tpu.dimension_semantics<parallel>, #tpu.dimension_semantics<parallel>, #tpu.dimension_semantics<arbitrary>], iteration_bounds = array<i64: 1, 1, 1>, scalar_prefetch = 0 : i64, scratch_operands = 1 : i64, tpu.core_type = #tpu.core_type<tc>, window_params = [{transform_indices = @transform_0, window_bounds = array<i64: 16, 64>}, {transform_indices = @transform_1, window_bounds = array<i64: 64, 192>}, {transform_indices = @transform_2, window_bounds = array<i64: 1, 192>}, {transform_indices = @transform_3, window_bounds = array<i64: 16, 192>}]} {
    %c0_i32 = arith.constant 0 : i32
    %0 = arith.cmpi eq, %arg2, %c0_i32 : i32
    %1 = arith.extui %0 : i1 to i32
    %c0_i32_0 = arith.constant 0 : i32
    %2 = arith.cmpi ne, %1, %c0_i32_0 : i32
    scf.if %2 {
      %cst_10 = arith.constant 0.000000e+00 : f32
      %12 = vector.broadcast %cst_10 : f32 to vector<16x192xf32>
      %c0_11 = arith.constant 0 : index
      %c0_12 = arith.constant 0 : index
      %13 = vector.load %arg7[%c0_11, %c0_12] : memref<16x192xf32, #tpu.memory_space<vmem>>, vector<16x192xf32>
      tpu.vector_store %arg7[%c0_11, %c0_12], %12 {strides = array<i32>} : memref<16x192xf32, #tpu.memory_space<vmem>>, vector<16x192xf32>,
    } else {
    }
    %c0 = arith.constant 0 : index
    %c0_1 = arith.constant 0 : index
    %3 = vector.load %arg7[%c0, %c0_1] : memref<16x192xf32, #tpu.memory_space<vmem>>, vector<16x192xf32>
    %c0_2 = arith.constant 0 : index
    %c0_3 = arith.constant 0 : index
    %4 = vector.load %arg3[%c0_2, %c0_3] : memref<16x64xbf16, #tpu.memory_space<vmem>>, vector<16x64xbf16>
    %c0_4 = arith.constant 0 : index
    %c0_5 = arith.constant 0 : index
    %5 = vector.load %arg4[%c0_4, %c0_5] : memref<64x192xbf16, #tpu.memory_space<vmem>>, vector<64x192xbf16>
    %cst = arith.constant dense<0.000000e+00> : vector<16x192xf32>
    %6 = tpu.matmul %4, %5, %cst {dimension_numbers = #tpu.dot_dimension_numbers<[1], [0], [0], [1], [0, 0, 1, 1], [], []>} : vector<16x64xbf16>, vector<64x192xbf16>, vector<16x192xf32> -> vector<16x192xf32>
    %7 = arith.addf %3, %6 : vector<16x192xf32>
    %c0_6 = arith.constant 0 : index
    %c0_7 = arith.constant 0 : index
    %8 = vector.load %arg7[%c0_6, %c0_7] : memref<16x192xf32, #tpu.memory_space<vmem>>, vector<16x192xf32>
    tpu.vector_store %arg7[%c0_6, %c0_7], %7 {strides = array<i32>} : memref<16x192xf32, #tpu.memory_space<vmem>>, vector<16x192xf32>,
    %c0_i32_8 = arith.constant 0 : i32
    %9 = arith.cmpi eq, %arg2, %c0_i32_8 : i32
    %10 = arith.extui %9 : i1 to i32
    %c0_i32_9 = arith.constant 0 : i32
    %11 = arith.cmpi ne, %10, %c0_i32_9 : i32
    scf.if %11 {
      %c0_10 = arith.constant 0 : index
      %c0_11 = arith.constant 0 : index
      %12 = vector.load %arg7[%c0_10, %c0_11] : memref<16x192xf32, #tpu.memory_space<vmem>>, vector<16x192xf32>
      %c0_12 = arith.constant 0 : index
      %c0_13 = arith.constant 0 : index
      %13 = vector.load %arg5[%c0_12, %c0_13] : memref<1x192xf32, #tpu.memory_space<vmem>>, vector<1x192xf32>
      %14 = vector.broadcast %13 : vector<1x192xf32> to vector<16x192xf32>
      %15 = arith.addf %12, %14 : vector<16x192xf32>
      %16 = arith.truncf %15 : vector<16x192xf32> to vector<16x192xbf16>
      %c0_14 = arith.constant 0 : index
      %c0_15 = arith.constant 0 : index
      %17 = vector.load %arg6[%c0_14, %c0_15] : memref<16x192xbf16, #tpu.memory_space<vmem>>, vector<16x192xbf16>
      tpu.vector_store %arg6[%c0_14, %c0_15], %16 {strides = array<i32>} : memref<16x192xbf16, #tpu.memory_space<vmem>>, vector<16x192xbf16>,
    } else {
    }
    return
  }
  func.func @transform_0(%arg0: i32, %arg1: i32, %arg2: i32) -> (i32, i32) {
    %c0_i32 = arith.constant 0 : i32
    return %arg0, %arg2 : i32, i32
  }
  func.func @transform_1(%arg0: i32, %arg1: i32, %arg2: i32) -> (i32, i32) {
    %c0_i32 = arith.constant 0 : i32
    return %arg2, %arg1 : i32, i32
  }
  func.func @transform_2(%arg0: i32, %arg1: i32, %arg2: i32) -> (i32, i32) {
    %c0_i32 = arith.constant 0 : i32
    %c0_i32_0 = arith.constant 0 : i32
    return %c0_i32, %arg1 : i32, i32
  }
  func.func @transform_3(%arg0: i32, %arg1: i32, %arg2: i32) -> (i32, i32) {
    %c0_i32 = arith.constant 0 : i32
    return %arg0, %arg1 : i32, i32
  }
}

module attributes {stable_mosaic.version = 11 : i64} {
  func.func @_mha_proj_ln_kernel(%arg0: i32, %arg1: memref<1x8x192xbf16, #tpu.memory_space<vmem>>, %arg2: memref<1x8x192xbf16, #tpu.memory_space<vmem>>, %arg3: memref<4x8x8xf32, #tpu.memory_space<vmem>>, %arg4: memref<1x1x8xf32, #tpu.memory_space<vmem>>, %arg5: memref<64x64xbf16, #tpu.memory_space<vmem>>, %arg6: memref<1x64xf32, #tpu.memory_space<vmem>>, %arg7: memref<1x8x64xbf16, #tpu.memory_space<vmem>>, %arg8: memref<1x64xf32, #tpu.memory_space<vmem>>, %arg9: memref<1x64xf32, #tpu.memory_space<vmem>>, %arg10: memref<1x8x64xbf16, #tpu.memory_space<vmem>>) attributes {dimension_semantics = [#tpu.dimension_semantics<parallel>], iteration_bounds = array<i64: 2>, scalar_prefetch = 0 : i64, scratch_operands = 0 : i64, tpu.core_type = #tpu.core_type<tc>, window_params = [{transform_indices = @transform_0, window_bounds = array<i64: 1, 8, 192>}, {transform_indices = @transform_1, window_bounds = array<i64: 1, 8, 192>}, {pipeline_mode = #tpu.pipeline_mode<synchronous>, transform_indices = @transform_2, window_bounds = array<i64: 4, 8, 8>}, {transform_indices = @transform_3, window_bounds = array<i64: 1, 1, 8>}, {pipeline_mode = #tpu.pipeline_mode<synchronous>, transform_indices = @transform_4, window_bounds = array<i64: 64, 64>}, {pipeline_mode = #tpu.pipeline_mode<synchronous>, transform_indices = @transform_5, window_bounds = array<i64: 1, 64>}, {transform_indices = @transform_6, window_bounds = array<i64: 1, 8, 64>}, {pipeline_mode = #tpu.pipeline_mode<synchronous>, transform_indices = @transform_7, window_bounds = array<i64: 1, 64>}, {pipeline_mode = #tpu.pipeline_mode<synchronous>, transform_indices = @transform_8, window_bounds = array<i64: 1, 64>}, {transform_indices = @transform_9, window_bounds = array<i64: 1, 8, 64>}]} {
    %c0 = arith.constant 0 : index
    %c0_0 = arith.constant 0 : index
    %c0_1 = arith.constant 0 : index
    %0 = vector.load %arg1[%c0, %c0_0, %c0_1] : memref<1x8x192xbf16, #tpu.memory_space<vmem>>, vector<1x8x192xbf16>
    %1 = vector.shape_cast %0 : vector<1x8x192xbf16> to vector<8x192xbf16>
    %c0_2 = arith.constant 0 : index
    %c0_3 = arith.constant 0 : index
    %c0_4 = arith.constant 0 : index
    %2 = vector.load %arg2[%c0_2, %c0_3, %c0_4] : memref<1x8x192xbf16, #tpu.memory_space<vmem>>, vector<1x8x192xbf16>
    %3 = vector.shape_cast %2 : vector<1x8x192xbf16> to vector<8x192xbf16>
    %c0_5 = arith.constant 0 : index
    %c0_6 = arith.constant 0 : index
    %c0_7 = arith.constant 0 : index
    %4 = vector.load %arg4[%c0_5, %c0_6, %c0_7] : memref<1x1x8xf32, #tpu.memory_space<vmem>>, vector<1x1x8xf32>
    %5 = vector.shape_cast %4 : vector<1x1x8xf32> to vector<1x8xf32>
    %c0_8 = arith.constant 0 : index
    %c0_9 = arith.constant 0 : index
    %c0_10 = arith.constant 0 : index
    %6 = vector.load %arg7[%c0_8, %c0_9, %c0_10] : memref<1x8x64xbf16, #tpu.memory_space<vmem>>, vector<1x8x64xbf16>
    %7 = vector.shape_cast %6 : vector<1x8x64xbf16> to vector<8x64xbf16>
    %8 = arith.extf %7 : vector<8x64xbf16> to vector<8x64xf32>
    %c0_11 = arith.constant 0 : index
    %c0_12 = arith.constant 0 : index
    %9 = vector.load %arg6[%c0_11, %c0_12] : memref<1x64xf32, #tpu.memory_space<vmem>>, vector<1x64xf32>
    %10 = vector.broadcast %9 : vector<1x64xf32> to vector<8x64xf32>
    %11 = arith.addf %8, %10 : vector<8x64xf32>
    %12 = vector.extract_strided_slice %1 {offsets = [0, 128], sizes = [8, 16], strides = [1, 1]} : vector<8x192xbf16> to vector<8x16xbf16>
    %13 = vector.extract_strided_slice %3 {offsets = [0, 0], sizes = [8, 16], strides = [1, 1]} : vector<8x192xbf16> to vector<8x16xbf16>
    %14 = vector.extract_strided_slice %3 {offsets = [0, 64], sizes = [8, 16], strides = [1, 1]} : vector<8x192xbf16> to vector<8x16xbf16>
    %cst = arith.constant dense<0.000000e+00> : vector<8x8xf32>
    %15 = tpu.matmul %12, %13, %cst {dimension_numbers = #tpu.dot_dimension_numbers<[1], [1], [0], [0], [0, 0, 1, 0], [], []>} : vector<8x16xbf16>, vector<8x16xbf16>, vector<8x8xf32> -> vector<8x8xf32>
    %cst_13 = arith.constant 2.500000e-01 : f32
    %16 = vector.broadcast %cst_13 : f32 to vector<8x8xf32>
    %17 = arith.mulf %15, %16 : vector<8x8xf32>
    %c0_14 = arith.constant 0 : index
    %c0_15 = arith.constant 0 : index
    %c0_16 = arith.constant 0 : index
    %18 = vector.load %arg3[%c0_14, %c0_15, %c0_16] : memref<4x8x8xf32, #tpu.memory_space<vmem>>, vector<1x8x8xf32>
    %19 = vector.shape_cast %18 : vector<1x8x8xf32> to vector<8x8xf32>
    %20 = arith.addf %17, %19 : vector<8x8xf32>
    %21 = vector.broadcast %5 : vector<1x8xf32> to vector<8x8xf32>
    %22 = arith.addf %20, %21 : vector<8x8xf32>
    %cst_17 = arith.constant dense<0xFF800000> : vector<8xf32>
    %23 = vector.multi_reduction <maximumf>, %22, %cst_17 [1] : vector<8x8xf32> to vector<8xf32>
    %24 = vector.shape_cast %23 : vector<8xf32> to vector<8x1xf32>
    %25 = vector.broadcast %24 : vector<8x1xf32> to vector<8x8xf32>
    %26 = arith.subf %22, %25 : vector<8x8xf32>
    %27 = math.exp %26 : vector<8x8xf32>
    %cst_18 = arith.constant dense<0.000000e+00> : vector<8xf32>
    %28 = vector.multi_reduction <add>, %27, %cst_18 [1] : vector<8x8xf32> to vector<8xf32>
    %29 = vector.shape_cast %28 : vector<8xf32> to vector<8x1xf32>
    %30 = tpu.reciprocal %29 {approx = true} : vector<8x1xf32> -> vector<8x1xf32>
    %31 = vector.broadcast %30 : vector<8x1xf32> to vector<8x8xf32>
    %32 = arith.mulf %27, %31 : vector<8x8xf32>
    %33 = arith.truncf %32 : vector<8x8xf32> to vector<8x8xbf16>
    %cst_19 = arith.constant dense<0.000000e+00> : vector<8x16xf32>
    %34 = tpu.matmul %33, %14, %cst_19 {dimension_numbers = #tpu.dot_dimension_numbers<[1], [0], [0], [1], [0, 0, 1, 1], [], []>} : vector<8x8xbf16>, vector<8x16xbf16>, vector<8x16xf32> -> vector<8x16xf32>
    %35 = arith.truncf %34 : vector<8x16xf32> to vector<8x16xbf16>
    %c0_20 = arith.constant 0 : index
    %c0_21 = arith.constant 0 : index
    %36 = vector.load %arg5[%c0_20, %c0_21] : memref<64x64xbf16, #tpu.memory_space<vmem>>, vector<16x64xbf16>
    %cst_22 = arith.constant dense<0.000000e+00> : vector<8x64xf32>
    %37 = tpu.matmul %35, %36, %cst_22 {dimension_numbers = #tpu.dot_dimension_numbers<[1], [0], [0], [1], [0, 0, 1, 1], [], []>} : vector<8x16xbf16>, vector<16x64xbf16>, vector<8x64xf32> -> vector<8x64xf32>
    %38 = arith.addf %11, %37 : vector<8x64xf32>
    %39 = vector.extract_strided_slice %1 {offsets = [0, 144], sizes = [8, 16], strides = [1, 1]} : vector<8x192xbf16> to vector<8x16xbf16>
    %40 = vector.extract_strided_slice %3 {offsets = [0, 16], sizes = [8, 16], strides = [1, 1]} : vector<8x192xbf16> to vector<8x16xbf16>
    %41 = vector.extract_strided_slice %3 {offsets = [0, 80], sizes = [8, 16], strides = [1, 1]} : vector<8x192xbf16> to vector<8x16xbf16>
    %cst_23 = arith.constant dense<0.000000e+00> : vector<8x8xf32>
    %42 = tpu.matmul %39, %40, %cst_23 {dimension_numbers = #tpu.dot_dimension_numbers<[1], [1], [0], [0], [0, 0, 1, 0], [], []>} : vector<8x16xbf16>, vector<8x16xbf16>, vector<8x8xf32> -> vector<8x8xf32>
    %cst_24 = arith.constant 2.500000e-01 : f32
    %43 = vector.broadcast %cst_24 : f32 to vector<8x8xf32>
    %44 = arith.mulf %42, %43 : vector<8x8xf32>
    %c1 = arith.constant 1 : index
    %c0_25 = arith.constant 0 : index
    %c0_26 = arith.constant 0 : index
    %45 = vector.load %arg3[%c1, %c0_25, %c0_26] : memref<4x8x8xf32, #tpu.memory_space<vmem>>, vector<1x8x8xf32>
    %46 = vector.shape_cast %45 : vector<1x8x8xf32> to vector<8x8xf32>
    %47 = arith.addf %44, %46 : vector<8x8xf32>
    %48 = vector.broadcast %5 : vector<1x8xf32> to vector<8x8xf32>
    %49 = arith.addf %47, %48 : vector<8x8xf32>
    %cst_27 = arith.constant dense<0xFF800000> : vector<8xf32>
    %50 = vector.multi_reduction <maximumf>, %49, %cst_27 [1] : vector<8x8xf32> to vector<8xf32>
    %51 = vector.shape_cast %50 : vector<8xf32> to vector<8x1xf32>
    %52 = vector.broadcast %51 : vector<8x1xf32> to vector<8x8xf32>
    %53 = arith.subf %49, %52 : vector<8x8xf32>
    %54 = math.exp %53 : vector<8x8xf32>
    %cst_28 = arith.constant dense<0.000000e+00> : vector<8xf32>
    %55 = vector.multi_reduction <add>, %54, %cst_28 [1] : vector<8x8xf32> to vector<8xf32>
    %56 = vector.shape_cast %55 : vector<8xf32> to vector<8x1xf32>
    %57 = tpu.reciprocal %56 {approx = true} : vector<8x1xf32> -> vector<8x1xf32>
    %58 = vector.broadcast %57 : vector<8x1xf32> to vector<8x8xf32>
    %59 = arith.mulf %54, %58 : vector<8x8xf32>
    %60 = arith.truncf %59 : vector<8x8xf32> to vector<8x8xbf16>
    %cst_29 = arith.constant dense<0.000000e+00> : vector<8x16xf32>
    %61 = tpu.matmul %60, %41, %cst_29 {dimension_numbers = #tpu.dot_dimension_numbers<[1], [0], [0], [1], [0, 0, 1, 1], [], []>} : vector<8x8xbf16>, vector<8x16xbf16>, vector<8x16xf32> -> vector<8x16xf32>
    %62 = arith.truncf %61 : vector<8x16xf32> to vector<8x16xbf16>
    %c16 = arith.constant 16 : index
    %c0_30 = arith.constant 0 : index
    %63 = vector.load %arg5[%c16, %c0_30] : memref<64x64xbf16, #tpu.memory_space<vmem>>, vector<16x64xbf16>
    %cst_31 = arith.constant dense<0.000000e+00> : vector<8x64xf32>
    %64 = tpu.matmul %62, %63, %cst_31 {dimension_numbers = #tpu.dot_dimension_numbers<[1], [0], [0], [1], [0, 0, 1, 1], [], []>} : vector<8x16xbf16>, vector<16x64xbf16>, vector<8x64xf32> -> vector<8x64xf32>
    %65 = arith.addf %38, %64 : vector<8x64xf32>
    %66 = vector.extract_strided_slice %1 {offsets = [0, 160], sizes = [8, 16], strides = [1, 1]} : vector<8x192xbf16> to vector<8x16xbf16>
    %67 = vector.extract_strided_slice %3 {offsets = [0, 32], sizes = [8, 16], strides = [1, 1]} : vector<8x192xbf16> to vector<8x16xbf16>
    %68 = vector.extract_strided_slice %3 {offsets = [0, 96], sizes = [8, 16], strides = [1, 1]} : vector<8x192xbf16> to vector<8x16xbf16>
    %cst_32 = arith.constant dense<0.000000e+00> : vector<8x8xf32>
    %69 = tpu.matmul %66, %67, %cst_32 {dimension_numbers = #tpu.dot_dimension_numbers<[1], [1], [0], [0], [0, 0, 1, 0], [], []>} : vector<8x16xbf16>, vector<8x16xbf16>, vector<8x8xf32> -> vector<8x8xf32>
    %cst_33 = arith.constant 2.500000e-01 : f32
    %70 = vector.broadcast %cst_33 : f32 to vector<8x8xf32>
    %71 = arith.mulf %69, %70 : vector<8x8xf32>
    %c2 = arith.constant 2 : index
    %c0_34 = arith.constant 0 : index
    %c0_35 = arith.constant 0 : index
    %72 = vector.load %arg3[%c2, %c0_34, %c0_35] : memref<4x8x8xf32, #tpu.memory_space<vmem>>, vector<1x8x8xf32>
    %73 = vector.shape_cast %72 : vector<1x8x8xf32> to vector<8x8xf32>
    %74 = arith.addf %71, %73 : vector<8x8xf32>
    %75 = vector.broadcast %5 : vector<1x8xf32> to vector<8x8xf32>
    %76 = arith.addf %74, %75 : vector<8x8xf32>
    %cst_36 = arith.constant dense<0xFF800000> : vector<8xf32>
    %77 = vector.multi_reduction <maximumf>, %76, %cst_36 [1] : vector<8x8xf32> to vector<8xf32>
    %78 = vector.shape_cast %77 : vector<8xf32> to vector<8x1xf32>
    %79 = vector.broadcast %78 : vector<8x1xf32> to vector<8x8xf32>
    %80 = arith.subf %76, %79 : vector<8x8xf32>
    %81 = math.exp %80 : vector<8x8xf32>
    %cst_37 = arith.constant dense<0.000000e+00> : vector<8xf32>
    %82 = vector.multi_reduction <add>, %81, %cst_37 [1] : vector<8x8xf32> to vector<8xf32>
    %83 = vector.shape_cast %82 : vector<8xf32> to vector<8x1xf32>
    %84 = tpu.reciprocal %83 {approx = true} : vector<8x1xf32> -> vector<8x1xf32>
    %85 = vector.broadcast %84 : vector<8x1xf32> to vector<8x8xf32>
    %86 = arith.mulf %81, %85 : vector<8x8xf32>
    %87 = arith.truncf %86 : vector<8x8xf32> to vector<8x8xbf16>
    %cst_38 = arith.constant dense<0.000000e+00> : vector<8x16xf32>
    %88 = tpu.matmul %87, %68, %cst_38 {dimension_numbers = #tpu.dot_dimension_numbers<[1], [0], [0], [1], [0, 0, 1, 1], [], []>} : vector<8x8xbf16>, vector<8x16xbf16>, vector<8x16xf32> -> vector<8x16xf32>
    %89 = arith.truncf %88 : vector<8x16xf32> to vector<8x16xbf16>
    %c32 = arith.constant 32 : index
    %c0_39 = arith.constant 0 : index
    %90 = vector.load %arg5[%c32, %c0_39] : memref<64x64xbf16, #tpu.memory_space<vmem>>, vector<16x64xbf16>
    %cst_40 = arith.constant dense<0.000000e+00> : vector<8x64xf32>
    %91 = tpu.matmul %89, %90, %cst_40 {dimension_numbers = #tpu.dot_dimension_numbers<[1], [0], [0], [1], [0, 0, 1, 1], [], []>} : vector<8x16xbf16>, vector<16x64xbf16>, vector<8x64xf32> -> vector<8x64xf32>
    %92 = arith.addf %65, %91 : vector<8x64xf32>
    %93 = vector.extract_strided_slice %1 {offsets = [0, 176], sizes = [8, 16], strides = [1, 1]} : vector<8x192xbf16> to vector<8x16xbf16>
    %94 = vector.extract_strided_slice %3 {offsets = [0, 48], sizes = [8, 16], strides = [1, 1]} : vector<8x192xbf16> to vector<8x16xbf16>
    %95 = vector.extract_strided_slice %3 {offsets = [0, 112], sizes = [8, 16], strides = [1, 1]} : vector<8x192xbf16> to vector<8x16xbf16>
    %cst_41 = arith.constant dense<0.000000e+00> : vector<8x8xf32>
    %96 = tpu.matmul %93, %94, %cst_41 {dimension_numbers = #tpu.dot_dimension_numbers<[1], [1], [0], [0], [0, 0, 1, 0], [], []>} : vector<8x16xbf16>, vector<8x16xbf16>, vector<8x8xf32> -> vector<8x8xf32>
    %cst_42 = arith.constant 2.500000e-01 : f32
    %97 = vector.broadcast %cst_42 : f32 to vector<8x8xf32>
    %98 = arith.mulf %96, %97 : vector<8x8xf32>
    %c3 = arith.constant 3 : index
    %c0_43 = arith.constant 0 : index
    %c0_44 = arith.constant 0 : index
    %99 = vector.load %arg3[%c3, %c0_43, %c0_44] : memref<4x8x8xf32, #tpu.memory_space<vmem>>, vector<1x8x8xf32>
    %100 = vector.shape_cast %99 : vector<1x8x8xf32> to vector<8x8xf32>
    %101 = arith.addf %98, %100 : vector<8x8xf32>
    %102 = vector.broadcast %5 : vector<1x8xf32> to vector<8x8xf32>
    %103 = arith.addf %101, %102 : vector<8x8xf32>
    %cst_45 = arith.constant dense<0xFF800000> : vector<8xf32>
    %104 = vector.multi_reduction <maximumf>, %103, %cst_45 [1] : vector<8x8xf32> to vector<8xf32>
    %105 = vector.shape_cast %104 : vector<8xf32> to vector<8x1xf32>
    %106 = vector.broadcast %105 : vector<8x1xf32> to vector<8x8xf32>
    %107 = arith.subf %103, %106 : vector<8x8xf32>
    %108 = math.exp %107 : vector<8x8xf32>
    %cst_46 = arith.constant dense<0.000000e+00> : vector<8xf32>
    %109 = vector.multi_reduction <add>, %108, %cst_46 [1] : vector<8x8xf32> to vector<8xf32>
    %110 = vector.shape_cast %109 : vector<8xf32> to vector<8x1xf32>
    %111 = tpu.reciprocal %110 {approx = true} : vector<8x1xf32> -> vector<8x1xf32>
    %112 = vector.broadcast %111 : vector<8x1xf32> to vector<8x8xf32>
    %113 = arith.mulf %108, %112 : vector<8x8xf32>
    %114 = arith.truncf %113 : vector<8x8xf32> to vector<8x8xbf16>
    %cst_47 = arith.constant dense<0.000000e+00> : vector<8x16xf32>
    %115 = tpu.matmul %114, %95, %cst_47 {dimension_numbers = #tpu.dot_dimension_numbers<[1], [0], [0], [1], [0, 0, 1, 1], [], []>} : vector<8x8xbf16>, vector<8x16xbf16>, vector<8x16xf32> -> vector<8x16xf32>
    %116 = arith.truncf %115 : vector<8x16xf32> to vector<8x16xbf16>
    %c48 = arith.constant 48 : index
    %c0_48 = arith.constant 0 : index
    %117 = vector.load %arg5[%c48, %c0_48] : memref<64x64xbf16, #tpu.memory_space<vmem>>, vector<16x64xbf16>
    %cst_49 = arith.constant dense<0.000000e+00> : vector<8x64xf32>
    %118 = tpu.matmul %116, %117, %cst_49 {dimension_numbers = #tpu.dot_dimension_numbers<[1], [0], [0], [1], [0, 0, 1, 1], [], []>} : vector<8x16xbf16>, vector<16x64xbf16>, vector<8x64xf32> -> vector<8x64xf32>
    %119 = arith.addf %92, %118 : vector<8x64xf32>
    %cst_50 = arith.constant dense<0.000000e+00> : vector<8xf32>
    %120 = vector.multi_reduction <add>, %119, %cst_50 [1] : vector<8x64xf32> to vector<8xf32>
    %121 = vector.shape_cast %120 : vector<8xf32> to vector<8x1xf32>
    %cst_51 = arith.constant 6.400000e+01 : f32
    %122 = vector.broadcast %cst_51 : f32 to vector<8x1xf32>
    %123 = arith.divf %121, %122 : vector<8x1xf32>
    %124 = vector.broadcast %123 : vector<8x1xf32> to vector<8x64xf32>
    %125 = arith.subf %119, %124 : vector<8x64xf32>
    %126 = arith.mulf %125, %125 : vector<8x64xf32>
    %cst_52 = arith.constant dense<0.000000e+00> : vector<8xf32>
    %127 = vector.multi_reduction <add>, %126, %cst_52 [1] : vector<8x64xf32> to vector<8xf32>
    %128 = vector.shape_cast %127 : vector<8xf32> to vector<8x1xf32>
    %cst_53 = arith.constant 6.400000e+01 : f32
    %129 = vector.broadcast %cst_53 : f32 to vector<8x1xf32>
    %130 = arith.divf %128, %129 : vector<8x1xf32>
    %131 = vector.broadcast %123 : vector<8x1xf32> to vector<8x64xf32>
    %132 = arith.subf %119, %131 : vector<8x64xf32>
    %cst_54 = arith.constant 9.99999997E-7 : f32
    %133 = vector.broadcast %cst_54 : f32 to vector<8x1xf32>
    %134 = arith.addf %130, %133 : vector<8x1xf32>
    %135 = math.rsqrt %134 : vector<8x1xf32>
    %136 = vector.broadcast %135 : vector<8x1xf32> to vector<8x64xf32>
    %137 = arith.mulf %132, %136 : vector<8x64xf32>
    %c0_55 = arith.constant 0 : index
    %c0_56 = arith.constant 0 : index
    %138 = vector.load %arg8[%c0_55, %c0_56] : memref<1x64xf32, #tpu.memory_space<vmem>>, vector<1x64xf32>
    %139 = vector.broadcast %138 : vector<1x64xf32> to vector<8x64xf32>
    %140 = arith.mulf %137, %139 : vector<8x64xf32>
    %c0_57 = arith.constant 0 : index
    %c0_58 = arith.constant 0 : index
    %141 = vector.load %arg9[%c0_57, %c0_58] : memref<1x64xf32, #tpu.memory_space<vmem>>, vector<1x64xf32>
    %142 = vector.broadcast %141 : vector<1x64xf32> to vector<8x64xf32>
    %143 = arith.addf %140, %142 : vector<8x64xf32>
    %144 = arith.truncf %143 : vector<8x64xf32> to vector<8x64xbf16>
    %c0_59 = arith.constant 0 : index
    %c0_60 = arith.constant 0 : index
    %c0_61 = arith.constant 0 : index
    %145 = vector.load %arg10[%c0_59, %c0_60, %c0_61] : memref<1x8x64xbf16, #tpu.memory_space<vmem>>, vector<1x8x64xbf16>
    %146 = vector.shape_cast %145 : vector<1x8x64xbf16> to vector<8x64xbf16>
    %147 = vector.shape_cast %144 : vector<8x64xbf16> to vector<1x8x64xbf16>
    tpu.vector_store %arg10[%c0_59, %c0_60, %c0_61], %147 {strides = array<i32>} : memref<1x8x64xbf16, #tpu.memory_space<vmem>>, vector<1x8x64xbf16>,
    return
  }
  func.func @transform_0(%arg0: i32) -> (i32, i32, i32) {
    %c0_i32 = arith.constant 0 : i32
    %c0_i32_0 = arith.constant 0 : i32
    %c0_i32_1 = arith.constant 0 : i32
    return %arg0, %c0_i32, %c0_i32_0 : i32, i32, i32
  }
  func.func @transform_1(%arg0: i32) -> (i32, i32, i32) {
    %c0_i32 = arith.constant 0 : i32
    %c0_i32_0 = arith.constant 0 : i32
    %c0_i32_1 = arith.constant 0 : i32
    return %arg0, %c0_i32, %c0_i32_0 : i32, i32, i32
  }
  func.func @transform_2(%arg0: i32) -> (i32, i32, i32) {
    %c0_i32 = arith.constant 0 : i32
    %c0_i32_0 = arith.constant 0 : i32
    %c0_i32_1 = arith.constant 0 : i32
    %c0_i32_2 = arith.constant 0 : i32
    return %c0_i32, %c0_i32_0, %c0_i32_1 : i32, i32, i32
  }
  func.func @transform_3(%arg0: i32) -> (i32, i32, i32) {
    %c0_i32 = arith.constant 0 : i32
    %c0_i32_0 = arith.constant 0 : i32
    %c0_i32_1 = arith.constant 0 : i32
    return %arg0, %c0_i32, %c0_i32_0 : i32, i32, i32
  }
  func.func @transform_4(%arg0: i32) -> (i32, i32) {
    %c0_i32 = arith.constant 0 : i32
    %c0_i32_0 = arith.constant 0 : i32
    %c0_i32_1 = arith.constant 0 : i32
    return %c0_i32, %c0_i32_0 : i32, i32
  }
  func.func @transform_5(%arg0: i32) -> (i32, i32) {
    %c0_i32 = arith.constant 0 : i32
    %c0_i32_0 = arith.constant 0 : i32
    %c0_i32_1 = arith.constant 0 : i32
    return %c0_i32, %c0_i32_0 : i32, i32
  }
  func.func @transform_6(%arg0: i32) -> (i32, i32, i32) {
    %c0_i32 = arith.constant 0 : i32
    %c0_i32_0 = arith.constant 0 : i32
    %c0_i32_1 = arith.constant 0 : i32
    return %arg0, %c0_i32, %c0_i32_0 : i32, i32, i32
  }
  func.func @transform_7(%arg0: i32) -> (i32, i32) {
    %c0_i32 = arith.constant 0 : i32
    %c0_i32_0 = arith.constant 0 : i32
    %c0_i32_1 = arith.constant 0 : i32
    return %c0_i32, %c0_i32_0 : i32, i32
  }
  func.func @transform_8(%arg0: i32) -> (i32, i32) {
    %c0_i32 = arith.constant 0 : i32
    %c0_i32_0 = arith.constant 0 : i32
    %c0_i32_1 = arith.constant 0 : i32
    return %c0_i32, %c0_i32_0 : i32, i32
  }
  func.func @transform_9(%arg0: i32) -> (i32, i32, i32) {
    %c0_i32 = arith.constant 0 : i32
    %c0_i32_0 = arith.constant 0 : i32
    %c0_i32_1 = arith.constant 0 : i32
    return %arg0, %c0_i32, %c0_i32_0 : i32, i32, i32
  }
}

module attributes {stable_mosaic.version = 11 : i64} {
  func.func @_ffn_add_ln_kernel(%arg0: i32, %arg1: memref<16x64xbf16, #tpu.memory_space<vmem>>, %arg2: memref<64x128xbf16, #tpu.memory_space<vmem>>, %arg3: memref<1x128xf32, #tpu.memory_space<vmem>>, %arg4: memref<128x64xbf16, #tpu.memory_space<vmem>>, %arg5: memref<1x64xf32, #tpu.memory_space<vmem>>, %arg6: memref<1x64xf32, #tpu.memory_space<vmem>>, %arg7: memref<1x64xf32, #tpu.memory_space<vmem>>, %arg8: memref<16x64xbf16, #tpu.memory_space<vmem>>) attributes {dimension_semantics = [#tpu.dimension_semantics<parallel>], iteration_bounds = array<i64: 1>, scalar_prefetch = 0 : i64, scratch_operands = 0 : i64, tpu.core_type = #tpu.core_type<tc>, window_params = [{transform_indices = @transform_0, window_bounds = array<i64: 16, 64>}, {pipeline_mode = #tpu.pipeline_mode<synchronous>, transform_indices = @transform_1, window_bounds = array<i64: 64, 128>}, {pipeline_mode = #tpu.pipeline_mode<synchronous>, transform_indices = @transform_2, window_bounds = array<i64: 1, 128>}, {pipeline_mode = #tpu.pipeline_mode<synchronous>, transform_indices = @transform_3, window_bounds = array<i64: 128, 64>}, {pipeline_mode = #tpu.pipeline_mode<synchronous>, transform_indices = @transform_4, window_bounds = array<i64: 1, 64>}, {pipeline_mode = #tpu.pipeline_mode<synchronous>, transform_indices = @transform_5, window_bounds = array<i64: 1, 64>}, {pipeline_mode = #tpu.pipeline_mode<synchronous>, transform_indices = @transform_6, window_bounds = array<i64: 1, 64>}, {transform_indices = @transform_7, window_bounds = array<i64: 16, 64>}]} {
    %c0 = arith.constant 0 : index
    %c0_0 = arith.constant 0 : index
    %0 = vector.load %arg1[%c0, %c0_0] : memref<16x64xbf16, #tpu.memory_space<vmem>>, vector<16x64xbf16>
    %c0_1 = arith.constant 0 : index
    %c0_2 = arith.constant 0 : index
    %1 = vector.load %arg2[%c0_1, %c0_2] : memref<64x128xbf16, #tpu.memory_space<vmem>>, vector<64x128xbf16>
    %cst = arith.constant dense<0.000000e+00> : vector<16x128xf32>
    %2 = tpu.matmul %0, %1, %cst {dimension_numbers = #tpu.dot_dimension_numbers<[1], [0], [0], [1], [0, 0, 1, 1], [], []>} : vector<16x64xbf16>, vector<64x128xbf16>, vector<16x128xf32> -> vector<16x128xf32>
    %c0_3 = arith.constant 0 : index
    %c0_4 = arith.constant 0 : index
    %3 = vector.load %arg3[%c0_3, %c0_4] : memref<1x128xf32, #tpu.memory_space<vmem>>, vector<1x128xf32>
    %4 = vector.broadcast %3 : vector<1x128xf32> to vector<16x128xf32>
    %5 = arith.addf %2, %4 : vector<16x128xf32>
    %cst_5 = arith.constant 0.000000e+00 : f32
    %6 = vector.broadcast %cst_5 : f32 to vector<16x128xf32>
    %7 = arith.maximumf %5, %6 : vector<16x128xf32>
    %8 = arith.truncf %7 : vector<16x128xf32> to vector<16x128xbf16>
    %c0_6 = arith.constant 0 : index
    %c0_7 = arith.constant 0 : index
    %9 = vector.load %arg4[%c0_6, %c0_7] : memref<128x64xbf16, #tpu.memory_space<vmem>>, vector<128x64xbf16>
    %cst_8 = arith.constant dense<0.000000e+00> : vector<16x64xf32>
    %10 = tpu.matmul %8, %9, %cst_8 {dimension_numbers = #tpu.dot_dimension_numbers<[1], [0], [0], [1], [0, 0, 1, 1], [], []>} : vector<16x128xbf16>, vector<128x64xbf16>, vector<16x64xf32> -> vector<16x64xf32>
    %c0_9 = arith.constant 0 : index
    %c0_10 = arith.constant 0 : index
    %11 = vector.load %arg5[%c0_9, %c0_10] : memref<1x64xf32, #tpu.memory_space<vmem>>, vector<1x64xf32>
    %12 = vector.broadcast %11 : vector<1x64xf32> to vector<16x64xf32>
    %13 = arith.addf %10, %12 : vector<16x64xf32>
    %14 = arith.extf %0 : vector<16x64xbf16> to vector<16x64xf32>
    %15 = arith.addf %14, %13 : vector<16x64xf32>
    %cst_11 = arith.constant dense<0.000000e+00> : vector<16xf32>
    %16 = vector.multi_reduction <add>, %15, %cst_11 [1] : vector<16x64xf32> to vector<16xf32>
    %17 = vector.shape_cast %16 : vector<16xf32> to vector<16x1xf32>
    %cst_12 = arith.constant 6.400000e+01 : f32
    %18 = vector.broadcast %cst_12 : f32 to vector<16x1xf32>
    %19 = arith.divf %17, %18 : vector<16x1xf32>
    %20 = vector.broadcast %19 : vector<16x1xf32> to vector<16x64xf32>
    %21 = arith.subf %15, %20 : vector<16x64xf32>
    %22 = arith.mulf %21, %21 : vector<16x64xf32>
    %cst_13 = arith.constant dense<0.000000e+00> : vector<16xf32>
    %23 = vector.multi_reduction <add>, %22, %cst_13 [1] : vector<16x64xf32> to vector<16xf32>
    %24 = vector.shape_cast %23 : vector<16xf32> to vector<16x1xf32>
    %cst_14 = arith.constant 6.400000e+01 : f32
    %25 = vector.broadcast %cst_14 : f32 to vector<16x1xf32>
    %26 = arith.divf %24, %25 : vector<16x1xf32>
    %27 = vector.broadcast %19 : vector<16x1xf32> to vector<16x64xf32>
    %28 = arith.subf %15, %27 : vector<16x64xf32>
    %cst_15 = arith.constant 9.99999997E-7 : f32
    %29 = vector.broadcast %cst_15 : f32 to vector<16x1xf32>
    %30 = arith.addf %26, %29 : vector<16x1xf32>
    %31 = math.rsqrt %30 : vector<16x1xf32>
    %32 = vector.broadcast %31 : vector<16x1xf32> to vector<16x64xf32>
    %33 = arith.mulf %28, %32 : vector<16x64xf32>
    %c0_16 = arith.constant 0 : index
    %c0_17 = arith.constant 0 : index
    %34 = vector.load %arg6[%c0_16, %c0_17] : memref<1x64xf32, #tpu.memory_space<vmem>>, vector<1x64xf32>
    %35 = vector.broadcast %34 : vector<1x64xf32> to vector<16x64xf32>
    %36 = arith.mulf %33, %35 : vector<16x64xf32>
    %c0_18 = arith.constant 0 : index
    %c0_19 = arith.constant 0 : index
    %37 = vector.load %arg7[%c0_18, %c0_19] : memref<1x64xf32, #tpu.memory_space<vmem>>, vector<1x64xf32>
    %38 = vector.broadcast %37 : vector<1x64xf32> to vector<16x64xf32>
    %39 = arith.addf %36, %38 : vector<16x64xf32>
    %40 = arith.truncf %39 : vector<16x64xf32> to vector<16x64xbf16>
    %c0_20 = arith.constant 0 : index
    %c0_21 = arith.constant 0 : index
    %41 = vector.load %arg8[%c0_20, %c0_21] : memref<16x64xbf16, #tpu.memory_space<vmem>>, vector<16x64xbf16>
    tpu.vector_store %arg8[%c0_20, %c0_21], %40 {strides = array<i32>} : memref<16x64xbf16, #tpu.memory_space<vmem>>, vector<16x64xbf16>,
    return
  }
  func.func @transform_0(%arg0: i32) -> (i32, i32) {
    %c0_i32 = arith.constant 0 : i32
    %c0_i32_0 = arith.constant 0 : i32
    return %arg0, %c0_i32 : i32, i32
  }
  func.func @transform_1(%arg0: i32) -> (i32, i32) {
    %c0_i32 = arith.constant 0 : i32
    %c0_i32_0 = arith.constant 0 : i32
    %c0_i32_1 = arith.constant 0 : i32
    return %c0_i32, %c0_i32_0 : i32, i32
  }
  func.func @transform_2(%arg0: i32) -> (i32, i32) {
    %c0_i32 = arith.constant 0 : i32
    %c0_i32_0 = arith.constant 0 : i32
    %c0_i32_1 = arith.constant 0 : i32
    return %c0_i32, %c0_i32_0 : i32, i32
  }
  func.func @transform_3(%arg0: i32) -> (i32, i32) {
    %c0_i32 = arith.constant 0 : i32
    %c0_i32_0 = arith.constant 0 : i32
    %c0_i32_1 = arith.constant 0 : i32
    return %c0_i32, %c0_i32_0 : i32, i32
  }
  func.func @transform_4(%arg0: i32) -> (i32, i32) {
    %c0_i32 = arith.constant 0 : i32
    %c0_i32_0 = arith.constant 0 : i32
    %c0_i32_1 = arith.constant 0 : i32
    return %c0_i32, %c0_i32_0 : i32, i32
  }
  func.func @transform_5(%arg0: i32) -> (i32, i32) {
    %c0_i32 = arith.constant 0 : i32
    %c0_i32_0 = arith.constant 0 : i32
    %c0_i32_1 = arith.constant 0 : i32
    return %c0_i32, %c0_i32_0 : i32, i32
  }
  func.func @transform_6(%arg0: i32) -> (i32, i32) {
    %c0_i32 = arith.constant 0 : i32
    %c0_i32_0 = arith.constant 0 : i32
    %c0_i32_1 = arith.constant 0 : i32
    return %c0_i32, %c0_i32_0 : i32, i32
  }
  func.func @transform_7(%arg0: i32) -> (i32, i32) {
    %c0_i32 = arith.constant 0 : i32
    %c0_i32_0 = arith.constant 0 : i32
    return %arg0, %c0_i32 : i32, i32
  }
}

module attributes {stable_mosaic.version = 11 : i64} {
  func.func @_matmul_kernel(%arg0: i32, %arg1: i32, %arg2: i32, %arg3: memref<16x64xbf16, #tpu.memory_space<vmem>>, %arg4: memref<64x128xbf16, #tpu.memory_space<vmem>>, %arg5: memref<1x128xf32, #tpu.memory_space<vmem>>, %arg6: memref<16x128xbf16, #tpu.memory_space<vmem>>, %arg7: memref<16x128xf32, #tpu.memory_space<vmem>>) attributes {dimension_semantics = [#tpu.dimension_semantics<parallel>, #tpu.dimension_semantics<parallel>, #tpu.dimension_semantics<arbitrary>], iteration_bounds = array<i64: 1, 1, 1>, scalar_prefetch = 0 : i64, scratch_operands = 1 : i64, tpu.core_type = #tpu.core_type<tc>, window_params = [{transform_indices = @transform_0, window_bounds = array<i64: 16, 64>}, {transform_indices = @transform_1, window_bounds = array<i64: 64, 128>}, {transform_indices = @transform_2, window_bounds = array<i64: 1, 128>}, {transform_indices = @transform_3, window_bounds = array<i64: 16, 128>}]} {
    %c0_i32 = arith.constant 0 : i32
    %0 = arith.cmpi eq, %arg2, %c0_i32 : i32
    %1 = arith.extui %0 : i1 to i32
    %c0_i32_0 = arith.constant 0 : i32
    %2 = arith.cmpi ne, %1, %c0_i32_0 : i32
    scf.if %2 {
      %cst_10 = arith.constant 0.000000e+00 : f32
      %12 = vector.broadcast %cst_10 : f32 to vector<16x128xf32>
      %c0_11 = arith.constant 0 : index
      %c0_12 = arith.constant 0 : index
      %13 = vector.load %arg7[%c0_11, %c0_12] : memref<16x128xf32, #tpu.memory_space<vmem>>, vector<16x128xf32>
      tpu.vector_store %arg7[%c0_11, %c0_12], %12 {strides = array<i32>} : memref<16x128xf32, #tpu.memory_space<vmem>>, vector<16x128xf32>,
    } else {
    }
    %c0 = arith.constant 0 : index
    %c0_1 = arith.constant 0 : index
    %3 = vector.load %arg7[%c0, %c0_1] : memref<16x128xf32, #tpu.memory_space<vmem>>, vector<16x128xf32>
    %c0_2 = arith.constant 0 : index
    %c0_3 = arith.constant 0 : index
    %4 = vector.load %arg3[%c0_2, %c0_3] : memref<16x64xbf16, #tpu.memory_space<vmem>>, vector<16x64xbf16>
    %c0_4 = arith.constant 0 : index
    %c0_5 = arith.constant 0 : index
    %5 = vector.load %arg4[%c0_4, %c0_5] : memref<64x128xbf16, #tpu.memory_space<vmem>>, vector<64x128xbf16>
    %cst = arith.constant dense<0.000000e+00> : vector<16x128xf32>
    %6 = tpu.matmul %4, %5, %cst {dimension_numbers = #tpu.dot_dimension_numbers<[1], [0], [0], [1], [0, 0, 1, 1], [], []>} : vector<16x64xbf16>, vector<64x128xbf16>, vector<16x128xf32> -> vector<16x128xf32>
    %7 = arith.addf %3, %6 : vector<16x128xf32>
    %c0_6 = arith.constant 0 : index
    %c0_7 = arith.constant 0 : index
    %8 = vector.load %arg7[%c0_6, %c0_7] : memref<16x128xf32, #tpu.memory_space<vmem>>, vector<16x128xf32>
    tpu.vector_store %arg7[%c0_6, %c0_7], %7 {strides = array<i32>} : memref<16x128xf32, #tpu.memory_space<vmem>>, vector<16x128xf32>,
    %c0_i32_8 = arith.constant 0 : i32
    %9 = arith.cmpi eq, %arg2, %c0_i32_8 : i32
    %10 = arith.extui %9 : i1 to i32
    %c0_i32_9 = arith.constant 0 : i32
    %11 = arith.cmpi ne, %10, %c0_i32_9 : i32
    scf.if %11 {
      %c0_10 = arith.constant 0 : index
      %c0_11 = arith.constant 0 : index
      %12 = vector.load %arg7[%c0_10, %c0_11] : memref<16x128xf32, #tpu.memory_space<vmem>>, vector<16x128xf32>
      %c0_12 = arith.constant 0 : index
      %c0_13 = arith.constant 0 : index
      %13 = vector.load %arg5[%c0_12, %c0_13] : memref<1x128xf32, #tpu.memory_space<vmem>>, vector<1x128xf32>
      %14 = vector.broadcast %13 : vector<1x128xf32> to vector<16x128xf32>
      %15 = arith.addf %12, %14 : vector<16x128xf32>
      %16 = arith.truncf %15 : vector<16x128xf32> to vector<16x128xbf16>
      %c0_14 = arith.constant 0 : index
      %c0_15 = arith.constant 0 : index
      %17 = vector.load %arg6[%c0_14, %c0_15] : memref<16x128xbf16, #tpu.memory_space<vmem>>, vector<16x128xbf16>
      tpu.vector_store %arg6[%c0_14, %c0_15], %16 {strides = array<i32>} : memref<16x128xbf16, #tpu.memory_space<vmem>>, vector<16x128xbf16>,
    } else {
    }
    return
  }
  func.func @transform_0(%arg0: i32, %arg1: i32, %arg2: i32) -> (i32, i32) {
    %c0_i32 = arith.constant 0 : i32
    return %arg0, %arg2 : i32, i32
  }
  func.func @transform_1(%arg0: i32, %arg1: i32, %arg2: i32) -> (i32, i32) {
    %c0_i32 = arith.constant 0 : i32
    return %arg2, %arg1 : i32, i32
  }
  func.func @transform_2(%arg0: i32, %arg1: i32, %arg2: i32) -> (i32, i32) {
    %c0_i32 = arith.constant 0 : i32
    %c0_i32_0 = arith.constant 0 : i32
    return %c0_i32, %arg1 : i32, i32
  }
  func.func @transform_3(%arg0: i32, %arg1: i32, %arg2: i32) -> (i32, i32) {
    %c0_i32 = arith.constant 0 : i32
    return %arg0, %arg1 : i32, i32
  }
}

module attributes {stable_mosaic.version = 11 : i64} {
  func.func @_matmul_kernel(%arg0: i32, %arg1: i32, %arg2: i32, %arg3: memref<16x64xbf16, #tpu.memory_space<vmem>>, %arg4: memref<64x64xbf16, #tpu.memory_space<vmem>>, %arg5: memref<1x64xf32, #tpu.memory_space<vmem>>, %arg6: memref<16x64xbf16, #tpu.memory_space<vmem>>, %arg7: memref<16x64xf32, #tpu.memory_space<vmem>>) attributes {dimension_semantics = [#tpu.dimension_semantics<parallel>, #tpu.dimension_semantics<parallel>, #tpu.dimension_semantics<arbitrary>], iteration_bounds = array<i64: 1, 1, 1>, scalar_prefetch = 0 : i64, scratch_operands = 1 : i64, tpu.core_type = #tpu.core_type<tc>, window_params = [{transform_indices = @transform_0, window_bounds = array<i64: 16, 64>}, {transform_indices = @transform_1, window_bounds = array<i64: 64, 64>}, {transform_indices = @transform_2, window_bounds = array<i64: 1, 64>}, {transform_indices = @transform_3, window_bounds = array<i64: 16, 64>}]} {
    %c0_i32 = arith.constant 0 : i32
    %0 = arith.cmpi eq, %arg2, %c0_i32 : i32
    %1 = arith.extui %0 : i1 to i32
    %c0_i32_0 = arith.constant 0 : i32
    %2 = arith.cmpi ne, %1, %c0_i32_0 : i32
    scf.if %2 {
      %cst_10 = arith.constant 0.000000e+00 : f32
      %12 = vector.broadcast %cst_10 : f32 to vector<16x64xf32>
      %c0_11 = arith.constant 0 : index
      %c0_12 = arith.constant 0 : index
      %13 = vector.load %arg7[%c0_11, %c0_12] : memref<16x64xf32, #tpu.memory_space<vmem>>, vector<16x64xf32>
      tpu.vector_store %arg7[%c0_11, %c0_12], %12 {strides = array<i32>} : memref<16x64xf32, #tpu.memory_space<vmem>>, vector<16x64xf32>,
    } else {
    }
    %c0 = arith.constant 0 : index
    %c0_1 = arith.constant 0 : index
    %3 = vector.load %arg7[%c0, %c0_1] : memref<16x64xf32, #tpu.memory_space<vmem>>, vector<16x64xf32>
    %c0_2 = arith.constant 0 : index
    %c0_3 = arith.constant 0 : index
    %4 = vector.load %arg3[%c0_2, %c0_3] : memref<16x64xbf16, #tpu.memory_space<vmem>>, vector<16x64xbf16>
    %c0_4 = arith.constant 0 : index
    %c0_5 = arith.constant 0 : index
    %5 = vector.load %arg4[%c0_4, %c0_5] : memref<64x64xbf16, #tpu.memory_space<vmem>>, vector<64x64xbf16>
    %cst = arith.constant dense<0.000000e+00> : vector<16x64xf32>
    %6 = tpu.matmul %4, %5, %cst {dimension_numbers = #tpu.dot_dimension_numbers<[1], [0], [0], [1], [0, 0, 1, 1], [], []>} : vector<16x64xbf16>, vector<64x64xbf16>, vector<16x64xf32> -> vector<16x64xf32>
    %7 = arith.addf %3, %6 : vector<16x64xf32>
    %c0_6 = arith.constant 0 : index
    %c0_7 = arith.constant 0 : index
    %8 = vector.load %arg7[%c0_6, %c0_7] : memref<16x64xf32, #tpu.memory_space<vmem>>, vector<16x64xf32>
    tpu.vector_store %arg7[%c0_6, %c0_7], %7 {strides = array<i32>} : memref<16x64xf32, #tpu.memory_space<vmem>>, vector<16x64xf32>,
    %c0_i32_8 = arith.constant 0 : i32
    %9 = arith.cmpi eq, %arg2, %c0_i32_8 : i32
    %10 = arith.extui %9 : i1 to i32
    %c0_i32_9 = arith.constant 0 : i32
    %11 = arith.cmpi ne, %10, %c0_i32_9 : i32
    scf.if %11 {
      %c0_10 = arith.constant 0 : index
      %c0_11 = arith.constant 0 : index
      %12 = vector.load %arg7[%c0_10, %c0_11] : memref<16x64xf32, #tpu.memory_space<vmem>>, vector<16x64xf32>
      %c0_12 = arith.constant 0 : index
      %c0_13 = arith.constant 0 : index
      %13 = vector.load %arg5[%c0_12, %c0_13] : memref<1x64xf32, #tpu.memory_space<vmem>>, vector<1x64xf32>
      %14 = vector.broadcast %13 : vector<1x64xf32> to vector<16x64xf32>
      %15 = arith.addf %12, %14 : vector<16x64xf32>
      %16 = arith.truncf %15 : vector<16x64xf32> to vector<16x64xbf16>
      %c0_14 = arith.constant 0 : index
      %c0_15 = arith.constant 0 : index
      %17 = vector.load %arg6[%c0_14, %c0_15] : memref<16x64xbf16, #tpu.memory_space<vmem>>, vector<16x64xbf16>
      tpu.vector_store %arg6[%c0_14, %c0_15], %16 {strides = array<i32>} : memref<16x64xbf16, #tpu.memory_space<vmem>>, vector<16x64xbf16>,
    } else {
    }
    return
  }
  func.func @transform_0(%arg0: i32, %arg1: i32, %arg2: i32) -> (i32, i32) {
    %c0_i32 = arith.constant 0 : i32
    return %arg0, %arg2 : i32, i32
  }
  func.func @transform_1(%arg0: i32, %arg1: i32, %arg2: i32) -> (i32, i32) {
    %c0_i32 = arith.constant 0 : i32
    return %arg2, %arg1 : i32, i32
  }
  func.func @transform_2(%arg0: i32, %arg1: i32, %arg2: i32) -> (i32, i32) {
    %c0_i32 = arith.constant 0 : i32
    %c0_i32_0 = arith.constant 0 : i32
    return %c0_i32, %arg1 : i32, i32
  }
  func.func @transform_3(%arg0: i32, %arg1: i32, %arg2: i32) -> (i32, i32) {
    %c0_i32 = arith.constant 0 : i32
    return %arg0, %arg1 : i32, i32
  }
}

module attributes {stable_mosaic.version = 11 : i64} {
  func.func @_mha_proj_ln_kernel(%arg0: i32, %arg1: memref<1x8x64xbf16, #tpu.memory_space<vmem>>, %arg2: memref<1x8x128xbf16, #tpu.memory_space<vmem>>, %arg3: memref<4x8x8xf32, #tpu.memory_space<vmem>>, %arg4: memref<1x1x8xf32, #tpu.memory_space<vmem>>, %arg5: memref<64x64xbf16, #tpu.memory_space<vmem>>, %arg6: memref<1x64xf32, #tpu.memory_space<vmem>>, %arg7: memref<1x8x64xbf16, #tpu.memory_space<vmem>>, %arg8: memref<1x64xf32, #tpu.memory_space<vmem>>, %arg9: memref<1x64xf32, #tpu.memory_space<vmem>>, %arg10: memref<1x8x64xbf16, #tpu.memory_space<vmem>>) attributes {dimension_semantics = [#tpu.dimension_semantics<parallel>], iteration_bounds = array<i64: 2>, scalar_prefetch = 0 : i64, scratch_operands = 0 : i64, tpu.core_type = #tpu.core_type<tc>, window_params = [{transform_indices = @transform_0, window_bounds = array<i64: 1, 8, 64>}, {transform_indices = @transform_1, window_bounds = array<i64: 1, 8, 128>}, {pipeline_mode = #tpu.pipeline_mode<synchronous>, transform_indices = @transform_2, window_bounds = array<i64: 4, 8, 8>}, {transform_indices = @transform_3, window_bounds = array<i64: 1, 1, 8>}, {pipeline_mode = #tpu.pipeline_mode<synchronous>, transform_indices = @transform_4, window_bounds = array<i64: 64, 64>}, {pipeline_mode = #tpu.pipeline_mode<synchronous>, transform_indices = @transform_5, window_bounds = array<i64: 1, 64>}, {transform_indices = @transform_6, window_bounds = array<i64: 1, 8, 64>}, {pipeline_mode = #tpu.pipeline_mode<synchronous>, transform_indices = @transform_7, window_bounds = array<i64: 1, 64>}, {pipeline_mode = #tpu.pipeline_mode<synchronous>, transform_indices = @transform_8, window_bounds = array<i64: 1, 64>}, {transform_indices = @transform_9, window_bounds = array<i64: 1, 8, 64>}]} {
    %c0 = arith.constant 0 : index
    %c0_0 = arith.constant 0 : index
    %c0_1 = arith.constant 0 : index
    %0 = vector.load %arg1[%c0, %c0_0, %c0_1] : memref<1x8x64xbf16, #tpu.memory_space<vmem>>, vector<1x8x64xbf16>
    %1 = vector.shape_cast %0 : vector<1x8x64xbf16> to vector<8x64xbf16>
    %c0_2 = arith.constant 0 : index
    %c0_3 = arith.constant 0 : index
    %c0_4 = arith.constant 0 : index
    %2 = vector.load %arg2[%c0_2, %c0_3, %c0_4] : memref<1x8x128xbf16, #tpu.memory_space<vmem>>, vector<1x8x128xbf16>
    %3 = vector.shape_cast %2 : vector<1x8x128xbf16> to vector<8x128xbf16>
    %c0_5 = arith.constant 0 : index
    %c0_6 = arith.constant 0 : index
    %c0_7 = arith.constant 0 : index
    %4 = vector.load %arg4[%c0_5, %c0_6, %c0_7] : memref<1x1x8xf32, #tpu.memory_space<vmem>>, vector<1x1x8xf32>
    %5 = vector.shape_cast %4 : vector<1x1x8xf32> to vector<1x8xf32>
    %c0_8 = arith.constant 0 : index
    %c0_9 = arith.constant 0 : index
    %c0_10 = arith.constant 0 : index
    %6 = vector.load %arg7[%c0_8, %c0_9, %c0_10] : memref<1x8x64xbf16, #tpu.memory_space<vmem>>, vector<1x8x64xbf16>
    %7 = vector.shape_cast %6 : vector<1x8x64xbf16> to vector<8x64xbf16>
    %8 = arith.extf %7 : vector<8x64xbf16> to vector<8x64xf32>
    %c0_11 = arith.constant 0 : index
    %c0_12 = arith.constant 0 : index
    %9 = vector.load %arg6[%c0_11, %c0_12] : memref<1x64xf32, #tpu.memory_space<vmem>>, vector<1x64xf32>
    %10 = vector.broadcast %9 : vector<1x64xf32> to vector<8x64xf32>
    %11 = arith.addf %8, %10 : vector<8x64xf32>
    %12 = vector.extract_strided_slice %1 {offsets = [0, 0], sizes = [8, 16], strides = [1, 1]} : vector<8x64xbf16> to vector<8x16xbf16>
    %13 = vector.extract_strided_slice %3 {offsets = [0, 0], sizes = [8, 16], strides = [1, 1]} : vector<8x128xbf16> to vector<8x16xbf16>
    %14 = vector.extract_strided_slice %3 {offsets = [0, 64], sizes = [8, 16], strides = [1, 1]} : vector<8x128xbf16> to vector<8x16xbf16>
    %cst = arith.constant dense<0.000000e+00> : vector<8x8xf32>
    %15 = tpu.matmul %12, %13, %cst {dimension_numbers = #tpu.dot_dimension_numbers<[1], [1], [0], [0], [0, 0, 1, 0], [], []>} : vector<8x16xbf16>, vector<8x16xbf16>, vector<8x8xf32> -> vector<8x8xf32>
    %cst_13 = arith.constant 2.500000e-01 : f32
    %16 = vector.broadcast %cst_13 : f32 to vector<8x8xf32>
    %17 = arith.mulf %15, %16 : vector<8x8xf32>
    %c0_14 = arith.constant 0 : index
    %c0_15 = arith.constant 0 : index
    %c0_16 = arith.constant 0 : index
    %18 = vector.load %arg3[%c0_14, %c0_15, %c0_16] : memref<4x8x8xf32, #tpu.memory_space<vmem>>, vector<1x8x8xf32>
    %19 = vector.shape_cast %18 : vector<1x8x8xf32> to vector<8x8xf32>
    %20 = arith.addf %17, %19 : vector<8x8xf32>
    %21 = vector.broadcast %5 : vector<1x8xf32> to vector<8x8xf32>
    %22 = arith.addf %20, %21 : vector<8x8xf32>
    %cst_17 = arith.constant dense<0xFF800000> : vector<8xf32>
    %23 = vector.multi_reduction <maximumf>, %22, %cst_17 [1] : vector<8x8xf32> to vector<8xf32>
    %24 = vector.shape_cast %23 : vector<8xf32> to vector<8x1xf32>
    %25 = vector.broadcast %24 : vector<8x1xf32> to vector<8x8xf32>
    %26 = arith.subf %22, %25 : vector<8x8xf32>
    %27 = math.exp %26 : vector<8x8xf32>
    %cst_18 = arith.constant dense<0.000000e+00> : vector<8xf32>
    %28 = vector.multi_reduction <add>, %27, %cst_18 [1] : vector<8x8xf32> to vector<8xf32>
    %29 = vector.shape_cast %28 : vector<8xf32> to vector<8x1xf32>
    %30 = tpu.reciprocal %29 {approx = true} : vector<8x1xf32> -> vector<8x1xf32>
    %31 = vector.broadcast %30 : vector<8x1xf32> to vector<8x8xf32>
    %32 = arith.mulf %27, %31 : vector<8x8xf32>
    %33 = arith.truncf %32 : vector<8x8xf32> to vector<8x8xbf16>
    %cst_19 = arith.constant dense<0.000000e+00> : vector<8x16xf32>
    %34 = tpu.matmul %33, %14, %cst_19 {dimension_numbers = #tpu.dot_dimension_numbers<[1], [0], [0], [1], [0, 0, 1, 1], [], []>} : vector<8x8xbf16>, vector<8x16xbf16>, vector<8x16xf32> -> vector<8x16xf32>
    %35 = arith.truncf %34 : vector<8x16xf32> to vector<8x16xbf16>
    %c0_20 = arith.constant 0 : index
    %c0_21 = arith.constant 0 : index
    %36 = vector.load %arg5[%c0_20, %c0_21] : memref<64x64xbf16, #tpu.memory_space<vmem>>, vector<16x64xbf16>
    %cst_22 = arith.constant dense<0.000000e+00> : vector<8x64xf32>
    %37 = tpu.matmul %35, %36, %cst_22 {dimension_numbers = #tpu.dot_dimension_numbers<[1], [0], [0], [1], [0, 0, 1, 1], [], []>} : vector<8x16xbf16>, vector<16x64xbf16>, vector<8x64xf32> -> vector<8x64xf32>
    %38 = arith.addf %11, %37 : vector<8x64xf32>
    %39 = vector.extract_strided_slice %1 {offsets = [0, 16], sizes = [8, 16], strides = [1, 1]} : vector<8x64xbf16> to vector<8x16xbf16>
    %40 = vector.extract_strided_slice %3 {offsets = [0, 16], sizes = [8, 16], strides = [1, 1]} : vector<8x128xbf16> to vector<8x16xbf16>
    %41 = vector.extract_strided_slice %3 {offsets = [0, 80], sizes = [8, 16], strides = [1, 1]} : vector<8x128xbf16> to vector<8x16xbf16>
    %cst_23 = arith.constant dense<0.000000e+00> : vector<8x8xf32>
    %42 = tpu.matmul %39, %40, %cst_23 {dimension_numbers = #tpu.dot_dimension_numbers<[1], [1], [0], [0], [0, 0, 1, 0], [], []>} : vector<8x16xbf16>, vector<8x16xbf16>, vector<8x8xf32> -> vector<8x8xf32>
    %cst_24 = arith.constant 2.500000e-01 : f32
    %43 = vector.broadcast %cst_24 : f32 to vector<8x8xf32>
    %44 = arith.mulf %42, %43 : vector<8x8xf32>
    %c1 = arith.constant 1 : index
    %c0_25 = arith.constant 0 : index
    %c0_26 = arith.constant 0 : index
    %45 = vector.load %arg3[%c1, %c0_25, %c0_26] : memref<4x8x8xf32, #tpu.memory_space<vmem>>, vector<1x8x8xf32>
    %46 = vector.shape_cast %45 : vector<1x8x8xf32> to vector<8x8xf32>
    %47 = arith.addf %44, %46 : vector<8x8xf32>
    %48 = vector.broadcast %5 : vector<1x8xf32> to vector<8x8xf32>
    %49 = arith.addf %47, %48 : vector<8x8xf32>
    %cst_27 = arith.constant dense<0xFF800000> : vector<8xf32>
    %50 = vector.multi_reduction <maximumf>, %49, %cst_27 [1] : vector<8x8xf32> to vector<8xf32>
    %51 = vector.shape_cast %50 : vector<8xf32> to vector<8x1xf32>
    %52 = vector.broadcast %51 : vector<8x1xf32> to vector<8x8xf32>
    %53 = arith.subf %49, %52 : vector<8x8xf32>
    %54 = math.exp %53 : vector<8x8xf32>
    %cst_28 = arith.constant dense<0.000000e+00> : vector<8xf32>
    %55 = vector.multi_reduction <add>, %54, %cst_28 [1] : vector<8x8xf32> to vector<8xf32>
    %56 = vector.shape_cast %55 : vector<8xf32> to vector<8x1xf32>
    %57 = tpu.reciprocal %56 {approx = true} : vector<8x1xf32> -> vector<8x1xf32>
    %58 = vector.broadcast %57 : vector<8x1xf32> to vector<8x8xf32>
    %59 = arith.mulf %54, %58 : vector<8x8xf32>
    %60 = arith.truncf %59 : vector<8x8xf32> to vector<8x8xbf16>
    %cst_29 = arith.constant dense<0.000000e+00> : vector<8x16xf32>
    %61 = tpu.matmul %60, %41, %cst_29 {dimension_numbers = #tpu.dot_dimension_numbers<[1], [0], [0], [1], [0, 0, 1, 1], [], []>} : vector<8x8xbf16>, vector<8x16xbf16>, vector<8x16xf32> -> vector<8x16xf32>
    %62 = arith.truncf %61 : vector<8x16xf32> to vector<8x16xbf16>
    %c16 = arith.constant 16 : index
    %c0_30 = arith.constant 0 : index
    %63 = vector.load %arg5[%c16, %c0_30] : memref<64x64xbf16, #tpu.memory_space<vmem>>, vector<16x64xbf16>
    %cst_31 = arith.constant dense<0.000000e+00> : vector<8x64xf32>
    %64 = tpu.matmul %62, %63, %cst_31 {dimension_numbers = #tpu.dot_dimension_numbers<[1], [0], [0], [1], [0, 0, 1, 1], [], []>} : vector<8x16xbf16>, vector<16x64xbf16>, vector<8x64xf32> -> vector<8x64xf32>
    %65 = arith.addf %38, %64 : vector<8x64xf32>
    %66 = vector.extract_strided_slice %1 {offsets = [0, 32], sizes = [8, 16], strides = [1, 1]} : vector<8x64xbf16> to vector<8x16xbf16>
    %67 = vector.extract_strided_slice %3 {offsets = [0, 32], sizes = [8, 16], strides = [1, 1]} : vector<8x128xbf16> to vector<8x16xbf16>
    %68 = vector.extract_strided_slice %3 {offsets = [0, 96], sizes = [8, 16], strides = [1, 1]} : vector<8x128xbf16> to vector<8x16xbf16>
    %cst_32 = arith.constant dense<0.000000e+00> : vector<8x8xf32>
    %69 = tpu.matmul %66, %67, %cst_32 {dimension_numbers = #tpu.dot_dimension_numbers<[1], [1], [0], [0], [0, 0, 1, 0], [], []>} : vector<8x16xbf16>, vector<8x16xbf16>, vector<8x8xf32> -> vector<8x8xf32>
    %cst_33 = arith.constant 2.500000e-01 : f32
    %70 = vector.broadcast %cst_33 : f32 to vector<8x8xf32>
    %71 = arith.mulf %69, %70 : vector<8x8xf32>
    %c2 = arith.constant 2 : index
    %c0_34 = arith.constant 0 : index
    %c0_35 = arith.constant 0 : index
    %72 = vector.load %arg3[%c2, %c0_34, %c0_35] : memref<4x8x8xf32, #tpu.memory_space<vmem>>, vector<1x8x8xf32>
    %73 = vector.shape_cast %72 : vector<1x8x8xf32> to vector<8x8xf32>
    %74 = arith.addf %71, %73 : vector<8x8xf32>
    %75 = vector.broadcast %5 : vector<1x8xf32> to vector<8x8xf32>
    %76 = arith.addf %74, %75 : vector<8x8xf32>
    %cst_36 = arith.constant dense<0xFF800000> : vector<8xf32>
    %77 = vector.multi_reduction <maximumf>, %76, %cst_36 [1] : vector<8x8xf32> to vector<8xf32>
    %78 = vector.shape_cast %77 : vector<8xf32> to vector<8x1xf32>
    %79 = vector.broadcast %78 : vector<8x1xf32> to vector<8x8xf32>
    %80 = arith.subf %76, %79 : vector<8x8xf32>
    %81 = math.exp %80 : vector<8x8xf32>
    %cst_37 = arith.constant dense<0.000000e+00> : vector<8xf32>
    %82 = vector.multi_reduction <add>, %81, %cst_37 [1] : vector<8x8xf32> to vector<8xf32>
    %83 = vector.shape_cast %82 : vector<8xf32> to vector<8x1xf32>
    %84 = tpu.reciprocal %83 {approx = true} : vector<8x1xf32> -> vector<8x1xf32>
    %85 = vector.broadcast %84 : vector<8x1xf32> to vector<8x8xf32>
    %86 = arith.mulf %81, %85 : vector<8x8xf32>
    %87 = arith.truncf %86 : vector<8x8xf32> to vector<8x8xbf16>
    %cst_38 = arith.constant dense<0.000000e+00> : vector<8x16xf32>
    %88 = tpu.matmul %87, %68, %cst_38 {dimension_numbers = #tpu.dot_dimension_numbers<[1], [0], [0], [1], [0, 0, 1, 1], [], []>} : vector<8x8xbf16>, vector<8x16xbf16>, vector<8x16xf32> -> vector<8x16xf32>
    %89 = arith.truncf %88 : vector<8x16xf32> to vector<8x16xbf16>
    %c32 = arith.constant 32 : index
    %c0_39 = arith.constant 0 : index
    %90 = vector.load %arg5[%c32, %c0_39] : memref<64x64xbf16, #tpu.memory_space<vmem>>, vector<16x64xbf16>
    %cst_40 = arith.constant dense<0.000000e+00> : vector<8x64xf32>
    %91 = tpu.matmul %89, %90, %cst_40 {dimension_numbers = #tpu.dot_dimension_numbers<[1], [0], [0], [1], [0, 0, 1, 1], [], []>} : vector<8x16xbf16>, vector<16x64xbf16>, vector<8x64xf32> -> vector<8x64xf32>
    %92 = arith.addf %65, %91 : vector<8x64xf32>
    %93 = vector.extract_strided_slice %1 {offsets = [0, 48], sizes = [8, 16], strides = [1, 1]} : vector<8x64xbf16> to vector<8x16xbf16>
    %94 = vector.extract_strided_slice %3 {offsets = [0, 48], sizes = [8, 16], strides = [1, 1]} : vector<8x128xbf16> to vector<8x16xbf16>
    %95 = vector.extract_strided_slice %3 {offsets = [0, 112], sizes = [8, 16], strides = [1, 1]} : vector<8x128xbf16> to vector<8x16xbf16>
    %cst_41 = arith.constant dense<0.000000e+00> : vector<8x8xf32>
    %96 = tpu.matmul %93, %94, %cst_41 {dimension_numbers = #tpu.dot_dimension_numbers<[1], [1], [0], [0], [0, 0, 1, 0], [], []>} : vector<8x16xbf16>, vector<8x16xbf16>, vector<8x8xf32> -> vector<8x8xf32>
    %cst_42 = arith.constant 2.500000e-01 : f32
    %97 = vector.broadcast %cst_42 : f32 to vector<8x8xf32>
    %98 = arith.mulf %96, %97 : vector<8x8xf32>
    %c3 = arith.constant 3 : index
    %c0_43 = arith.constant 0 : index
    %c0_44 = arith.constant 0 : index
    %99 = vector.load %arg3[%c3, %c0_43, %c0_44] : memref<4x8x8xf32, #tpu.memory_space<vmem>>, vector<1x8x8xf32>
    %100 = vector.shape_cast %99 : vector<1x8x8xf32> to vector<8x8xf32>
    %101 = arith.addf %98, %100 : vector<8x8xf32>
    %102 = vector.broadcast %5 : vector<1x8xf32> to vector<8x8xf32>
    %103 = arith.addf %101, %102 : vector<8x8xf32>
    %cst_45 = arith.constant dense<0xFF800000> : vector<8xf32>
    %104 = vector.multi_reduction <maximumf>, %103, %cst_45 [1] : vector<8x8xf32> to vector<8xf32>
    %105 = vector.shape_cast %104 : vector<8xf32> to vector<8x1xf32>
    %106 = vector.broadcast %105 : vector<8x1xf32> to vector<8x8xf32>
    %107 = arith.subf %103, %106 : vector<8x8xf32>
    %108 = math.exp %107 : vector<8x8xf32>
    %cst_46 = arith.constant dense<0.000000e+00> : vector<8xf32>
    %109 = vector.multi_reduction <add>, %108, %cst_46 [1] : vector<8x8xf32> to vector<8xf32>
    %110 = vector.shape_cast %109 : vector<8xf32> to vector<8x1xf32>
    %111 = tpu.reciprocal %110 {approx = true} : vector<8x1xf32> -> vector<8x1xf32>
    %112 = vector.broadcast %111 : vector<8x1xf32> to vector<8x8xf32>
    %113 = arith.mulf %108, %112 : vector<8x8xf32>
    %114 = arith.truncf %113 : vector<8x8xf32> to vector<8x8xbf16>
    %cst_47 = arith.constant dense<0.000000e+00> : vector<8x16xf32>
    %115 = tpu.matmul %114, %95, %cst_47 {dimension_numbers = #tpu.dot_dimension_numbers<[1], [0], [0], [1], [0, 0, 1, 1], [], []>} : vector<8x8xbf16>, vector<8x16xbf16>, vector<8x16xf32> -> vector<8x16xf32>
    %116 = arith.truncf %115 : vector<8x16xf32> to vector<8x16xbf16>
    %c48 = arith.constant 48 : index
    %c0_48 = arith.constant 0 : index
    %117 = vector.load %arg5[%c48, %c0_48] : memref<64x64xbf16, #tpu.memory_space<vmem>>, vector<16x64xbf16>
    %cst_49 = arith.constant dense<0.000000e+00> : vector<8x64xf32>
    %118 = tpu.matmul %116, %117, %cst_49 {dimension_numbers = #tpu.dot_dimension_numbers<[1], [0], [0], [1], [0, 0, 1, 1], [], []>} : vector<8x16xbf16>, vector<16x64xbf16>, vector<8x64xf32> -> vector<8x64xf32>
    %119 = arith.addf %92, %118 : vector<8x64xf32>
    %cst_50 = arith.constant dense<0.000000e+00> : vector<8xf32>
    %120 = vector.multi_reduction <add>, %119, %cst_50 [1] : vector<8x64xf32> to vector<8xf32>
    %121 = vector.shape_cast %120 : vector<8xf32> to vector<8x1xf32>
    %cst_51 = arith.constant 6.400000e+01 : f32
    %122 = vector.broadcast %cst_51 : f32 to vector<8x1xf32>
    %123 = arith.divf %121, %122 : vector<8x1xf32>
    %124 = vector.broadcast %123 : vector<8x1xf32> to vector<8x64xf32>
    %125 = arith.subf %119, %124 : vector<8x64xf32>
    %126 = arith.mulf %125, %125 : vector<8x64xf32>
    %cst_52 = arith.constant dense<0.000000e+00> : vector<8xf32>
    %127 = vector.multi_reduction <add>, %126, %cst_52 [1] : vector<8x64xf32> to vector<8xf32>
    %128 = vector.shape_cast %127 : vector<8xf32> to vector<8x1xf32>
    %cst_53 = arith.constant 6.400000e+01 : f32
    %129 = vector.broadcast %cst_53 : f32 to vector<8x1xf32>
    %130 = arith.divf %128, %129 : vector<8x1xf32>
    %131 = vector.broadcast %123 : vector<8x1xf32> to vector<8x64xf32>
    %132 = arith.subf %119, %131 : vector<8x64xf32>
    %cst_54 = arith.constant 9.99999997E-7 : f32
    %133 = vector.broadcast %cst_54 : f32 to vector<8x1xf32>
    %134 = arith.addf %130, %133 : vector<8x1xf32>
    %135 = math.rsqrt %134 : vector<8x1xf32>
    %136 = vector.broadcast %135 : vector<8x1xf32> to vector<8x64xf32>
    %137 = arith.mulf %132, %136 : vector<8x64xf32>
    %c0_55 = arith.constant 0 : index
    %c0_56 = arith.constant 0 : index
    %138 = vector.load %arg8[%c0_55, %c0_56] : memref<1x64xf32, #tpu.memory_space<vmem>>, vector<1x64xf32>
    %139 = vector.broadcast %138 : vector<1x64xf32> to vector<8x64xf32>
    %140 = arith.mulf %137, %139 : vector<8x64xf32>
    %c0_57 = arith.constant 0 : index
    %c0_58 = arith.constant 0 : index
    %141 = vector.load %arg9[%c0_57, %c0_58] : memref<1x64xf32, #tpu.memory_space<vmem>>, vector<1x64xf32>
    %142 = vector.broadcast %141 : vector<1x64xf32> to vector<8x64xf32>
    %143 = arith.addf %140, %142 : vector<8x64xf32>
    %144 = arith.truncf %143 : vector<8x64xf32> to vector<8x64xbf16>
    %c0_59 = arith.constant 0 : index
    %c0_60 = arith.constant 0 : index
    %c0_61 = arith.constant 0 : index
    %145 = vector.load %arg10[%c0_59, %c0_60, %c0_61] : memref<1x8x64xbf16, #tpu.memory_space<vmem>>, vector<1x8x64xbf16>
    %146 = vector.shape_cast %145 : vector<1x8x64xbf16> to vector<8x64xbf16>
    %147 = vector.shape_cast %144 : vector<8x64xbf16> to vector<1x8x64xbf16>
    tpu.vector_store %arg10[%c0_59, %c0_60, %c0_61], %147 {strides = array<i32>} : memref<1x8x64xbf16, #tpu.memory_space<vmem>>, vector<1x8x64xbf16>,
    return
  }
  func.func @transform_0(%arg0: i32) -> (i32, i32, i32) {
    %c0_i32 = arith.constant 0 : i32
    %c0_i32_0 = arith.constant 0 : i32
    %c0_i32_1 = arith.constant 0 : i32
    return %arg0, %c0_i32, %c0_i32_0 : i32, i32, i32
  }
  func.func @transform_1(%arg0: i32) -> (i32, i32, i32) {
    %c0_i32 = arith.constant 0 : i32
    %c0_i32_0 = arith.constant 0 : i32
    %c0_i32_1 = arith.constant 0 : i32
    return %arg0, %c0_i32, %c0_i32_0 : i32, i32, i32
  }
  func.func @transform_2(%arg0: i32) -> (i32, i32, i32) {
    %c0_i32 = arith.constant 0 : i32
    %c0_i32_0 = arith.constant 0 : i32
    %c0_i32_1 = arith.constant 0 : i32
    %c0_i32_2 = arith.constant 0 : i32
    return %c0_i32, %c0_i32_0, %c0_i32_1 : i32, i32, i32
  }
  func.func @transform_3(%arg0: i32) -> (i32, i32, i32) {
    %c0_i32 = arith.constant 0 : i32
    %c0_i32_0 = arith.constant 0 : i32
    %c0_i32_1 = arith.constant 0 : i32
    return %arg0, %c0_i32, %c0_i32_0 : i32, i32, i32
  }
  func.func @transform_4(%arg0: i32) -> (i32, i32) {
    %c0_i32 = arith.constant 0 : i32
    %c0_i32_0 = arith.constant 0 : i32
    %c0_i32_1 = arith.constant 0 : i32
    return %c0_i32, %c0_i32_0 : i32, i32
  }
  func.func @transform_5(%arg0: i32) -> (i32, i32) {
    %c0_i32 = arith.constant 0 : i32
    %c0_i32_0 = arith.constant 0 : i32
    %c0_i32_1 = arith.constant 0 : i32
    return %c0_i32, %c0_i32_0 : i32, i32
  }
  func.func @transform_6(%arg0: i32) -> (i32, i32, i32) {
    %c0_i32 = arith.constant 0 : i32
    %c0_i32_0 = arith.constant 0 : i32
    %c0_i32_1 = arith.constant 0 : i32
    return %arg0, %c0_i32, %c0_i32_0 : i32, i32, i32
  }
  func.func @transform_7(%arg0: i32) -> (i32, i32) {
    %c0_i32 = arith.constant 0 : i32
    %c0_i32_0 = arith.constant 0 : i32
    %c0_i32_1 = arith.constant 0 : i32
    return %c0_i32, %c0_i32_0 : i32, i32
  }
  func.func @transform_8(%arg0: i32) -> (i32, i32) {
    %c0_i32 = arith.constant 0 : i32
    %c0_i32_0 = arith.constant 0 : i32
    %c0_i32_1 = arith.constant 0 : i32
    return %c0_i32, %c0_i32_0 : i32, i32
  }
  func.func @transform_9(%arg0: i32) -> (i32, i32, i32) {
    %c0_i32 = arith.constant 0 : i32
    %c0_i32_0 = arith.constant 0 : i32
    %c0_i32_1 = arith.constant 0 : i32
    return %arg0, %c0_i32, %c0_i32_0 : i32, i32, i32
  }
}

module attributes {stable_mosaic.version = 11 : i64} {
  func.func @_ln_kernel(%arg0: i32, %arg1: memref<16x64xbf16, #tpu.memory_space<vmem>>, %arg2: memref<1x64xf32, #tpu.memory_space<vmem>>, %arg3: memref<1x64xf32, #tpu.memory_space<vmem>>, %arg4: memref<16x64xbf16, #tpu.memory_space<vmem>>) attributes {dimension_semantics = [#tpu.dimension_semantics<parallel>], iteration_bounds = array<i64: 1>, scalar_prefetch = 0 : i64, scratch_operands = 0 : i64, tpu.core_type = #tpu.core_type<tc>, window_params = [{transform_indices = @transform_0, window_bounds = array<i64: 16, 64>}, {pipeline_mode = #tpu.pipeline_mode<synchronous>, transform_indices = @transform_1, window_bounds = array<i64: 1, 64>}, {pipeline_mode = #tpu.pipeline_mode<synchronous>, transform_indices = @transform_2, window_bounds = array<i64: 1, 64>}, {transform_indices = @transform_3, window_bounds = array<i64: 16, 64>}]} {
    %c0 = arith.constant 0 : index
    %c0_0 = arith.constant 0 : index
    %0 = vector.load %arg1[%c0, %c0_0] : memref<16x64xbf16, #tpu.memory_space<vmem>>, vector<16x64xbf16>
    %1 = arith.extf %0 : vector<16x64xbf16> to vector<16x64xf32>
    %cst = arith.constant dense<0.000000e+00> : vector<16xf32>
    %2 = vector.multi_reduction <add>, %1, %cst [1] : vector<16x64xf32> to vector<16xf32>
    %3 = vector.shape_cast %2 : vector<16xf32> to vector<16x1xf32>
    %cst_1 = arith.constant 6.400000e+01 : f32
    %4 = vector.broadcast %cst_1 : f32 to vector<16x1xf32>
    %5 = arith.divf %3, %4 : vector<16x1xf32>
    %6 = vector.broadcast %5 : vector<16x1xf32> to vector<16x64xf32>
    %7 = arith.subf %1, %6 : vector<16x64xf32>
    %8 = arith.mulf %7, %7 : vector<16x64xf32>
    %cst_2 = arith.constant dense<0.000000e+00> : vector<16xf32>
    %9 = vector.multi_reduction <add>, %8, %cst_2 [1] : vector<16x64xf32> to vector<16xf32>
    %10 = vector.shape_cast %9 : vector<16xf32> to vector<16x1xf32>
    %cst_3 = arith.constant 6.400000e+01 : f32
    %11 = vector.broadcast %cst_3 : f32 to vector<16x1xf32>
    %12 = arith.divf %10, %11 : vector<16x1xf32>
    %13 = vector.broadcast %5 : vector<16x1xf32> to vector<16x64xf32>
    %14 = arith.subf %1, %13 : vector<16x64xf32>
    %cst_4 = arith.constant 9.99999997E-7 : f32
    %15 = vector.broadcast %cst_4 : f32 to vector<16x1xf32>
    %16 = arith.addf %12, %15 : vector<16x1xf32>
    %17 = math.rsqrt %16 : vector<16x1xf32>
    %18 = vector.broadcast %17 : vector<16x1xf32> to vector<16x64xf32>
    %19 = arith.mulf %14, %18 : vector<16x64xf32>
    %c0_5 = arith.constant 0 : index
    %c0_6 = arith.constant 0 : index
    %20 = vector.load %arg2[%c0_5, %c0_6] : memref<1x64xf32, #tpu.memory_space<vmem>>, vector<1x64xf32>
    %21 = vector.broadcast %20 : vector<1x64xf32> to vector<16x64xf32>
    %22 = arith.mulf %19, %21 : vector<16x64xf32>
    %c0_7 = arith.constant 0 : index
    %c0_8 = arith.constant 0 : index
    %23 = vector.load %arg3[%c0_7, %c0_8] : memref<1x64xf32, #tpu.memory_space<vmem>>, vector<1x64xf32>
    %24 = vector.broadcast %23 : vector<1x64xf32> to vector<16x64xf32>
    %25 = arith.addf %22, %24 : vector<16x64xf32>
    %26 = arith.truncf %25 : vector<16x64xf32> to vector<16x64xbf16>
    %c0_9 = arith.constant 0 : index
    %c0_10 = arith.constant 0 : index
    %27 = vector.load %arg4[%c0_9, %c0_10] : memref<16x64xbf16, #tpu.memory_space<vmem>>, vector<16x64xbf16>
    tpu.vector_store %arg4[%c0_9, %c0_10], %26 {strides = array<i32>} : memref<16x64xbf16, #tpu.memory_space<vmem>>, vector<16x64xbf16>,
    return
  }
  func.func @transform_0(%arg0: i32) -> (i32, i32) {
    %c0_i32 = arith.constant 0 : i32
    %c0_i32_0 = arith.constant 0 : i32
    return %arg0, %c0_i32 : i32, i32
  }
  func.func @transform_1(%arg0: i32) -> (i32, i32) {
    %c0_i32 = arith.constant 0 : i32
    %c0_i32_0 = arith.constant 0 : i32
    %c0_i32_1 = arith.constant 0 : i32
    return %c0_i32, %c0_i32_0 : i32, i32
  }
  func.func @transform_2(%arg0: i32) -> (i32, i32) {
    %c0_i32 = arith.constant 0 : i32
    %c0_i32_0 = arith.constant 0 : i32
    %c0_i32_1 = arith.constant 0 : i32
    return %c0_i32, %c0_i32_0 : i32, i32
  }
  func.func @transform_3(%arg0: i32) -> (i32, i32) {
    %c0_i32 = arith.constant 0 : i32
    %c0_i32_0 = arith.constant 0 : i32
    return %arg0, %c0_i32 : i32, i32
  }
}

module attributes {stable_mosaic.version = 11 : i64} {
  func.func @_matmul_kernel(%arg0: i32, %arg1: i32, %arg2: i32, %arg3: memref<16x64xbf16, #tpu.memory_space<vmem>>, %arg4: memref<64x128xbf16, #tpu.memory_space<vmem>>, %arg5: memref<1x128xf32, #tpu.memory_space<vmem>>, %arg6: memref<16x128xf32, #tpu.memory_space<vmem>>, %arg7: memref<16x128xf32, #tpu.memory_space<vmem>>) attributes {dimension_semantics = [#tpu.dimension_semantics<parallel>, #tpu.dimension_semantics<parallel>, #tpu.dimension_semantics<arbitrary>], iteration_bounds = array<i64: 1, 1, 1>, scalar_prefetch = 0 : i64, scratch_operands = 1 : i64, tpu.core_type = #tpu.core_type<tc>, window_params = [{transform_indices = @transform_0, window_bounds = array<i64: 16, 64>}, {transform_indices = @transform_1, window_bounds = array<i64: 64, 128>}, {transform_indices = @transform_2, window_bounds = array<i64: 1, 128>}, {transform_indices = @transform_3, window_bounds = array<i64: 16, 128>}]} {
    %c0_i32 = arith.constant 0 : i32
    %0 = arith.cmpi eq, %arg2, %c0_i32 : i32
    %1 = arith.extui %0 : i1 to i32
    %c0_i32_0 = arith.constant 0 : i32
    %2 = arith.cmpi ne, %1, %c0_i32_0 : i32
    scf.if %2 {
      %cst_10 = arith.constant 0.000000e+00 : f32
      %12 = vector.broadcast %cst_10 : f32 to vector<16x128xf32>
      %c0_11 = arith.constant 0 : index
      %c0_12 = arith.constant 0 : index
      %13 = vector.load %arg7[%c0_11, %c0_12] : memref<16x128xf32, #tpu.memory_space<vmem>>, vector<16x128xf32>
      tpu.vector_store %arg7[%c0_11, %c0_12], %12 {strides = array<i32>} : memref<16x128xf32, #tpu.memory_space<vmem>>, vector<16x128xf32>,
    } else {
    }
    %c0 = arith.constant 0 : index
    %c0_1 = arith.constant 0 : index
    %3 = vector.load %arg7[%c0, %c0_1] : memref<16x128xf32, #tpu.memory_space<vmem>>, vector<16x128xf32>
    %c0_2 = arith.constant 0 : index
    %c0_3 = arith.constant 0 : index
    %4 = vector.load %arg3[%c0_2, %c0_3] : memref<16x64xbf16, #tpu.memory_space<vmem>>, vector<16x64xbf16>
    %c0_4 = arith.constant 0 : index
    %c0_5 = arith.constant 0 : index
    %5 = vector.load %arg4[%c0_4, %c0_5] : memref<64x128xbf16, #tpu.memory_space<vmem>>, vector<64x128xbf16>
    %cst = arith.constant dense<0.000000e+00> : vector<16x128xf32>
    %6 = tpu.matmul %4, %5, %cst {dimension_numbers = #tpu.dot_dimension_numbers<[1], [0], [0], [1], [0, 0, 1, 1], [], []>} : vector<16x64xbf16>, vector<64x128xbf16>, vector<16x128xf32> -> vector<16x128xf32>
    %7 = arith.addf %3, %6 : vector<16x128xf32>
    %c0_6 = arith.constant 0 : index
    %c0_7 = arith.constant 0 : index
    %8 = vector.load %arg7[%c0_6, %c0_7] : memref<16x128xf32, #tpu.memory_space<vmem>>, vector<16x128xf32>
    tpu.vector_store %arg7[%c0_6, %c0_7], %7 {strides = array<i32>} : memref<16x128xf32, #tpu.memory_space<vmem>>, vector<16x128xf32>,
    %c0_i32_8 = arith.constant 0 : i32
    %9 = arith.cmpi eq, %arg2, %c0_i32_8 : i32
    %10 = arith.extui %9 : i1 to i32
    %c0_i32_9 = arith.constant 0 : i32
    %11 = arith.cmpi ne, %10, %c0_i32_9 : i32
    scf.if %11 {
      %c0_10 = arith.constant 0 : index
      %c0_11 = arith.constant 0 : index
      %12 = vector.load %arg7[%c0_10, %c0_11] : memref<16x128xf32, #tpu.memory_space<vmem>>, vector<16x128xf32>
      %c0_12 = arith.constant 0 : index
      %c0_13 = arith.constant 0 : index
      %13 = vector.load %arg5[%c0_12, %c0_13] : memref<1x128xf32, #tpu.memory_space<vmem>>, vector<1x128xf32>
      %14 = vector.broadcast %13 : vector<1x128xf32> to vector<16x128xf32>
      %15 = arith.addf %12, %14 : vector<16x128xf32>
      %c0_14 = arith.constant 0 : index
      %c0_15 = arith.constant 0 : index
      %16 = vector.load %arg6[%c0_14, %c0_15] : memref<16x128xf32, #tpu.memory_space<vmem>>, vector<16x128xf32>
      tpu.vector_store %arg6[%c0_14, %c0_15], %15 {strides = array<i32>} : memref<16x128xf32, #tpu.memory_space<vmem>>, vector<16x128xf32>,
    } else {
    }
    return
  }
  func.func @transform_0(%arg0: i32, %arg1: i32, %arg2: i32) -> (i32, i32) {
    %c0_i32 = arith.constant 0 : i32
    return %arg0, %arg2 : i32, i32
  }
  func.func @transform_1(%arg0: i32, %arg1: i32, %arg2: i32) -> (i32, i32) {
    %c0_i32 = arith.constant 0 : i32
    return %arg2, %arg1 : i32, i32
  }
  func.func @transform_2(%arg0: i32, %arg1: i32, %arg2: i32) -> (i32, i32) {
    %c0_i32 = arith.constant 0 : i32
    %c0_i32_0 = arith.constant 0 : i32
    return %c0_i32, %arg1 : i32, i32
  }
  func.func @transform_3(%arg0: i32, %arg1: i32, %arg2: i32) -> (i32, i32) {
    %c0_i32 = arith.constant 0 : i32
    return %arg0, %arg1 : i32, i32
  }
}

</mosaic_0001>

<llo_original>
// kernel: forward.20
$region0: #{forward.20}
  #allocation0 [shape = 'u32[]', space=smem, size = 0x4, offset = 0x4, fixed_abs, tag = 'smem constant byte address 0x4 - core index']
  #allocation1 [shape = 'u32[144,128]{1,0:T(1,128)}', space=vmem, size = 0x12000, scoped, tag = 'internal scratch']
  #allocation2 [shape = 'f32[16,192]{1,0:T(8,128)}', space=vmem, size = 0x4000, scoped, tag = 'scratch operand']
  %s0 = inlined_call_operand.vmem [shape: bf16[16,64], index: 0, kind: input, shape index: {}]
  %s1 = inlined_call_operand.vmem [shape: bf16[64,192], index: 1, kind: input, shape index: {}]
  %s2 = inlined_call_operand.vmem [shape: f32[1,192], index: 2, kind: input, shape index: {}]
  %s3 = inlined_call_operand.vmem [shape: bf16[16,192], index: 3, kind: output, shape index: {}]
  %s4 = sld [smem:[#allocation0]]
  $region30: #{forward.20} parent=0
    _
  %s6 = ssub.s32 1, %s4
  %s7 = scalar_select 0, %s6, %s4
  // Predicated region
  $region2: #{forward.20} parent=0 // pred_check
    _
  $region3: #{forward.20} parent=0 // pred_check_branch
    %9 = sbr.rel (0) target = $region5
  $region4: #{forward.20} parent=0 // pred_region
    _
  $region5: #{forward.20} parent=0 // pred_fallthru
    _
  // Predicated region
  $region6: #{forward.20} parent=0 // pred_check
    _
  $region7: #{forward.20} parent=0 // pred_check_branch
    %11 = sbr.rel (0) target = $region9
  $region8: #{forward.20} parent=0 // pred_region
    _
  $region9: #{forward.20} parent=0 // pred_fallthru
    _
  // Predicated region
  $region10: #{forward.20} parent=0 // pred_check
    _
  $region11: #{forward.20} parent=0 // pred_check_branch
    %13 = sbr.rel (0) target = $region13
  $region12: #{forward.20} parent=0 // pred_region
    _
  $region13: #{forward.20} parent=0 // pred_fallthru
    _
  %p15 = scmp.eq.s32.totalorder 0, 0
  // Predicated region
  $region14: #{forward.20} parent=0 // pred_check
    %p16 = pneg %p15
  $region15: #{forward.20} parent=0 // pred_check_branch
    %18 = sbr.rel (%p16) target = $region17
  $region16: #{forward.20} parent=0 // pred_region
    %19 = vst [vmem:[#allocation2] sm:$0xff] 0.0
    %vm20 = vcmask 523264
    %21 = vst.msk [vmem:[#allocation2 + $0x8] sm:$0xff] %vm20, 0.0
    %22 = vst [vmem:[#allocation2 + $0x10] sm:$0xff] 0.0
    %23 = vst.msk [vmem:[#allocation2 + $0x18] sm:$0xff] %vm20, 0.0
  $region17: #{forward.20} parent=0 // pred_fallthru
    _
  %v24 = vld [vmem:[#allocation2] sm:$0xff]
  %v25 = vld [vmem:[#allocation2 + $0x8] sm:$0xff]
  %v26 = vld [vmem:[#allocation2 + $0x10] sm:$0xff]
  %v27 = vld [vmem:[#allocation2 + $0x18] sm:$0xff]
  %v28 = vld [vmem:[%s0] sm:$0xf]
  %v29 = vld [vmem:[%s0 + $0x4] sm:$0xf]
  %v30 = vld [vmem:[%s1] sm:$0xff]
  %v31 = vld [vmem:[%s1 + $0x8] sm:$0xff]
  %v32 = vld [vmem:[%s1 + $0x10] sm:$0xff]
  %v33 = vld [vmem:[%s1 + $0x18] sm:$0xff]
  %v34 = vld [vmem:[%s1 + $0x20] sm:$0xff]
  %v35 = vld [vmem:[%s1 + $0x28] sm:$0xff]
  %v36 = vld [vmem:[%s1 + $0x30] sm:$0xff]
  %v37 = vld [vmem:[%s1 + $0x38] sm:$0xff]
  %v40 = vunpack.c.l.b16 %v28
  %v41 = vunpack.c.l.b16 %v29
  %v42 = vpack.c.b16 %v41, %v40
  %v51 = vunpack.c.l.b16 %v30
  %v52 = vunpack.c.h.b16 %v30
  %v53 = vunpack.c.l.b16 %v31
  %v54 = vunpack.c.h.b16 %v31
  %v55 = vunpack.c.l.b16 %v32
  %v56 = vunpack.c.h.b16 %v32
  %v57 = vunpack.c.l.b16 %v33
  %v58 = vunpack.c.h.b16 %v33
  %v59 = vunpack.c.l.b16 %v34
  %v60 = vunpack.c.h.b16 %v34
  %v61 = vunpack.c.l.b16 %v35
  %v62 = vunpack.c.h.b16 %v35
  %v63 = vunpack.c.l.b16 %v36
  %v64 = vunpack.c.h.b16 %v36
  %v65 = vunpack.c.l.b16 %v37
  %v66 = vunpack.c.h.b16 %v37
  %v67 = vpack.c.b16 %v53, %v51
  %v68 = vpack.c.b16 %v54, %v52
  %v69 = vpack.c.b16 %v57, %v55
  %v70 = vpack.c.b16 %v58, %v56
  %v71 = vpack.c.b16 %v61, %v59
  %v72 = vpack.c.b16 %v62, %v60
  %v73 = vpack.c.b16 %v65, %v63
  %v74 = vpack.c.b16 %v66, %v64
  %vm83 = vcmask 523264
  %v85 = vsel %vm83, %v42, 0
  %87 = vmatprep.subr.bf16.mxu0 %v68
  %88 = vmatpush1.bf16.msra.mxu0 %v67
  %89 = vmatprep.subr.bf16.mxu0 %v70
  %90 = vmatpush1.bf16.msra.mxu0 %v69
  %91 = vmatprep.subr.bf16.mxu0 %v72
  %92 = vmatpush1.bf16.msra.mxu0 %v71
  %93 = vmatprep.subr.bf16.mxu0 %v74
  %94 = vmatpush1.bf16.msra.mxu0 %v73
  %95 = vmatprep.subr.bf16.mxu0 0
  %96 = vmatpush1.bf16.msra.mxu0 0
  %97 = vmatprep.subr.bf16.mxu0 0
  %98 = vmatpush1.bf16.msra.mxu0 0
  %99 = vmatprep.subr.bf16.mxu0 0
  %100 = vmatpush1.bf16.msra.mxu0 0
  %101 = vmatprep.subr.bf16.mxu0 0
  %102 = vmatpush1.bf16.msra.mxu0 0
  %103 = vmatprep.subr.bf16.mxu0 0
  %104 = vmatpush1.bf16.msra.mxu0 0
  %105 = vmatprep.subr.bf16.mxu0 0
  %106 = vmatpush1.bf16.msra.mxu0 0
  %107 = vmatprep.subr.bf16.mxu0 0
  %108 = vmatpush1.bf16.msra.mxu0 0
  %109 = vmatprep.subr.bf16.mxu0 0
  %110 = vmatpush1.bf16.msra.mxu0 0
  %111 = vmatprep.subr.bf16.mxu0 0
  %112 = vmatpush1.bf16.msra.mxu0 0
  %113 = vmatprep.subr.bf16.mxu0 0
  %114 = vmatpush1.bf16.msra.mxu0 0
  %115 = vmatprep.subr.bf16.mxu0 0
  %116 = vmatpush1.bf16.msra.mxu0 0
  %117 = vmatprep.subr.bf16.mxu0 0
  %118 = vmatpush1.bf16.msra.mxu0 0
  %119 = vmatprep.mubr.bf16.mxu0 0
  %120 = vmatmul.mubr.bf16.gmra.mrb[0].mxu0 %v85
  %v121 = vpop.f32.mrb[0].mxu0
  %v122 = vadd.f32 0.0, %v121
  %v123 = vpop.f32.mrb[0].mxu0
  %v124 = vadd.f32 0.0, %v123
  %v125 = vpop.f32.mrb[0].mxu0
  %v126 = vadd.f32 0.0, %v125
  %v127 = vpop.f32.mrb[0].mxu0
  %v128 = vadd.f32 0.0, %v127
  %129 = vdwg.mxu0
  %v130 = vadd.f32 %v24, %v122
  %v131 = vadd.f32 %v25, %v124
  %v132 = vadd.f32 %v26, %v126
  %v133 = vadd.f32 %v27, %v128
  %134 = vst [vmem:[#allocation2] sm:$0xff] %v130
  %135 = vst.msk [vmem:[#allocation2 + $0x8] sm:$0xff] %vm83, %v131
  %136 = vst [vmem:[#allocation2 + $0x10] sm:$0xff] %v132
  %137 = vst.msk [vmem:[#allocation2 + $0x18] sm:$0xff] %vm83, %v133
  // Predicated region
  $region18: #{forward.20} parent=0 // pred_check
    %p138 = pneg %p15
  $region19: #{forward.20} parent=0 // pred_check_branch
    %140 = sbr.rel (%p138) target = $region21
  $region20: #{forward.20} parent=0 // pred_region
    %v141 = vld [vmem:[#allocation2] sm:$0xff]
    %v142 = vld [vmem:[#allocation2 + $0x8] sm:$0xff]
    %v143 = vld [vmem:[#allocation2 + $0x10] sm:$0xff]
    %v144 = vld [vmem:[#allocation2 + $0x18] sm:$0xff]
    %v145 = vld [vmem:[%s2] sm:$0x3]
    %v147 = vlaneseq
    %v148 = vshrl.u32 %v147, 7
    %v149 = vsub.s32 0, %v148
    %v150 = vrot.slane %v145, %v149
    %v151 = vlaneseq
    %v152 = vshrl.u32 %v151, 7
    %v153 = vsub.s32 1, %v152
    %v154 = vrot.slane %v145, %v153
    %v157 = vadd.f32 %v141, %v150
    %v158 = vadd.f32 %v142, %v154
    %v159 = vadd.f32 %v143, %v150
    %v160 = vadd.f32 %v144, %v154
    %v161 = vpack.c.bf16 %v159, %v157
    %v162 = vpack.c.bf16 %v160, %v158
    %v165 = vunpack.c.l.b16 %v161
    %v166 = vunpack.c.l.b16 %v162
    %v167 = vunpack.c.h.b16 %v161
    %v168 = vunpack.c.h.b16 %v162
    %v169 = vpack.c.b16 %v166, %v165
    %v170 = vpack.c.b16 %v168, %v167
    %vm173 = vcmask 1043456
    %vm174 = vcmask 523268
    %vm175 = vmor %vm174, %vm173
    %176 = vst.msk [vmem:[%s3] sm:$0xff] %vm175, %v169
    %177 = vst.msk [vmem:[%s3 + $0x8] sm:$0xff] %vm175, %v170
  $region21: #{forward.20} parent=0 // pred_fallthru
    _
  // Predicated region
  $region22: #{forward.20} parent=0 // pred_check
    _
  $region23: #{forward.20} parent=0 // pred_check_branch
    %179 = sbr.rel (0) target = $region25
  $region24: #{forward.20} parent=0 // pred_region
    _
  $region25: #{forward.20} parent=0 // pred_fallthru
    _
  // Predicated region
  $region26: #{forward.20} parent=0 // pred_check
    _
  $region27: #{forward.20} parent=0 // pred_check_branch
    %181 = sbr.rel (0) target = $region29
  $region28: #{forward.20} parent=0 // pred_region
    _
  $region29: #{forward.20} parent=0 // pred_fallthru
    _

// kernel: forward.22
$region0: #{forward.22}
  #allocation0 [shape = 'u32[]', space=smem, size = 0x4, offset = 0x4, fixed_abs, tag = 'smem constant byte address 0x4 - core index']
  #allocation1 [shape = 'u32[144,128]{1,0:T(1,128)}', space=vmem, size = 0x12000, scoped, tag = 'internal scratch']
  %s0 = inlined_call_operand.vmem [shape: bf16[16,64], index: 0, kind: input, shape index: {}]
  %s1 = inlined_call_operand.vmem [shape: bf16[64,128], index: 1, kind: input, shape index: {}]
  %s2 = inlined_call_operand.vmem [shape: f32[1,128], index: 2, kind: input, shape index: {}]
  %s3 = inlined_call_operand.vmem [shape: bf16[128,64], index: 3, kind: input, shape index: {}]
  %s4 = inlined_call_operand.vmem [shape: f32[1,64], index: 4, kind: input, shape index: {}, may-alias: {4,6}]
  %s5 = inlined_call_operand.vmem [shape: f32[1,64], index: 5, kind: input, shape index: {}]
  %s6 = inlined_call_operand.vmem [shape: f32[1,64], index: 6, kind: input, shape index: {}, may-alias: {4,6}]
  %s7 = inlined_call_operand.vmem [shape: bf16[16,64], index: 7, kind: output, shape index: {}]
  %s8 = sld [smem:[#allocation0]]
  $region38: #{forward.22} parent=0
    _
  %s10 = ssub.s32 1, %s8
  %s11 = scalar_select 0, %s10, %s8
  // Predicated region
  $region2: #{forward.22} parent=0 // pred_check
    _
  $region3: #{forward.22} parent=0 // pred_check_branch
    %13 = sbr.rel (0) target = $region5
  $region4: #{forward.22} parent=0 // pred_region
    _
  $region5: #{forward.22} parent=0 // pred_fallthru
    _
  // Predicated region
  $region6: #{forward.22} parent=0 // pred_check
    _
  $region7: #{forward.22} parent=0 // pred_check_branch
    %15 = sbr.rel (0) target = $region9
  $region8: #{forward.22} parent=0 // pred_region
    _
  $region9: #{forward.22} parent=0 // pred_fallthru
    _
  // Predicated region
  $region10: #{forward.22} parent=0 // pred_check
    _
  $region11: #{forward.22} parent=0 // pred_check_branch
    %17 = sbr.rel (0) target = $region13
  $region12: #{forward.22} parent=0 // pred_region
    _
  $region13: #{forward.22} parent=0 // pred_fallthru
    _
  // Predicated region
  $region14: #{forward.22} parent=0 // pred_check
    _
  $region15: #{forward.22} parent=0 // pred_check_branch
    %19 = sbr.rel (0) target = $region17
  $region16: #{forward.22} parent=0 // pred_region
    _
  $region17: #{forward.22} parent=0 // pred_fallthru
    _
  // Predicated region
  $region18: #{forward.22} parent=0 // pred_check
    _
  $region19: #{forward.22} parent=0 // pred_check_branch
    %21 = sbr.rel (0) target = $region21
  $region20: #{forward.22} parent=0 // pred_region
    _
  $region21: #{forward.22} parent=0 // pred_fallthru
    _
  // Predicated region
  $region22: #{forward.22} parent=0 // pred_check
    _
  $region23: #{forward.22} parent=0 // pred_check_branch
    %23 = sbr.rel (0) target = $region25
  $region24: #{forward.22} parent=0 // pred_region
    _
  $region25: #{forward.22} parent=0 // pred_fallthru
    _
  // Predicated region
  $region26: #{forward.22} parent=0 // pred_check
    _
  $region27: #{forward.22} parent=0 // pred_check_branch
    %25 = sbr.rel (0) target = $region29
  $region28: #{forward.22} parent=0 // pred_region
    _
  $region29: #{forward.22} parent=0 // pred_fallthru
    _
  %v27 = vld [vmem:[%s0] sm:$0xf]
  %v28 = vld [vmem:[%s0 + $0x4] sm:$0xf]
  %v29 = vld [vmem:[%s1] sm:$0xf]
  %v30 = vld [vmem:[%s1 + $0x4] sm:$0xf]
  %v31 = vld [vmem:[%s1 + $0x8] sm:$0xf]
  %v32 = vld [vmem:[%s1 + $0xc] sm:$0xf]
  %v33 = vld [vmem:[%s1 + $0x10] sm:$0xf]
  %v34 = vld [vmem:[%s1 + $0x14] sm:$0xf]
  %v35 = vld [vmem:[%s1 + $0x18] sm:$0xf]
  %v36 = vld [vmem:[%s1 + $0x1c] sm:$0xf]
  %v37 = vld [vmem:[%s2] sm:$0x1]
  %v39 = vlaneseq
  %v40 = vshrl.u32 %v39, 7
  %v41 = vsub.s32 0, %v40
  %v42 = vrot.slane %v37, %v41
  %v46 = vunpack.c.l.b16 %v27
  %v47 = vunpack.c.l.b16 %v28
  %v48 = vpack.c.b16 %v47, %v46
  %v57 = vunpack.c.l.b16 %v29
  %v58 = vunpack.c.l.b16 %v30
  %v59 = vunpack.c.l.b16 %v31
  %v60 = vunpack.c.l.b16 %v32
  %v61 = vunpack.c.l.b16 %v33
  %v62 = vunpack.c.l.b16 %v34
  %v63 = vunpack.c.l.b16 %v35
  %v64 = vunpack.c.l.b16 %v36
  %v65 = vpack.c.b16 %v58, %v57
  %v66 = vpack.c.b16 %v60, %v59
  %v67 = vpack.c.b16 %v62, %v61
  %v68 = vpack.c.b16 %v64, %v63
  %vm73 = vcmask 523264
  %v75 = vsel %vm73, %v48, 0
  %77 = vmatprep.subr.bf16.mxu0 0
  %78 = vmatpush1.bf16.msra.mxu0 %v65
  %79 = vmatprep.subr.bf16.mxu0 0
  %80 = vmatpush1.bf16.msra.mxu0 %v66
  %81 = vmatprep.subr.bf16.mxu0 0
  %82 = vmatpush1.bf16.msra.mxu0 %v67
  %83 = vmatprep.subr.bf16.mxu0 0
  %84 = vmatpush1.bf16.msra.mxu0 %v68
  %85 = vmatprep.subr.bf16.mxu0 0
  %86 = vmatpush1.bf16.msra.mxu0 0
  %87 = vmatprep.subr.bf16.mxu0 0
  %88 = vmatpush1.bf16.msra.mxu0 0
  %89 = vmatprep.subr.bf16.mxu0 0
  %90 = vmatpush1.bf16.msra.mxu0 0
  %91 = vmatprep.subr.bf16.mxu0 0
  %92 = vmatpush1.bf16.msra.mxu0 0
  %93 = vmatprep.subr.bf16.mxu0 0
  %94 = vmatpush1.bf16.msra.mxu0 0
  %95 = vmatprep.subr.bf16.mxu0 0
  %96 = vmatpush1.bf16.msra.mxu0 0
  %97 = vmatprep.subr.bf16.mxu0 0
  %98 = vmatpush1.bf16.msra.mxu0 0
  %99 = vmatprep.subr.bf16.mxu0 0
  %100 = vmatpush1.bf16.msra.mxu0 0
  %101 = vmatprep.subr.bf16.mxu0 0
  %102 = vmatpush1.bf16.msra.mxu0 0
  %103 = vmatprep.subr.bf16.mxu0 0
  %104 = vmatpush1.bf16.msra.mxu0 0
  %105 = vmatprep.subr.bf16.mxu0 0
  %106 = vmatpush1.bf16.msra.mxu0 0
  %107 = vmatprep.subr.bf16.mxu0 0
  %108 = vmatpush1.bf16.msra.mxu0 0
  %109 = vmatprep.mubr.bf16.mxu0 0
  %110 = vmatmul.mubr.bf16.gmra.mrb[0].mxu0 %v75
  %v111 = vpop.f32.mrb[0].mxu0
  %v112 = vadd.f32 %v42, %v111
  %v113 = vpop.f32.mrb[0].mxu0
  %v114 = vpop.f32.mrb[0].mxu0
  %v115 = vadd.f32 %v42, %v114
  %v116 = vpop.f32.mrb[0].mxu0
  %117 = vdwg.mxu0
  %v118 = vmax.f32 %v112, 0.0
  %v119 = vmax.f32 %v115, 0.0
  %v120 = vpack.c.bf16 %v119, %v118
  %v121 = vld [vmem:[%s3] sm:$0xf]
  %v122 = vld [vmem:[%s3 + $0x4] sm:$0xf]
  %v123 = vld [vmem:[%s3 + $0x8] sm:$0xf]
  %v124 = vld [vmem:[%s3 + $0xc] sm:$0xf]
  %v125 = vld [vmem:[%s3 + $0x10] sm:$0xf]
  %v126 = vld [vmem:[%s3 + $0x14] sm:$0xf]
  %v127 = vld [vmem:[%s3 + $0x18] sm:$0xf]
  %v128 = vld [vmem:[%s3 + $0x1c] sm:$0xf]
  %v129 = vld [vmem:[%s3 + $0x20] sm:$0xf]
  %v130 = vld [vmem:[%s3 + $0x24] sm:$0xf]
  %v131 = vld [vmem:[%s3 + $0x28] sm:$0xf]
  %v132 = vld [vmem:[%s3 + $0x2c] sm:$0xf]
  %v133 = vld [vmem:[%s3 + $0x30] sm:$0xf]
  %v134 = vld [vmem:[%s3 + $0x34] sm:$0xf]
  %v135 = vld [vmem:[%s3 + $0x38] sm:$0xf]
  %v136 = vld [vmem:[%s3 + $0x3c] sm:$0xf]
  %v137 = vld [vmem:[%s4] sm:$0x1]
  %v139 = vlaneseq
  %v140 = vshrl.u32 %v139, 7
  %v141 = vsub.s32 0, %v140
  %v142 = vrot.slane %v137, %v141
  %v160 = vunpack.c.l.b16 %v121
  %v161 = vunpack.c.l.b16 %v122
  %v162 = vunpack.c.l.b16 %v123
  %v163 = vunpack.c.l.b16 %v124
  %v164 = vunpack.c.l.b16 %v125
  %v165 = vunpack.c.l.b16 %v126
  %v166 = vunpack.c.l.b16 %v127
  %v167 = vunpack.c.l.b16 %v128
  %v168 = vunpack.c.l.b16 %v129
  %v169 = vunpack.c.l.b16 %v130
  %v170 = vunpack.c.l.b16 %v131
  %v171 = vunpack.c.l.b16 %v132
  %v172 = vunpack.c.l.b16 %v133
  %v173 = vunpack.c.l.b16 %v134
  %v174 = vunpack.c.l.b16 %v135
  %v175 = vunpack.c.l.b16 %v136
  %v176 = vpack.c.b16 %v161, %v160
  %v177 = vpack.c.b16 %v163, %v162
  %v178 = vpack.c.b16 %v165, %v164
  %v179 = vpack.c.b16 %v167, %v166
  %v180 = vpack.c.b16 %v169, %v168
  %v181 = vpack.c.b16 %v171, %v170
  %v182 = vpack.c.b16 %v173, %v172
  %v183 = vpack.c.b16 %v175, %v174
  %192 = vmatprep.subr.bf16.mxu0 0
  %193 = vmatpush1.bf16.msra.mxu0 %v176
  %194 = vmatprep.subr.bf16.mxu0 0
  %195 = vmatpush1.bf16.msra.mxu0 %v177
  %196 = vmatprep.subr.bf16.mxu0 0
  %197 = vmatpush1.bf16.msra.mxu0 %v178
  %198 = vmatprep.subr.bf16.mxu0 0
  %199 = vmatpush1.bf16.msra.mxu0 %v179
  %200 = vmatprep.subr.bf16.mxu0 0
  %201 = vmatpush1.bf16.msra.mxu0 %v180
  %202 = vmatprep.subr.bf16.mxu0 0
  %203 = vmatpush1.bf16.msra.mxu0 %v181
  %204 = vmatprep.subr.bf16.mxu0 0
  %205 = vmatpush1.bf16.msra.mxu0 %v182
  %206 = vmatprep.subr.bf16.mxu0 0
  %207 = vmatpush1.bf16.msra.mxu0 %v183
  %208 = vmatprep.subr.bf16.mxu0 0
  %209 = vmatpush1.bf16.msra.mxu0 0
  %210 = vmatprep.subr.bf16.mxu0 0
  %211 = vmatpush1.bf16.msra.mxu0 0
  %212 = vmatprep.subr.bf16.mxu0 0
  %213 = vmatpush1.bf16.msra.mxu0 0
  %214 = vmatprep.subr.bf16.mxu0 0
  %215 = vmatpush1.bf16.msra.mxu0 0
  %216 = vmatprep.subr.bf16.mxu0 0
  %217 = vmatpush1.bf16.msra.mxu0 0
  %218 = vmatprep.subr.bf16.mxu0 0
  %219 = vmatpush1.bf16.msra.mxu0 0
  %220 = vmatprep.subr.bf16.mxu0 0
  %221 = vmatpush1.bf16.msra.mxu0 0
  %222 = vmatprep.subr.bf16.mxu0 0
  %223 = vmatpush1.bf16.msra.mxu0 0
  %224 = vmatprep.mubr.bf16.mxu0 0
  %225 = vmatmul.mubr.bf16.gmra.mrb[0].mxu0 %v120
  %v226 = vpop.f32.mrb[0].mxu0
  %v227 = vadd.f32 %v142, %v226
  %v228 = vpop.f32.mrb[0].mxu0
  %v229 = vpop.f32.mrb[0].mxu0
  %v230 = vadd.f32 %v142, %v229
  %v231 = vpop.f32.mrb[0].mxu0
  %232 = vdwg.mxu0
  %v233 = vunpack.c.l.bf16 %v27
  %v234 = vunpack.c.l.bf16 %v28
  %v235 = vadd.f32 %v233, %v227
  %v236 = vadd.f32 %v234, %v230
  %v237 = vsel %vm73, %v235, 0.0
  %238 = vadd.xlane.f32.xlu0 %v237
  %v239 = vpop.xlane.xlu0 %238
  %v240 = vsel %vm73, %v236, 0.0
  %241 = vadd.xlane.f32.xlu0 %v240
  %v242 = vpop.xlane.xlu0 %241
  %v243 = vrcp.pop 64.0
  %v244 = vmul.f32 %v239, %v243
  %v245 = vmul.f32 %v242, %v243
  %v246 = vsub.f32 %v235, %v244
  %v247 = vsub.f32 %v236, %v245
  %v248 = vmul.f32 %v246, %v246
  %v249 = vmul.f32 %v247, %v247
  %v250 = vsel %vm73, %v248, 0.0
  %251 = vadd.xlane.f32.xlu0 %v250
  %v252 = vpop.xlane.xlu0 %251
  %v253 = vsel %vm73, %v249, 0.0
  %254 = vadd.xlane.f32.xlu0 %v253
  %v255 = vpop.xlane.xlu0 %254
  %v256 = vmul.f32 %v252, %v243
  %v257 = vmul.f32 %v255, %v243
  %v258 = vadd.f32 %v256, 1e-06
  %v259 = vadd.f32 %v257, 1e-06
  %v260 = vrsqrt.pop %v258
  %v261 = vrsqrt.pop %v259
  %v262 = vmul.f32 %v246, %v260
  %v263 = vmul.f32 %v247, %v261
  %v264 = vld [vmem:[%s5] sm:$0x1]
  %v266 = vlaneseq
  %v267 = vshrl.u32 %v266, 7
  %v268 = vsub.s32 0, %v267
  %v269 = vrot.slane %v264, %v268
  %v271 = vmul.f32 %v262, %v269
  %v272 = vmul.f32 %v263, %v269
  %v273 = vld [vmem:[%s6] sm:$0x1]
  %v275 = vlaneseq
  %v276 = vshrl.u32 %v275, 7
  %v277 = vsub.s32 0, %v276
  %v278 = vrot.slane %v273, %v277
  %v280 = vadd.f32 %v271, %v278
  %v281 = vadd.f32 %v272, %v278
  %v282 = vpack.c.bf16 %v281, %v280
  %v284 = vunpack.c.l.b16 %v282
  %v285 = vunpack.c.h.b16 %v282
  %v286 = vpack.c.b16 %v284, %v284
  %v287 = vpack.c.b16 %v285, %v285
  %vm290 = vcmask 519168
  %291 = vst.msk [vmem:[%s7] sm:$0xf] %vm290, %v286
  %292 = vst.msk [vmem:[%s7 + $0x4] sm:$0xf] %vm290, %v287
  // Predicated region
  $region30: #{forward.22} parent=0 // pred_check
    _
  $region31: #{forward.22} parent=0 // pred_check_branch
    %294 = sbr.rel (0) target = $region33
  $region32: #{forward.22} parent=0 // pred_region
    _
  $region33: #{forward.22} parent=0 // pred_fallthru
    _
  // Predicated region
  $region34: #{forward.22} parent=0 // pred_check
    _
  $region35: #{forward.22} parent=0 // pred_check_branch
    %296 = sbr.rel (0) target = $region37
  $region36: #{forward.22} parent=0 // pred_region
    _
  $region37: #{forward.22} parent=0 // pred_fallthru
    _

// kernel: forward.29
$region0: #{forward.29}
  #allocation0 [shape = 'u32[]', space=smem, size = 0x4, offset = 0x4, fixed_abs, tag = 'smem constant byte address 0x4 - core index']
  #allocation1 [shape = 'u32[144,128]{1,0:T(1,128)}', space=vmem, size = 0x12000, scoped, tag = 'internal scratch']
  #allocation2 [shape = 'f32[16,128]{1,0:T(8,128)}', space=vmem, size = 0x2000, scoped, tag = 'scratch operand']
  %s0 = inlined_call_operand.vmem [shape: bf16[16,64], index: 0, kind: input, shape index: {}]
  %s1 = inlined_call_operand.vmem [shape: bf16[64,128], index: 1, kind: input, shape index: {}]
  %s2 = inlined_call_operand.vmem [shape: f32[1,128], index: 2, kind: input, shape index: {}]
  %s3 = inlined_call_operand.vmem [shape: bf16[16,128], index: 3, kind: output, shape index: {}]
  %s4 = sld [smem:[#allocation0]]
  $region30: #{forward.29} parent=0
    _
  %s6 = ssub.s32 1, %s4
  %s7 = scalar_select 0, %s6, %s4
  // Predicated region
  $region2: #{forward.29} parent=0 // pred_check
    _
  $region3: #{forward.29} parent=0 // pred_check_branch
    %9 = sbr.rel (0) target = $region5
  $region4: #{forward.29} parent=0 // pred_region
    _
  $region5: #{forward.29} parent=0 // pred_fallthru
    _
  // Predicated region
  $region6: #{forward.29} parent=0 // pred_check
    _
  $region7: #{forward.29} parent=0 // pred_check_branch
    %11 = sbr.rel (0) target = $region9
  $region8: #{forward.29} parent=0 // pred_region
    _
  $region9: #{forward.29} parent=0 // pred_fallthru
    _
  // Predicated region
  $region10: #{forward.29} parent=0 // pred_check
    _
  $region11: #{forward.29} parent=0 // pred_check_branch
    %13 = sbr.rel (0) target = $region13
  $region12: #{forward.29} parent=0 // pred_region
    _
  $region13: #{forward.29} parent=0 // pred_fallthru
    _
  %p15 = scmp.eq.s32.totalorder 0, 0
  // Predicated region
  $region14: #{forward.29} parent=0 // pred_check
    %p16 = pneg %p15
  $region15: #{forward.29} parent=0 // pred_check_branch
    %18 = sbr.rel (%p16) target = $region17
  $region16: #{forward.29} parent=0 // pred_region
    %19 = vst [vmem:[#allocation2] sm:$0xff] 0.0
    %20 = vst [vmem:[#allocation2 + $0x8] sm:$0xff] 0.0
  $region17: #{forward.29} parent=0 // pred_fallthru
    _
  %v21 = vld [vmem:[#allocation2] sm:$0xff]
  %v22 = vld [vmem:[#allocation2 + $0x8] sm:$0xff]
  %v23 = vld [vmem:[%s0] sm:$0xf]
  %v24 = vld [vmem:[%s0 + $0x4] sm:$0xf]
  %v25 = vld [vmem:[%s1] sm:$0xf]
  %v26 = vld [vmem:[%s1 + $0x4] sm:$0xf]
  %v27 = vld [vmem:[%s1 + $0x8] sm:$0xf]
  %v28 = vld [vmem:[%s1 + $0xc] sm:$0xf]
  %v29 = vld [vmem:[%s1 + $0x10] sm:$0xf]
  %v30 = vld [vmem:[%s1 + $0x14] sm:$0xf]
  %v31 = vld [vmem:[%s1 + $0x18] sm:$0xf]
  %v32 = vld [vmem:[%s1 + $0x1c] sm:$0xf]
  %v35 = vunpack.c.l.b16 %v23
  %v36 = vunpack.c.l.b16 %v24
  %v37 = vpack.c.b16 %v36, %v35
  %v46 = vunpack.c.l.b16 %v25
  %v47 = vunpack.c.l.b16 %v26
  %v48 = vunpack.c.l.b16 %v27
  %v49 = vunpack.c.l.b16 %v28
  %v50 = vunpack.c.l.b16 %v29
  %v51 = vunpack.c.l.b16 %v30
  %v52 = vunpack.c.l.b16 %v31
  %v53 = vunpack.c.l.b16 %v32
  %v54 = vpack.c.b16 %v47, %v46
  %v55 = vpack.c.b16 %v49, %v48
  %v56 = vpack.c.b16 %v51, %v50
  %v57 = vpack.c.b16 %v53, %v52
  %vm62 = vcmask 523264
  %v64 = vsel %vm62, %v37, 0
  %66 = vmatprep.subr.bf16.mxu0 0
  %67 = vmatpush1.bf16.msra.mxu0 %v54
  %68 = vmatprep.subr.bf16.mxu0 0
  %69 = vmatpush1.bf16.msra.mxu0 %v55
  %70 = vmatprep.subr.bf16.mxu0 0
  %71 = vmatpush1.bf16.msra.mxu0 %v56
  %72 = vmatprep.subr.bf16.mxu0 0
  %73 = vmatpush1.bf16.msra.mxu0 %v57
  %74 = vmatprep.subr.bf16.mxu0 0
  %75 = vmatpush1.bf16.msra.mxu0 0
  %76 = vmatprep.subr.bf16.mxu0 0
  %77 = vmatpush1.bf16.msra.mxu0 0
  %78 = vmatprep.subr.bf16.mxu0 0
  %79 = vmatpush1.bf16.msra.mxu0 0
  %80 = vmatprep.subr.bf16.mxu0 0
  %81 = vmatpush1.bf16.msra.mxu0 0
  %82 = vmatprep.subr.bf16.mxu0 0
  %83 = vmatpush1.bf16.msra.mxu0 0
  %84 = vmatprep.subr.bf16.mxu0 0
  %85 = vmatpush1.bf16.msra.mxu0 0
  %86 = vmatprep.subr.bf16.mxu0 0
  %87 = vmatpush1.bf16.msra.mxu0 0
  %88 = vmatprep.subr.bf16.mxu0 0
  %89 = vmatpush1.bf16.msra.mxu0 0
  %90 = vmatprep.subr.bf16.mxu0 0
  %91 = vmatpush1.bf16.msra.mxu0 0
  %92 = vmatprep.subr.bf16.mxu0 0
  %93 = vmatpush1.bf16.msra.mxu0 0
  %94 = vmatprep.subr.bf16.mxu0 0
  %95 = vmatpush1.bf16.msra.mxu0 0
  %96 = vmatprep.subr.bf16.mxu0 0
  %97 = vmatpush1.bf16.msra.mxu0 0
  %98 = vmatprep.mubr.bf16.mxu0 0
  %99 = vmatmul.mubr.bf16.gmra.mrb[0].mxu0 %v64
  %v100 = vpop.f32.mrb[0].mxu0
  %v101 = vadd.f32 0.0, %v100
  %v102 = vpop.f32.mrb[0].mxu0
  %v103 = vpop.f32.mrb[0].mxu0
  %v104 = vadd.f32 0.0, %v103
  %v105 = vpop.f32.mrb[0].mxu0
  %106 = vdwg.mxu0
  %v107 = vadd.f32 %v21, %v101
  %v108 = vadd.f32 %v22, %v104
  %109 = vst [vmem:[#allocation2] sm:$0xff] %v107
  %110 = vst [vmem:[#allocation2 + $0x8] sm:$0xff] %v108
  // Predicated region
  $region18: #{forward.29} parent=0 // pred_check
    %p111 = pneg %p15
  $region19: #{forward.29} parent=0 // pred_check_branch
    %113 = sbr.rel (%p111) target = $region21
  $region20: #{forward.29} parent=0 // pred_region
    %v114 = vld [vmem:[#allocation2] sm:$0xff]
    %v115 = vld [vmem:[#allocation2 + $0x8] sm:$0xff]
    %v116 = vld [vmem:[%s2] sm:$0x1]
    %v118 = vlaneseq
    %v119 = vshrl.u32 %v118, 7
    %v120 = vsub.s32 0, %v119
    %v121 = vrot.slane %v116, %v120
    %v123 = vadd.f32 %v114, %v121
    %v124 = vadd.f32 %v115, %v121
    %v125 = vpack.c.bf16 %v124, %v123
    %v127 = vunpack.c.l.b16 %v125
    %v128 = vunpack.c.h.b16 %v125
    %v129 = vpack.c.b16 %v127, %v127
    %v130 = vpack.c.b16 %v128, %v128
    %133 = vst [vmem:[%s3] sm:$0xf] %v129
    %134 = vst [vmem:[%s3 + $0x4] sm:$0xf] %v130
  $region21: #{forward.29} parent=0 // pred_fallthru
    _
  // Predicated region
  $region22: #{forward.29} parent=0 // pred_check
    _
  $region23: #{forward.29} parent=0 // pred_check_branch
    %136 = sbr.rel (0) target = $region25
  $region24: #{forward.29} parent=0 // pred_region
    _
  $region25: #{forward.29} parent=0 // pred_fallthru
    _
  // Predicated region
  $region26: #{forward.29} parent=0 // pred_check
    _
  $region27: #{forward.29} parent=0 // pred_check_branch
    %138 = sbr.rel (0) target = $region29
  $region28: #{forward.29} parent=0 // pred_region
    _
  $region29: #{forward.29} parent=0 // pred_fallthru
    _

// kernel: forward.21
$region0: #{forward.21}
  #allocation0 [shape = 'u32[]', space=smem, size = 0x4, offset = 0x4, fixed_abs, tag = 'smem constant byte address 0x4 - core index']
  #allocation1 [shape = 'u32[144,128]{1,0:T(1,128)}', space=vmem, size = 0x12000, scoped, tag = 'internal scratch']
  %s0 = inlined_call_operand.vmem [shape: bf16[2,8,192], index: 0, kind: input, shape index: {}, may-alias: {0,1}]
  %s1 = inlined_call_operand.vmem [shape: bf16[2,8,192], index: 1, kind: input, shape index: {}, may-alias: {0,1}]
  %s2 = inlined_call_operand.vmem [shape: f32[4,8,8], index: 2, kind: input, shape index: {}]
  %s3 = inlined_call_operand.vmem [shape: f32[2,1,8], index: 3, kind: input, shape index: {}]
  %s4 = inlined_call_operand.vmem [shape: bf16[64,64], index: 4, kind: input, shape index: {}]
  %s5 = inlined_call_operand.vmem [shape: f32[1,64], index: 5, kind: input, shape index: {}, may-alias: {5,8}]
  %s6 = inlined_call_operand.vmem [shape: bf16[2,8,64], index: 6, kind: input, shape index: {}]
  %s7 = inlined_call_operand.vmem [shape: f32[1,64], index: 7, kind: input, shape index: {}]
  %s8 = inlined_call_operand.vmem [shape: f32[1,64], index: 8, kind: input, shape index: {}, may-alias: {5,8}]
  %s9 = inlined_call_operand.vmem [shape: bf16[2,8,64], index: 9, kind: output, shape index: {}]
  %s10 = sld [smem:[#allocation0]]
  $region69: #{forward.21} parent=0
    _
  %s12 = ssub.s32 1, %s10
  %s13 = scalar_select 0, %s12, %s10
  loop: start=0, step=1, limit=4
  $region2: #{forward.21} parent=0 // loop_pre_header
    _
  $region3: #{forward.21} parent=0 // loop_header
    %s15 = sphi 0, %s19
    %p16 = scmp.ge.s32.totalorder %s15, 4
    %s25 = sphi 0, %s27
    %s28 = sphi 0, %s25
    %s29 = sphi 0, %s28
    %s45 = sphi 0, %s29
    %s51 = sphi 0, %s53
    %s54 = sphi 0, %s51
    %s55 = sphi 0, %s54
    %s71 = sphi 0, %s55
    %s75 = sphi 0, %s75
    %s77 = sphi 0, %s75
    %s78 = sphi 0, %s77
    %s92 = sphi 0, %s78
    %s98 = sphi 0, %s100
    %s101 = sphi 0, %s98
    %s102 = sphi 0, %s101
    %s118 = sphi 0, %s102
    %s122 = sphi 0, %s122
    %s124 = sphi 0, %s122
    %s125 = sphi 0, %s124
    %s139 = sphi 0, %s125
    %s143 = sphi 0, %s143
    %s145 = sphi 0, %s143
    %s146 = sphi 0, %s145
    %s160 = sphi 0, %s146
    %s166 = sphi 0, %s168
    %s169 = sphi 0, %s166
    %s170 = sphi 0, %s169
    %s186 = sphi 0, %s170
    %s190 = sphi 0, %s190
    %s192 = sphi 0, %s190
    %s193 = sphi 0, %s192
    %s207 = sphi 0, %s193
    %s211 = sphi 0, %s211
    %s213 = sphi 0, %s211
    %s214 = sphi 0, %s213
    %s228 = sphi 0, %s214
    %s234 = sphi 0, %s236
    %s237 = sphi 0, %s234
    %s238 = sphi 0, %s237
    %s254 = sphi 0, %s238
  $region4: #{forward.21} parent=0 // loop_header_branch
    %18 = sbr.rel (%p16) target = $region8
  $region5: #{forward.21} parent=0 // loop_body
    %s20 = ssub.s32 %s15, 1
    %s21 = ssub.s32 %s15, 2
    %s22 = sadd.s32 %s15, 1
    %s23 = ssub.s32 %s15, %s22
    %p24 = scmp.eq.s32.totalorder %s23, 0
    %s26 = sadd.s32 %s25, 1
    %s27 = scalar_select %p24, %s25, %s26
    %p30 = pneg %p24
    %p31 = scmp.eq.s32.totalorder %s15, 1
    %p32 = por %p30, %p31
    %p33 = scmp.ne.s32.totalorder %s25, %s28
    %p34 = scmp.eq.s32.totalorder %s15, 0
    %p35 = por %p33, %p34
    %p36 = scmp.ne.s32.totalorder %s25, %s28
    %p37 = scmp.eq.s32.totalorder %s20, 1
    %p38 = por %p36, %p37
    %p39 = scmp.ne.s32.totalorder %s28, %s29
    %p40 = scmp.eq.s32.totalorder %s20, 0
    %p41 = por %p39, %p40
    %p42 = scmp.ne.s32.totalorder %s28, %s29
    %p43 = scmp.eq.s32.totalorder %s21, 1
    %p44 = por %p42, %p43
    %p46 = scmp.ne.s32.totalorder %s29, %s45
    %p47 = scmp.eq.s32.totalorder %s21, 0
    %p48 = por %p46, %p47
    %s49 = ssub.s32 %s15, %s22
    %p50 = scmp.eq.s32.totalorder %s49, 0
    %s52 = sadd.s32 %s51, 1
    %s53 = scalar_select %p50, %s51, %s52
    %p56 = pneg %p50
    %p57 = scmp.eq.s32.totalorder %s15, 1
    %p58 = por %p56, %p57
    %p59 = scmp.ne.s32.totalorder %s51, %s54
    %p60 = scmp.eq.s32.totalorder %s15, 0
    %p61 = por %p59, %p60
    %p62 = scmp.ne.s32.totalorder %s51, %s54
    %p63 = scmp.eq.s32.totalorder %s20, 1
    %p64 = por %p62, %p63
    %p65 = scmp.ne.s32.totalorder %s54, %s55
    %p66 = scmp.eq.s32.totalorder %s20, 0
    %p67 = por %p65, %p66
    %p68 = scmp.ne.s32.totalorder %s54, %s55
    %p69 = scmp.eq.s32.totalorder %s21, 1
    %p70 = por %p68, %p69
    %p72 = scmp.ne.s32.totalorder %s55, %s71
    %p73 = scmp.eq.s32.totalorder %s21, 0
    %p74 = por %p72, %p73
    %s76 = sadd.s32 %s75, 1
    %p79 = scmp.eq.s32.totalorder %s15, 1
    %p80 = scmp.ne.s32.totalorder %s75, %s77
    %p81 = scmp.eq.s32.totalorder %s15, 0
    %p82 = por %p80, %p81
    %p83 = scmp.ne.s32.totalorder %s75, %s77
    %p84 = scmp.eq.s32.totalorder %s20, 1
    %p85 = por %p83, %p84
    %p86 = scmp.ne.s32.totalorder %s77, %s78
    %p87 = scmp.eq.s32.totalorder %s20, 0
    %p88 = por %p86, %p87
    %p89 = scmp.ne.s32.totalorder %s77, %s78
    %p90 = scmp.eq.s32.totalorder %s21, 1
    %p91 = por %p89, %p90
    %p93 = scmp.ne.s32.totalorder %s78, %s92
    %p94 = scmp.eq.s32.totalorder %s21, 0
    %p95 = por %p93, %p94
    %s96 = ssub.s32 %s15, %s22
    %p97 = scmp.eq.s32.totalorder %s96, 0
    %s99 = sadd.s32 %s98, 1
    %s100 = scalar_select %p97, %s98, %s99
    %p103 = pneg %p97
    %p104 = scmp.eq.s32.totalorder %s15, 1
    %p105 = por %p103, %p104
    %p106 = scmp.ne.s32.totalorder %s98, %s101
    %p107 = scmp.eq.s32.totalorder %s15, 0
    %p108 = por %p106, %p107
    %p109 = scmp.ne.s32.totalorder %s98, %s101
    %p110 = scmp.eq.s32.totalorder %s20, 1
    %p111 = por %p109, %p110
    %p112 = scmp.ne.s32.totalorder %s101, %s102
    %p113 = scmp.eq.s32.totalorder %s20, 0
    %p114 = por %p112, %p113
    %p115 = scmp.ne.s32.totalorder %s101, %s102
    %p116 = scmp.eq.s32.totalorder %s21, 1
    %p117 = por %p115, %p116
    %p119 = scmp.ne.s32.totalorder %s102, %s118
    %p120 = scmp.eq.s32.totalorder %s21, 0
    %p121 = por %p119, %p120
    %s123 = sadd.s32 %s122, 1
    %p126 = scmp.eq.s32.totalorder %s15, 1
    %p127 = scmp.ne.s32.totalorder %s122, %s124
    %p128 = scmp.eq.s32.totalorder %s15, 0
    %p129 = por %p127, %p128
    %p130 = scmp.ne.s32.totalorder %s122, %s124
    %p131 = scmp.eq.s32.totalorder %s20, 1
    %p132 = por %p130, %p131
    %p133 = scmp.ne.s32.totalorder %s124, %s125
    %p134 = scmp.eq.s32.totalorder %s20, 0
    %p135 = por %p133, %p134
    %p136 = scmp.ne.s32.totalorder %s124, %s125
    %p137 = scmp.eq.s32.totalorder %s21, 1
    %p138 = por %p136, %p137
    %p140 = scmp.ne.s32.totalorder %s125, %s139
    %p141 = scmp.eq.s32.totalorder %s21, 0
    %p142 = por %p140, %p141
    %s144 = sadd.s32 %s143, 1
    %p147 = scmp.eq.s32.totalorder %s15, 1
    %p148 = scmp.ne.s32.totalorder %s143, %s145
    %p149 = scmp.eq.s32.totalorder %s15, 0
    %p150 = por %p148, %p149
    %p151 = scmp.ne.s32.totalorder %s143, %s145
    %p152 = scmp.eq.s32.totalorder %s20, 1
    %p153 = por %p151, %p152
    %p154 = scmp.ne.s32.totalorder %s145, %s146
    %p155 = scmp.eq.s32.totalorder %s20, 0
    %p156 = por %p154, %p155
    %p157 = scmp.ne.s32.totalorder %s145, %s146
    %p158 = scmp.eq.s32.totalorder %s21, 1
    %p159 = por %p157, %p158
    %p161 = scmp.ne.s32.totalorder %s146, %s160
    %p162 = scmp.eq.s32.totalorder %s21, 0
    %p163 = por %p161, %p162
    %s164 = ssub.s32 %s15, %s22
    %p165 = scmp.eq.s32.totalorder %s164, 0
    %s167 = sadd.s32 %s166, 1
    %s168 = scalar_select %p165, %s166, %s167
    %p171 = pneg %p165
    %p172 = scmp.eq.s32.totalorder %s15, 1
    %p173 = por %p171, %p172
    %p174 = scmp.ne.s32.totalorder %s166, %s169
    %p175 = scmp.eq.s32.totalorder %s15, 0
    %p176 = por %p174, %p175
    %p177 = scmp.ne.s32.totalorder %s166, %s169
    %p178 = scmp.eq.s32.totalorder %s20, 1
    %p179 = por %p177, %p178
    %p180 = scmp.ne.s32.totalorder %s169, %s170
    %p181 = scmp.eq.s32.totalorder %s20, 0
    %p182 = por %p180, %p181
    %p183 = scmp.ne.s32.totalorder %s169, %s170
    %p184 = scmp.eq.s32.totalorder %s21, 1
    %p185 = por %p183, %p184
    %p187 = scmp.ne.s32.totalorder %s170, %s186
    %p188 = scmp.eq.s32.totalorder %s21, 0
    %p189 = por %p187, %p188
    %s191 = sadd.s32 %s190, 1
    %p194 = scmp.eq.s32.totalorder %s15, 1
    %p195 = scmp.ne.s32.totalorder %s190, %s192
    %p196 = scmp.eq.s32.totalorder %s15, 0
    %p197 = por %p195, %p196
    %p198 = scmp.ne.s32.totalorder %s190, %s192
    %p199 = scmp.eq.s32.totalorder %s20, 1
    %p200 = por %p198, %p199
    %p201 = scmp.ne.s32.totalorder %s192, %s193
    %p202 = scmp.eq.s32.totalorder %s20, 0
    %p203 = por %p201, %p202
    %p204 = scmp.ne.s32.totalorder %s192, %s193
    %p205 = scmp.eq.s32.totalorder %s21, 1
    %p206 = por %p204, %p205
    %p208 = scmp.ne.s32.totalorder %s193, %s207
    %p209 = scmp.eq.s32.totalorder %s21, 0
    %p210 = por %p208, %p209
    %s212 = sadd.s32 %s211, 1
    %p215 = scmp.eq.s32.totalorder %s15, 1
    %p216 = scmp.ne.s32.totalorder %s211, %s213
    %p217 = scmp.eq.s32.totalorder %s15, 0
    %p218 = por %p216, %p217
    %p219 = scmp.ne.s32.totalorder %s211, %s213
    %p220 = scmp.eq.s32.totalorder %s20, 1
    %p221 = por %p219, %p220
    %p222 = scmp.ne.s32.totalorder %s213, %s214
    %p223 = scmp.eq.s32.totalorder %s20, 0
    %p224 = por %p222, %p223
    %p225 = scmp.ne.s32.totalorder %s213, %s214
    %p226 = scmp.eq.s32.totalorder %s21, 1
    %p227 = por %p225, %p226
    %p229 = scmp.ne.s32.totalorder %s214, %s228
    %p230 = scmp.eq.s32.totalorder %s21, 0
    %p231 = por %p229, %p230
    %s232 = ssub.s32 %s15, %s22
    %p233 = scmp.eq.s32.totalorder %s232, 0
    %s235 = sadd.s32 %s234, 1
    %s236 = scalar_select %p233, %s234, %s235
    %p239 = pneg %p233
    %p240 = scmp.eq.s32.totalorder %s15, 1
    %p241 = por %p239, %p240
    %p242 = scmp.ne.s32.totalorder %s234, %s237
    %p243 = scmp.eq.s32.totalorder %s15, 0
    %p244 = por %p242, %p243
    %p245 = scmp.ne.s32.totalorder %s234, %s237
    %p246 = scmp.eq.s32.totalorder %s20, 1
    %p247 = por %p245, %p246
    %p248 = scmp.ne.s32.totalorder %s237, %s238
    %p249 = scmp.eq.s32.totalorder %s20, 0
    %p250 = por %p248, %p249
    %p251 = scmp.ne.s32.totalorder %s237, %s238
    %p252 = scmp.eq.s32.totalorder %s21, 1
    %p253 = por %p251, %p252
    %p255 = scmp.ne.s32.totalorder %s238, %s254
    %p256 = scmp.eq.s32.totalorder %s21, 0
    %p257 = por %p255, %p256
    %p258 = scmp.le.s32.totalorder 1, %s15
    %p259 = scmp.lt.s32.totalorder %s15, 3
    %p260 = pnand %p258, %p259
    %p261 = pneg %p260
    // Predicated region
    $region9: #{forward.21} parent=5 // pred_check
      _
    $region10: #{forward.21} parent=5 // pred_check_branch
      %263 = sbr.rel (%p260) target = $region12
    $region11: #{forward.21} parent=5 // pred_region
      %s264 = ssub.s32 %s15, 1
      // Predicated region
      $region13: #{forward.21} parent=11 // pred_check
        %p265 = pneg %p88
      $region14: #{forward.21} parent=11 // pred_check_branch
        %267 = sbr.rel (%p265) target = $region16
      $region15: #{forward.21} parent=11 // pred_region
        _
      $region16: #{forward.21} parent=11 // pred_fallthru
        _
      // Predicated region
      $region17: #{forward.21} parent=11 // pred_check
        %p268 = pneg %p135
      $region18: #{forward.21} parent=11 // pred_check_branch
        %270 = sbr.rel (%p268) target = $region20
      $region19: #{forward.21} parent=11 // pred_region
        _
      $region20: #{forward.21} parent=11 // pred_fallthru
        _
      // Predicated region
      $region21: #{forward.21} parent=11 // pred_check
        %p271 = pneg %p156
      $region22: #{forward.21} parent=11 // pred_check_branch
        %273 = sbr.rel (%p271) target = $region24
      $region23: #{forward.21} parent=11 // pred_region
        _
      $region24: #{forward.21} parent=11 // pred_fallthru
        _
      // Predicated region
      $region25: #{forward.21} parent=11 // pred_check
        %p274 = pneg %p203
      $region26: #{forward.21} parent=11 // pred_check_branch
        %276 = sbr.rel (%p274) target = $region28
      $region27: #{forward.21} parent=11 // pred_region
        _
      $region28: #{forward.21} parent=11 // pred_fallthru
        _
      // Predicated region
      $region29: #{forward.21} parent=11 // pred_check
        %p277 = pneg %p224
      $region30: #{forward.21} parent=11 // pred_check_branch
        %279 = sbr.rel (%p277) target = $region32
      $region31: #{forward.21} parent=11 // pred_region
        _
      $region32: #{forward.21} parent=11 // pred_fallthru
        _
    $region12: #{forward.21} parent=5 // pred_fallthru
      _
    %p280 = scmp.lt.s32.totalorder %s15, 2
    // Predicated region
    $region33: #{forward.21} parent=5 // pred_check
      %p281 = pneg %p280
    $region34: #{forward.21} parent=5 // pred_check_branch
      %283 = sbr.rel (%p281) target = $region36
    $region35: #{forward.21} parent=5 // pred_region
      // Predicated region
      $region37: #{forward.21} parent=35 // pred_check
        %p284 = pneg %p35
      $region38: #{forward.21} parent=35 // pred_check_branch
        %286 = sbr.rel (%p284) target = $region40
      $region39: #{forward.21} parent=35 // pred_region
        %p287 = scmp.lt.s32.totalorder %s15, 1
        %s288 = scalar_select %p287, %s15, 1
        %s289 = smul.addr %s288, 2
        %s290 = smul.addr %s289, 4
        %s291 = scalar_lea.vmem %s0, %s290
      $region40: #{forward.21} parent=35 // pred_fallthru
        _
      // Predicated region
      $region41: #{forward.21} parent=35 // pred_check
        %p292 = pneg %p61
      $region42: #{forward.21} parent=35 // pred_check_branch
        %294 = sbr.rel (%p292) target = $region44
      $region43: #{forward.21} parent=35 // pred_region
        %p295 = scmp.lt.s32.totalorder %s15, 1
        %s296 = scalar_select %p295, %s15, 1
        %s297 = smul.addr %s296, 2
        %s298 = smul.addr %s297, 4
        %s299 = scalar_lea.vmem %s1, %s298
      $region44: #{forward.21} parent=35 // pred_fallthru
        _
      // Predicated region
      $region45: #{forward.21} parent=35 // pred_check
        %p300 = pneg %p108
      $region46: #{forward.21} parent=35 // pred_check_branch
        %302 = sbr.rel (%p300) target = $region48
      $region47: #{forward.21} parent=35 // pred_region
        %p303 = scmp.lt.s32.totalorder %s15, 1
        %s304 = scalar_select %p303, %s15, 1
        %s305 = scalar_lea.vmem %s3, %s304
      $region48: #{forward.21} parent=35 // pred_fallthru
        _
      // Predicated region
      $region49: #{forward.21} parent=35 // pred_check
        %p306 = pneg %p176
      $region50: #{forward.21} parent=35 // pred_check_branch
        %308 = sbr.rel (%p306) target = $region52
      $region51: #{forward.21} parent=35 // pred_region
        %p309 = scmp.lt.s32.totalorder %s15, 1
        %s310 = scalar_select %p309, %s15, 1
        %s311 = smul.addr %s310, 4
        %s312 = scalar_lea.vmem %s6, %s311
      $region52: #{forward.21} parent=35 // pred_fallthru
        _
    $region36: #{forward.21} parent=5 // pred_fallthru
      _
    %p313 = scmp.le.s32.totalorder 1, %s15
    %p314 = scmp.lt.s32.totalorder %s15, 3
    %p315 = pnand %p313, %p314
    %p316 = pneg %p315
    // Predicated region
    $region53: #{forward.21} parent=5 // pred_check
      _
    $region54: #{forward.21} parent=5 // pred_check_branch
      %318 = sbr.rel (%p315) target = $region56
    $region55: #{forward.21} parent=5 // pred_region
      %s319 = ssub.s32 %s15, 1
      %p320 = scmp.lt.s32.totalorder %s20, 1
      %s321 = scalar_select %p320, %s20, 1
      %s322 = smul.addr %s321, 2
      %s323 = smul.addr %s322, 4
      %s324 = scalar_lea.vmem %s0, %s323
      %p325 = pneg %p41
      %p326 = pneg %p38
      %p327 = scmp.lt.s32.totalorder %s20, 1
      %s328 = scalar_select %p327, %s20, 1
      %s329 = smul.addr %s328, 2
      %s330 = smul.addr %s329, 4
      %s331 = scalar_lea.vmem %s1, %s330
      %p332 = pneg %p67
      %p333 = pneg %p64
      %p334 = pneg %p88
      %p335 = pneg %p85
      %p336 = scmp.lt.s32.totalorder %s20, 1
      %s337 = scalar_select %p336, %s20, 1
      %s338 = scalar_lea.vmem %s3, %s337
      %p339 = pneg %p114
      %p340 = pneg %p111
      %p341 = pneg %p135
      %p342 = pneg %p132
      %p343 = pneg %p156
      %p344 = pneg %p153
      %p345 = scmp.lt.s32.totalorder %s20, 1
      %s346 = scalar_select %p345, %s20, 1
      %s347 = smul.addr %s346, 4
      %s348 = scalar_lea.vmem %s6, %s347
      %p349 = pneg %p182
      %p350 = pneg %p179
      %p351 = pneg %p203
      %p352 = pneg %p200
      %p353 = pneg %p224
      %p354 = pneg %p221
      %p355 = pneg %p250
      %p356 = pneg %p247
      %p357 = scmp.lt.s32.totalorder %s20, 1
      %s358 = scalar_select %p357, %s20, 1
      %s359 = smul.addr %s358, 4
      %s360 = scalar_lea.vmem %s9, %s359
      %p361 = scmp.lt.s32.totalorder %s20, 1
      %s362 = scalar_select %p361, %s20, 1
      %s363 = smul.addr %s362, 2
      %s364 = smul.addr %s363, 4
      %s365 = scalar_lea.vmem %s0, %s364
      %p366 = scmp.lt.s32.totalorder %s20, 1
      %s367 = scalar_select %p366, %s20, 1
      %s368 = smul.addr %s367, 2
      %s369 = smul.addr %s368, 4
      %s370 = scalar_lea.vmem %s1, %s369
      %p371 = scmp.lt.s32.totalorder %s20, 1
      %s372 = scalar_select %p371, %s20, 1
      %s373 = scalar_lea.vmem %s3, %s372
      %p374 = scmp.lt.s32.totalorder %s20, 1
      %s375 = scalar_select %p374, %s20, 1
      %s376 = smul.addr %s375, 4
      %s377 = scalar_lea.vmem %s6, %s376
      %p378 = scmp.lt.s32.totalorder %s20, 1
      %s379 = scalar_select %p378, %s20, 1
      %s380 = smul.addr %s379, 4
      %s381 = scalar_lea.vmem %s9, %s380
      %v383 = vld [vmem:[%s365] sm:$0xff]
      %v384 = vld [vmem:[%s370] sm:$0xff]
      %v385 = vld [vmem:[%s373] sm:$0x1]
      %v386 = vld [vmem:[%s377] sm:$0xf]
      %v387 = vunpack.c.l.bf16 %v386
      %v388 = vld [vmem:[%s5] sm:$0x1]
      %v390 = vlaneseq
      %v391 = vshrl.u32 %v390, 7
      %v392 = vsub.s32 0, %v391
      %v393 = vrot.slane %v388, %v392
      %v395 = vadd.f32 %v387, %v393
      %v397 = vunpack.c.h.b16 %v383
      %v398 = vpack.c.b16 %v397, %v397
      %vm399 = vcmask 130048
      %v401 = vsel %vm399, %v398, 0
      %v404 = vsel %vm399, %v384, 0
      %406 = vmatprep.subr.bf16.mxu0 0
      %407 = vmatpush1.bf16.xpose.msra.mxu0 %v404
      %408 = vmatprep.subr.bf16.mxu0 0
      %409 = vmatpush1.bf16.xpose.msra.mxu0 0
      %410 = vmatprep.subr.bf16.mxu0 0
      %411 = vmatpush1.bf16.xpose.msra.mxu0 0
      %412 = vmatprep.subr.bf16.mxu0 0
      %413 = vmatpush1.bf16.xpose.msra.mxu0 0
      %414 = vmatprep.subr.bf16.mxu0 0
      %415 = vmatpush1.bf16.xpose.msra.mxu0 0
      %416 = vmatprep.subr.bf16.mxu0 0
      %417 = vmatpush1.bf16.xpose.msra.mxu0 0
      %418 = vmatprep.subr.bf16.mxu0 0
      %419 = vmatpush1.bf16.xpose.msra.mxu0 0
      %420 = vmatprep.subr.bf16.mxu0 0
      %421 = vmatpush1.bf16.xpose.msra.mxu0 0
      %422 = vmatprep.subr.bf16.mxu0 0
      %423 = vmatpush1.bf16.xpose.msra.mxu0 0
      %424 = vmatprep.subr.bf16.mxu0 0
      %425 = vmatpush1.bf16.xpose.msra.mxu0 0
      %426 = vmatprep.subr.bf16.mxu0 0
      %427 = vmatpush1.bf16.xpose.msra.mxu0 0
      %428 = vmatprep.subr.bf16.mxu0 0
      %429 = vmatpush1.bf16.xpose.msra.mxu0 0
      %430 = vmatprep.subr.bf16.mxu0 0
      %431 = vmatpush1.bf16.xpose.msra.mxu0 0
      %432 = vmatprep.subr.bf16.mxu0 0
      %433 = vmatpush1.bf16.xpose.msra.mxu0 0
      %434 = vmatprep.subr.bf16.mxu0 0
      %435 = vmatpush1.bf16.xpose.msra.mxu0 0
      %436 = vmatprep.subr.bf16.mxu0 0
      %437 = vmatpush1.bf16.xpose.msra.mxu0 0
      %438 = vmatprep.mubr.bf16.mxu0 0
      %439 = vmatmul.mubr.bf16.gmra.mrb[0].mxu0 %v401
      %v440 = vpop.f32.mrb[0].mxu0
      %v441 = vadd.f32 0.0, %v440
      %v442 = vpop.f32.mrb[0].mxu0
      %v443 = vpop.f32.mrb[0].mxu0
      %v444 = vpop.f32.mrb[0].mxu0
      %445 = vdwg.mxu0
      %v446 = vmul.f32 %v441, 0.25
      %v447 = vld [vmem:[%s2] sm:$0xff]
      %v448 = vadd.f32 %v446, %v447
      %v450 = vlaneseq
      %v451 = vshrl.u32 %v450, 7
      %v452 = vsub.s32 0, %v451
      %v453 = vrot.slane %v385, %v452
      %v455 = vadd.f32 %v448, %v453
      %vm456 = vcmask 64512
      %v457 = vsel %vm456, %v455, -inf
      %458 = vmax.xlane.f32.xlu0 %v457
      %v459 = vpop.xlane.xlu0 %458
      %v460 = vsub.f32 %v455, %v459
      %v461 = vmul.f32 %v460, 1.442695
      %v462 = vpow.pop %v461
      %v463 = vsel %vm456, %v462, 0.0
      %464 = vadd.xlane.f32.xlu0 %v463
      %v465 = vpop.xlane.xlu0 %464
      %v466 = vrcp.pop %v465
      %v467 = vmul.f32 %v462, %v466
      %v468 = vpack.c.bf16 %v467, %v467
      %v470 = vunpack.c.l.b16 %v384
      %v471 = vpack.c.b16 %v470, %v470
      %472 = vrot.lane.b32.xlu0 %v471, 64
      %v473 = vpop.permute.xlu0 %472
      %v475 = vsel %vm456, %v468, 0
      %vm477 = vcmask 1043456
      %v479 = vsel %vm477, %v473, 0
      %481 = vmatprep.subr.bf16.mxu0 0
      %482 = vmatpush1.bf16.msra.mxu0 %v479
      %483 = vmatprep.subr.bf16.mxu0 0
      %484 = vmatpush1.bf16.msra.mxu0 0
      %485 = vmatprep.subr.bf16.mxu0 0
      %486 = vmatpush1.bf16.msra.mxu0 0
      %487 = vmatprep.subr.bf16.mxu0 0
      %488 = vmatpush1.bf16.msra.mxu0 0
      %489 = vmatprep.subr.bf16.mxu0 0
      %490 = vmatpush1.bf16.msra.mxu0 0
      %491 = vmatprep.subr.bf16.mxu0 0
      %492 = vmatpush1.bf16.msra.mxu0 0
      %493 = vmatprep.subr.bf16.mxu0 0
      %494 = vmatpush1.bf16.msra.mxu0 0
      %495 = vmatprep.subr.bf16.mxu0 0
      %496 = vmatpush1.bf16.msra.mxu0 0
      %497 = vmatprep.subr.bf16.mxu0 0
      %498 = vmatpush1.bf16.msra.mxu0 0
      %499 = vmatprep.subr.bf16.mxu0 0
      %500 = vmatpush1.bf16.msra.mxu0 0
      %501 = vmatprep.subr.bf16.mxu0 0
      %502 = vmatpush1.bf16.msra.mxu0 0
      %503 = vmatprep.subr.bf16.mxu0 0
      %504 = vmatpush1.bf16.msra.mxu0 0
      %505 = vmatprep.subr.bf16.mxu0 0
      %506 = vmatpush1.bf16.msra.mxu0 0
      %507 = vmatprep.subr.bf16.mxu0 0
      %508 = vmatpush1.bf16.msra.mxu0 0
      %509 = vmatprep.subr.bf16.mxu0 0
      %510 = vmatpush1.bf16.msra.mxu0 0
      %511 = vmatprep.subr.bf16.mxu0 0
      %512 = vmatpush1.bf16.msra.mxu0 0
      %513 = vmatprep.mubr.bf16.mxu0 0
      %514 = vmatmul.mubr.bf16.gmra.mrb[0].mxu0 %v475
      %v515 = vpop.f32.mrb[0].mxu0
      %v516 = vadd.f32 0.0, %v515
      %v517 = vpop.f32.mrb[0].mxu0
      %v518 = vpop.f32.mrb[0].mxu0
      %v519 = vpop.f32.mrb[0].mxu0
      %520 = vdwg.mxu0
      %v521 = vpack.c.bf16 %v516, %v516
      %v522 = vld [vmem:[%s4] sm:$0xf]
      %v523 = vld [vmem:[%s4 + $0x4] sm:$0xf]
      %v526 = vunpack.c.l.b16 %v522
      %v527 = vunpack.c.l.b16 %v523
      %v528 = vpack.c.b16 %v527, %v526
      %v531 = vsel %vm399, %v521, 0
      %533 = vmatprep.subr.bf16.mxu0 0
      %534 = vmatpush1.bf16.msra.mxu0 %v528
      %535 = vmatprep.subr.bf16.mxu0 0
      %536 = vmatpush1.bf16.msra.mxu0 0
      %537 = vmatprep.subr.bf16.mxu0 0
      %538 = vmatpush1.bf16.msra.mxu0 0
      %539 = vmatprep.subr.bf16.mxu0 0
      %540 = vmatpush1.bf16.msra.mxu0 0
      %541 = vmatprep.subr.bf16.mxu0 0
      %542 = vmatpush1.bf16.msra.mxu0 0
      %543 = vmatprep.subr.bf16.mxu0 0
      %544 = vmatpush1.bf16.msra.mxu0 0
      %545 = vmatprep.subr.bf16.mxu0 0
      %546 = vmatpush1.bf16.msra.mxu0 0
      %547 = vmatprep.subr.bf16.mxu0 0
      %548 = vmatpush1.bf16.msra.mxu0 0
      %549 = vmatprep.subr.bf16.mxu0 0
      %550 = vmatpush1.bf16.msra.mxu0 0
      %551 = vmatprep.subr.bf16.mxu0 0
      %552 = vmatpush1.bf16.msra.mxu0 0
      %553 = vmatprep.subr.bf16.mxu0 0
      %554 = vmatpush1.bf16.msra.mxu0 0
      %555 = vmatprep.subr.bf16.mxu0 0
      %556 = vmatpush1.bf16.msra.mxu0 0
      %557 = vmatprep.subr.bf16.mxu0 0
      %558 = vmatpush1.bf16.msra.mxu0 0
      %559 = vmatprep.subr.bf16.mxu0 0
      %560 = vmatpush1.bf16.msra.mxu0 0
      %561 = vmatprep.subr.bf16.mxu0 0
      %562 = vmatpush1.bf16.msra.mxu0 0
      %563 = vmatprep.subr.bf16.mxu0 0
      %564 = vmatpush1.bf16.msra.mxu0 0
      %565 = vmatprep.mubr.bf16.mxu0 0
      %566 = vmatmul.mubr.bf16.gmra.mrb[0].mxu0 %v531
      %v567 = vpop.f32.mrb[0].mxu0
      %v568 = vadd.f32 0.0, %v567
      %v569 = vpop.f32.mrb[0].mxu0
      %v570 = vpop.f32.mrb[0].mxu0
      %v571 = vpop.f32.mrb[0].mxu0
      %572 = vdwg.mxu0
      %v573 = vadd.f32 %v395, %v568
      %574 = vrot.lane.b32.xlu0 %v398, 112
      %v575 = vpop.permute.xlu0 %574
      %576 = vrot.lane.b32.xlu0 %v471, 112
      %v577 = vpop.permute.xlu0 %576
      %v579 = vsel %vm399, %v575, 0
      %v582 = vsel %vm399, %v577, 0
      %584 = vmatprep.subr.bf16.mxu0 0
      %585 = vmatpush1.bf16.xpose.msra.mxu0 %v582
      %586 = vmatprep.subr.bf16.mxu0 0
      %587 = vmatpush1.bf16.xpose.msra.mxu0 0
      %588 = vmatprep.subr.bf16.mxu0 0
      %589 = vmatpush1.bf16.xpose.msra.mxu0 0
      %590 = vmatprep.subr.bf16.mxu0 0
      %591 = vmatpush1.bf16.xpose.msra.mxu0 0
      %592 = vmatprep.subr.bf16.mxu0 0
      %593 = vmatpush1.bf16.xpose.msra.mxu0 0
      %594 = vmatprep.subr.bf16.mxu0 0
      %595 = vmatpush1.bf16.xpose.msra.mxu0 0
      %596 = vmatprep.subr.bf16.mxu0 0
      %597 = vmatpush1.bf16.xpose.msra.mxu0 0
      %598 = vmatprep.subr.bf16.mxu0 0
      %599 = vmatpush1.bf16.xpose.msra.mxu0 0
      %600 = vmatprep.subr.bf16.mxu0 0
      %601 = vmatpush1.bf16.xpose.msra.mxu0 0
      %602 = vmatprep.subr.bf16.mxu0 0
      %603 = vmatpush1.bf16.xpose.msra.mxu0 0
      %604 = vmatprep.subr.bf16.mxu0 0
      %605 = vmatpush1.bf16.xpose.msra.mxu0 0
      %606 = vmatprep.subr.bf16.mxu0 0
      %607 = vmatpush1.bf16.xpose.msra.mxu0 0
      %608 = vmatprep.subr.bf16.mxu0 0
      %609 = vmatpush1.bf16.xpose.msra.mxu0 0
      %610 = vmatprep.subr.bf16.mxu0 0
      %611 = vmatpush1.bf16.xpose.msra.mxu0 0
      %612 = vmatprep.subr.bf16.mxu0 0
      %613 = vmatpush1.bf16.xpose.msra.mxu0 0
      %614 = vmatprep.subr.bf16.mxu0 0
      %615 = vmatpush1.bf16.xpose.msra.mxu0 0
      %616 = vmatprep.mubr.bf16.mxu0 0
      %617 = vmatmul.mubr.bf16.gmra.mrb[0].mxu0 %v579
      %v618 = vpop.f32.mrb[0].mxu0
      %v619 = vadd.f32 0.0, %v618
      %v620 = vpop.f32.mrb[0].mxu0
      %v621 = vpop.f32.mrb[0].mxu0
      %v622 = vpop.f32.mrb[0].mxu0
      %623 = vdwg.mxu0
      %v624 = vmul.f32 %v619, 0.25
      %s625 = scalar_lea.vmem %s2, 8
      %v626 = vld [vmem:[%s625] sm:$0xff]
      %v627 = vadd.f32 %v624, %v626
      %v628 = vadd.f32 %v627, %v453
      %v629 = vsel %vm456, %v628, -inf
      %630 = vmax.xlane.f32.xlu0 %v629
      %v631 = vpop.xlane.xlu0 %630
      %v632 = vsub.f32 %v628, %v631
      %v633 = vmul.f32 %v632, 1.442695
      %v634 = vpow.pop %v633
      %v635 = vsel %vm456, %v634, 0.0
      %636 = vadd.xlane.f32.xlu0 %v635
      %v637 = vpop.xlane.xlu0 %636
      %v638 = vrcp.pop %v637
      %v639 = vmul.f32 %v634, %v638
      %v640 = vpack.c.bf16 %v639, %v639
      %641 = vrot.lane.b32.xlu0 %v471, 48
      %v642 = vpop.permute.xlu0 %641
      %v644 = vsel %vm456, %v640, 0
      %v647 = vsel %vm477, %v642, 0
      %649 = vmatprep.subr.bf16.mxu0 0
      %650 = vmatpush1.bf16.msra.mxu0 %v647
      %651 = vmatprep.subr.bf16.mxu0 0
      %652 = vmatpush1.bf16.msra.mxu0 0
      %653 = vmatprep.subr.bf16.mxu0 0
      %654 = vmatpush1.bf16.msra.mxu0 0
      %655 = vmatprep.subr.bf16.mxu0 0
      %656 = vmatpush1.bf16.msra.mxu0 0
      %657 = vmatprep.subr.bf16.mxu0 0
      %658 = vmatpush1.bf16.msra.mxu0 0
      %659 = vmatprep.subr.bf16.mxu0 0
      %660 = vmatpush1.bf16.msra.mxu0 0
      %661 = vmatprep.subr.bf16.mxu0 0
      %662 = vmatpush1.bf16.msra.mxu0 0
      %663 = vmatprep.subr.bf16.mxu0 0
      %664 = vmatpush1.bf16.msra.mxu0 0
      %665 = vmatprep.subr.bf16.mxu0 0
      %666 = vmatpush1.bf16.msra.mxu0 0
      %667 = vmatprep.subr.bf16.mxu0 0
      %668 = vmatpush1.bf16.msra.mxu0 0
      %669 = vmatprep.subr.bf16.mxu0 0
      %670 = vmatpush1.bf16.msra.mxu0 0
      %671 = vmatprep.subr.bf16.mxu0 0
      %672 = vmatpush1.bf16.msra.mxu0 0
      %673 = vmatprep.subr.bf16.mxu0 0
      %674 = vmatpush1.bf16.msra.mxu0 0
      %675 = vmatprep.subr.bf16.mxu0 0
      %676 = vmatpush1.bf16.msra.mxu0 0
      %677 = vmatprep.subr.bf16.mxu0 0
      %678 = vmatpush1.bf16.msra.mxu0 0
      %679 = vmatprep.subr.bf16.mxu0 0
      %680 = vmatpush1.bf16.msra.mxu0 0
      %681 = vmatprep.mubr.bf16.mxu0 0
      %682 = vmatmul.mubr.bf16.gmra.mrb[0].mxu0 %v644
      %v683 = vpop.f32.mrb[0].mxu0
      %v684 = vadd.f32 0.0, %v683
      %v685 = vpop.f32.mrb[0].mxu0
      %v686 = vpop.f32.mrb[0].mxu0
      %v687 = vpop.f32.mrb[0].mxu0
      %688 = vdwg.mxu0
      %v689 = vpack.c.bf16 %v684, %v684
      %v690 = vld [vmem:[%s4 + $0x8] sm:$0xf]
      %v691 = vld [vmem:[%s4 + $0xc] sm:$0xf]
      %v694 = vunpack.c.l.b16 %v690
      %v695 = vunpack.c.l.b16 %v691
      %v696 = vpack.c.b16 %v695, %v694
      %v699 = vsel %vm399, %v689, 0
      %701 = vmatprep.subr.bf16.mxu0 0
      %702 = vmatpush1.bf16.msra.mxu0 %v696
      %703 = vmatprep.subr.bf16.mxu0 0
      %704 = vmatpush1.bf16.msra.mxu0 0
      %705 = vmatprep.subr.bf16.mxu0 0
      %706 = vmatpush1.bf16.msra.mxu0 0
      %707 = vmatprep.subr.bf16.mxu0 0
      %708 = vmatpush1.bf16.msra.mxu0 0
      %709 = vmatprep.subr.bf16.mxu0 0
      %710 = vmatpush1.bf16.msra.mxu0 0
      %711 = vmatprep.subr.bf16.mxu0 0
      %712 = vmatpush1.bf16.msra.mxu0 0
      %713 = vmatprep.subr.bf16.mxu0 0
      %714 = vmatpush1.bf16.msra.mxu0 0
      %715 = vmatprep.subr.bf16.mxu0 0
      %716 = vmatpush1.bf16.msra.mxu0 0
      %717 = vmatprep.subr.bf16.mxu0 0
      %718 = vmatpush1.bf16.msra.mxu0 0
      %719 = vmatprep.subr.bf16.mxu0 0
      %720 = vmatpush1.bf16.msra.mxu0 0
      %721 = vmatprep.subr.bf16.mxu0 0
      %722 = vmatpush1.bf16.msra.mxu0 0
      %723 = vmatprep.subr.bf16.mxu0 0
      %724 = vmatpush1.bf16.msra.mxu0 0
      %725 = vmatprep.subr.bf16.mxu0 0
      %726 = vmatpush1.bf16.msra.mxu0 0
      %727 = vmatprep.subr.bf16.mxu0 0
      %728 = vmatpush1.bf16.msra.mxu0 0
      %729 = vmatprep.subr.bf16.mxu0 0
      %730 = vmatpush1.bf16.msra.mxu0 0
      %731 = vmatprep.subr.bf16.mxu0 0
      %732 = vmatpush1.bf16.msra.mxu0 0
      %733 = vmatprep.mubr.bf16.mxu0 0
      %734 = vmatmul.mubr.bf16.gmra.mrb[0].mxu0 %v699
      %v735 = vpop.f32.mrb[0].mxu0
      %v736 = vadd.f32 0.0, %v735
      %v737 = vpop.f32.mrb[0].mxu0
      %v738 = vpop.f32.mrb[0].mxu0
      %v739 = vpop.f32.mrb[0].mxu0
      %740 = vdwg.mxu0
      %v741 = vadd.f32 %v573, %v736
      %742 = vrot.lane.b32.xlu0 %v398, 96
      %v743 = vpop.permute.xlu0 %742
      %744 = vrot.lane.b32.xlu0 %v471, 96
      %v745 = vpop.permute.xlu0 %744
      %v747 = vsel %vm399, %v743, 0
      %v750 = vsel %vm399, %v745, 0
      %752 = vmatprep.subr.bf16.mxu0 0
      %753 = vmatpush1.bf16.xpose.msra.mxu0 %v750
      %754 = vmatprep.subr.bf16.mxu0 0
      %755 = vmatpush1.bf16.xpose.msra.mxu0 0
      %756 = vmatprep.subr.bf16.mxu0 0
      %757 = vmatpush1.bf16.xpose.msra.mxu0 0
      %758 = vmatprep.subr.bf16.mxu0 0
      %759 = vmatpush1.bf16.xpose.msra.mxu0 0
      %760 = vmatprep.subr.bf16.mxu0 0
      %761 = vmatpush1.bf16.xpose.msra.mxu0 0
      %762 = vmatprep.subr.bf16.mxu0 0
      %763 = vmatpush1.bf16.xpose.msra.mxu0 0
      %764 = vmatprep.subr.bf16.mxu0 0
      %765 = vmatpush1.bf16.xpose.msra.mxu0 0
      %766 = vmatprep.subr.bf16.mxu0 0
      %767 = vmatpush1.bf16.xpose.msra.mxu0 0
      %768 = vmatprep.subr.bf16.mxu0 0
      %769 = vmatpush1.bf16.xpose.msra.mxu0 0
      %770 = vmatprep.subr.bf16.mxu0 0
      %771 = vmatpush1.bf16.xpose.msra.mxu0 0
      %772 = vmatprep.subr.bf16.mxu0 0
      %773 = vmatpush1.bf16.xpose.msra.mxu0 0
      %774 = vmatprep.subr.bf16.mxu0 0
      %775 = vmatpush1.bf16.xpose.msra.mxu0 0
      %776 = vmatprep.subr.bf16.mxu0 0
      %777 = vmatpush1.bf16.xpose.msra.mxu0 0
      %778 = vmatprep.subr.bf16.mxu0 0
      %779 = vmatpush1.bf16.xpose.msra.mxu0 0
      %780 = vmatprep.subr.bf16.mxu0 0
      %781 = vmatpush1.bf16.xpose.msra.mxu0 0
      %782 = vmatprep.subr.bf16.mxu0 0
      %783 = vmatpush1.bf16.xpose.msra.mxu0 0
      %784 = vmatprep.mubr.bf16.mxu0 0
      %785 = vmatmul.mubr.bf16.gmra.mrb[0].mxu0 %v747
      %v786 = vpop.f32.mrb[0].mxu0
      %v787 = vadd.f32 0.0, %v786
      %v788 = vpop.f32.mrb[0].mxu0
      %v789 = vpop.f32.mrb[0].mxu0
      %v790 = vpop.f32.mrb[0].mxu0
      %791 = vdwg.mxu0
      %v792 = vmul.f32 %v787, 0.25
      %s793 = scalar_lea.vmem %s2, 16
      %v794 = vld [vmem:[%s793] sm:$0xff]
      %v795 = vadd.f32 %v792, %v794
      %v796 = vadd.f32 %v795, %v453
      %v797 = vsel %vm456, %v796, -inf
      %798 = vmax.xlane.f32.xlu0 %v797
      %v799 = vpop.xlane.xlu0 %798
      %v800 = vsub.f32 %v796, %v799
      %v801 = vmul.f32 %v800, 1.442695
      %v802 = vpow.pop %v801
      %v803 = vsel %vm456, %v802, 0.0
      %804 = vadd.xlane.f32.xlu0 %v803
      %v805 = vpop.xlane.xlu0 %804
      %v806 = vrcp.pop %v805
      %v807 = vmul.f32 %v802, %v806
      %v808 = vpack.c.bf16 %v807, %v807
      %809 = vrot.lane.b32.xlu0 %v471, 32
      %v810 = vpop.permute.xlu0 %809
      %v812 = vsel %vm456, %v808, 0
      %v815 = vsel %vm477, %v810, 0
      %817 = vmatprep.subr.bf16.mxu0 0
      %818 = vmatpush1.bf16.msra.mxu0 %v815
      %819 = vmatprep.subr.bf16.mxu0 0
      %820 = vmatpush1.bf16.msra.mxu0 0
      %821 = vmatprep.subr.bf16.mxu0 0
      %822 = vmatpush1.bf16.msra.mxu0 0
      %823 = vmatprep.subr.bf16.mxu0 0
      %824 = vmatpush1.bf16.msra.mxu0 0
      %825 = vmatprep.subr.bf16.mxu0 0
      %826 = vmatpush1.bf16.msra.mxu0 0
      %827 = vmatprep.subr.bf16.mxu0 0
      %828 = vmatpush1.bf16.msra.mxu0 0
      %829 = vmatprep.subr.bf16.mxu0 0
      %830 = vmatpush1.bf16.msra.mxu0 0
      %831 = vmatprep.subr.bf16.mxu0 0
      %832 = vmatpush1.bf16.msra.mxu0 0
      %833 = vmatprep.subr.bf16.mxu0 0
      %834 = vmatpush1.bf16.msra.mxu0 0
      %835 = vmatprep.subr.bf16.mxu0 0
      %836 = vmatpush1.bf16.msra.mxu0 0
      %837 = vmatprep.subr.bf16.mxu0 0
      %838 = vmatpush1.bf16.msra.mxu0 0
      %839 = vmatprep.subr.bf16.mxu0 0
      %840 = vmatpush1.bf16.msra.mxu0 0
      %841 = vmatprep.subr.bf16.mxu0 0
      %842 = vmatpush1.bf16.msra.mxu0 0
      %843 = vmatprep.subr.bf16.mxu0 0
      %844 = vmatpush1.bf16.msra.mxu0 0
      %845 = vmatprep.subr.bf16.mxu0 0
      %846 = vmatpush1.bf16.msra.mxu0 0
      %847 = vmatprep.subr.bf16.mxu0 0
      %848 = vmatpush1.bf16.msra.mxu0 0
      %849 = vmatprep.mubr.bf16.mxu0 0
      %850 = vmatmul.mubr.bf16.gmra.mrb[0].mxu0 %v812
      %v851 = vpop.f32.mrb[0].mxu0
      %v852 = vadd.f32 0.0, %v851
      %v853 = vpop.f32.mrb[0].mxu0
      %v854 = vpop.f32.mrb[0].mxu0
      %v855 = vpop.f32.mrb[0].mxu0
      %856 = vdwg.mxu0
      %v857 = vpack.c.bf16 %v852, %v852
      %v858 = vld [vmem:[%s4 + $0x10] sm:$0xf]
      %v859 = vld [vmem:[%s4 + $0x14] sm:$0xf]
      %v862 = vunpack.c.l.b16 %v858
      %v863 = vunpack.c.l.b16 %v859
      %v864 = vpack.c.b16 %v863, %v862
      %v867 = vsel %vm399, %v857, 0
      %869 = vmatprep.subr.bf16.mxu0 0
      %870 = vmatpush1.bf16.msra.mxu0 %v864
      %871 = vmatprep.subr.bf16.mxu0 0
      %872 = vmatpush1.bf16.msra.mxu0 0
      %873 = vmatprep.subr.bf16.mxu0 0
      %874 = vmatpush1.bf16.msra.mxu0 0
      %875 = vmatprep.subr.bf16.mxu0 0
      %876 = vmatpush1.bf16.msra.mxu0 0
      %877 = vmatprep.subr.bf16.mxu0 0
      %878 = vmatpush1.bf16.msra.mxu0 0
      %879 = vmatprep.subr.bf16.mxu0 0
      %880 = vmatpush1.bf16.msra.mxu0 0
      %881 = vmatprep.subr.bf16.mxu0 0
      %882 = vmatpush1.bf16.msra.mxu0 0
      %883 = vmatprep.subr.bf16.mxu0 0
      %884 = vmatpush1.bf16.msra.mxu0 0
      %885 = vmatprep.subr.bf16.mxu0 0
      %886 = vmatpush1.bf16.msra.mxu0 0
      %887 = vmatprep.subr.bf16.mxu0 0
      %888 = vmatpush1.bf16.msra.mxu0 0
      %889 = vmatprep.subr.bf16.mxu0 0
      %890 = vmatpush1.bf16.msra.mxu0 0
      %891 = vmatprep.subr.bf16.mxu0 0
      %892 = vmatpush1.bf16.msra.mxu0 0
      %893 = vmatprep.subr.bf16.mxu0 0
      %894 = vmatpush1.bf16.msra.mxu0 0
      %895 = vmatprep.subr.bf16.mxu0 0
      %896 = vmatpush1.bf16.msra.mxu0 0
      %897 = vmatprep.subr.bf16.mxu0 0
      %898 = vmatpush1.bf16.msra.mxu0 0
      %899 = vmatprep.subr.bf16.mxu0 0
      %900 = vmatpush1.bf16.msra.mxu0 0
      %901 = vmatprep.mubr.bf16.mxu0 0
      %902 = vmatmul.mubr.bf16.gmra.mrb[0].mxu0 %v867
      %v903 = vpop.f32.mrb[0].mxu0
      %v904 = vadd.f32 0.0, %v903
      %v905 = vpop.f32.mrb[0].mxu0
      %v906 = vpop.f32.mrb[0].mxu0
      %v907 = vpop.f32.mrb[0].mxu0
      %908 = vdwg.mxu0
      %v909 = vadd.f32 %v741, %v904
      %910 = vrot.lane.b32.xlu0 %v398, 80
      %v911 = vpop.permute.xlu0 %910
      %912 = vrot.lane.b32.xlu0 %v471, 80
      %v913 = vpop.permute.xlu0 %912
      %v915 = vsel %vm399, %v911, 0
      %v918 = vsel %vm399, %v913, 0
      %920 = vmatprep.subr.bf16.mxu0 0
      %921 = vmatpush1.bf16.xpose.msra.mxu0 %v918
      %922 = vmatprep.subr.bf16.mxu0 0
      %923 = vmatpush1.bf16.xpose.msra.mxu0 0
      %924 = vmatprep.subr.bf16.mxu0 0
      %925 = vmatpush1.bf16.xpose.msra.mxu0 0
      %926 = vmatprep.subr.bf16.mxu0 0
      %927 = vmatpush1.bf16.xpose.msra.mxu0 0
      %928 = vmatprep.subr.bf16.mxu0 0
      %929 = vmatpush1.bf16.xpose.msra.mxu0 0
      %930 = vmatprep.subr.bf16.mxu0 0
      %931 = vmatpush1.bf16.xpose.msra.mxu0 0
      %932 = vmatprep.subr.bf16.mxu0 0
      %933 = vmatpush1.bf16.xpose.msra.mxu0 0
      %934 = vmatprep.subr.bf16.mxu0 0
      %935 = vmatpush1.bf16.xpose.msra.mxu0 0
      %936 = vmatprep.subr.bf16.mxu0 0
      %937 = vmatpush1.bf16.xpose.msra.mxu0 0
      %938 = vmatprep.subr.bf16.mxu0 0
      %939 = vmatpush1.bf16.xpose.msra.mxu0 0
      %940 = vmatprep.subr.bf16.mxu0 0
      %941 = vmatpush1.bf16.xpose.msra.mxu0 0
      %942 = vmatprep.subr.bf16.mxu0 0
      %943 = vmatpush1.bf16.xpose.msra.mxu0 0
      %944 = vmatprep.subr.bf16.mxu0 0
      %945 = vmatpush1.bf16.xpose.msra.mxu0 0
      %946 = vmatprep.subr.bf16.mxu0 0
      %947 = vmatpush1.bf16.xpose.msra.mxu0 0
      %948 = vmatprep.subr.bf16.mxu0 0
      %949 = vmatpush1.bf16.xpose.msra.mxu0 0
      %950 = vmatprep.subr.bf16.mxu0 0
      %951 = vmatpush1.bf16.xpose.msra.mxu0 0
      %952 = vmatprep.mubr.bf16.mxu0 0
      %953 = vmatmul.mubr.bf16.gmra.mrb[0].mxu0 %v915
      %v954 = vpop.f32.mrb[0].mxu0
      %v955 = vadd.f32 0.0, %v954
      %v956 = vpop.f32.mrb[0].mxu0
      %v957 = vpop.f32.mrb[0].mxu0
      %v958 = vpop.f32.mrb[0].mxu0
      %959 = vdwg.mxu0
      %v960 = vmul.f32 %v955, 0.25
      %s961 = scalar_lea.vmem %s2, 24
      %v962 = vld [vmem:[%s961] sm:$0xff]
      %v963 = vadd.f32 %v960, %v962
      %v964 = vadd.f32 %v963, %v453
      %v965 = vsel %vm456, %v964, -inf
      %966 = vmax.xlane.f32.xlu0 %v965
      %v967 = vpop.xlane.xlu0 %966
      %v968 = vsub.f32 %v964, %v967
      %v969 = vmul.f32 %v968, 1.442695
      %v970 = vpow.pop %v969
      %v971 = vsel %vm456, %v970, 0.0
      %972 = vadd.xlane.f32.xlu0 %v971
      %v973 = vpop.xlane.xlu0 %972
      %v974 = vrcp.pop %v973
      %v975 = vmul.f32 %v970, %v974
      %v976 = vpack.c.bf16 %v975, %v975
      %977 = vrot.lane.b32.xlu0 %v471, 16
      %v978 = vpop.permute.xlu0 %977
      %v980 = vsel %vm456, %v976, 0
      %v983 = vsel %vm477, %v978, 0
      %985 = vmatprep.subr.bf16.mxu0 0
      %986 = vmatpush1.bf16.msra.mxu0 %v983
      %987 = vmatprep.subr.bf16.mxu0 0
      %988 = vmatpush1.bf16.msra.mxu0 0
      %989 = vmatprep.subr.bf16.mxu0 0
      %990 = vmatpush1.bf16.msra.mxu0 0
      %991 = vmatprep.subr.bf16.mxu0 0
      %992 = vmatpush1.bf16.msra.mxu0 0
      %993 = vmatprep.subr.bf16.mxu0 0
      %994 = vmatpush1.bf16.msra.mxu0 0
      %995 = vmatprep.subr.bf16.mxu0 0
      %996 = vmatpush1.bf16.msra.mxu0 0
      %997 = vmatprep.subr.bf16.mxu0 0
      %998 = vmatpush1.bf16.msra.mxu0 0
      %999 = vmatprep.subr.bf16.mxu0 0
      %1000 = vmatpush1.bf16.msra.mxu0 0
      %1001 = vmatprep.subr.bf16.mxu0 0
      %1002 = vmatpush1.bf16.msra.mxu0 0
      %1003 = vmatprep.subr.bf16.mxu0 0
      %1004 = vmatpush1.bf16.msra.mxu0 0
      %1005 = vmatprep.subr.bf16.mxu0 0
      %1006 = vmatpush1.bf16.msra.mxu0 0
      %1007 = vmatprep.subr.bf16.mxu0 0
      %1008 = vmatpush1.bf16.msra.mxu0 0
      %1009 = vmatprep.subr.bf16.mxu0 0
      %1010 = vmatpush1.bf16.msra.mxu0 0
      %1011 = vmatprep.subr.bf16.mxu0 0
      %1012 = vmatpush1.bf16.msra.mxu0 0
      %1013 = vmatprep.subr.bf16.mxu0 0
      %1014 = vmatpush1.bf16.msra.mxu0 0
      %1015 = vmatprep.subr.bf16.mxu0 0
      %1016 = vmatpush1.bf16.msra.mxu0 0
      %1017 = vmatprep.mubr.bf16.mxu0 0
      %1018 = vmatmul.mubr.bf16.gmra.mrb[0].mxu0 %v980
      %v1019 = vpop.f32.mrb[0].mxu0
      %v1020 = vadd.f32 0.0, %v1019
      %v1021 = vpop.f32.mrb[0].mxu0
      %v1022 = vpop.f32.mrb[0].mxu0
      %v1023 = vpop.f32.mrb[0].mxu0
      %1024 = vdwg.mxu0
      %v1025 = vpack.c.bf16 %v1020, %v1020
      %v1026 = vld [vmem:[%s4 + $0x18] sm:$0xf]
      %v1027 = vld [vmem:[%s4 + $0x1c] sm:$0xf]
      %v1030 = vunpack.c.l.b16 %v1026
      %v1031 = vunpack.c.l.b16 %v1027
      %v1032 = vpack.c.b16 %v1031, %v1030
      %v1035 = vsel %vm399, %v1025, 0
      %1037 = vmatprep.subr.bf16.mxu0 0
      %1038 = vmatpush1.bf16.msra.mxu0 %v1032
      %1039 = vmatprep.subr.bf16.mxu0 0
      %1040 = vmatpush1.bf16.msra.mxu0 0
      %1041 = vmatprep.subr.bf16.mxu0 0
      %1042 = vmatpush1.bf16.msra.mxu0 0
      %1043 = vmatprep.subr.bf16.mxu0 0
      %1044 = vmatpush1.bf16.msra.mxu0 0
      %1045 = vmatprep.subr.bf16.mxu0 0
      %1046 = vmatpush1.bf16.msra.mxu0 0
      %1047 = vmatprep.subr.bf16.mxu0 0
      %1048 = vmatpush1.bf16.msra.mxu0 0
      %1049 = vmatprep.subr.bf16.mxu0 0
      %1050 = vmatpush1.bf16.msra.mxu0 0
      %1051 = vmatprep.subr.bf16.mxu0 0
      %1052 = vmatpush1.bf16.msra.mxu0 0
      %1053 = vmatprep.subr.bf16.mxu0 0
      %1054 = vmatpush1.bf16.msra.mxu0 0
      %1055 = vmatprep.subr.bf16.mxu0 0
      %1056 = vmatpush1.bf16.msra.mxu0 0
      %1057 = vmatprep.subr.bf16.mxu0 0
      %1058 = vmatpush1.bf16.msra.mxu0 0
      %1059 = vmatprep.subr.bf16.mxu0 0
      %1060 = vmatpush1.bf16.msra.mxu0 0
      %1061 = vmatprep.subr.bf16.mxu0 0
      %1062 = vmatpush1.bf16.msra.mxu0 0
      %1063 = vmatprep.subr.bf16.mxu0 0
      %1064 = vmatpush1.bf16.msra.mxu0 0
      %1065 = vmatprep.subr.bf16.mxu0 0
      %1066 = vmatpush1.bf16.msra.mxu0 0
      %1067 = vmatprep.subr.bf16.mxu0 0
      %1068 = vmatpush1.bf16.msra.mxu0 0
      %1069 = vmatprep.mubr.bf16.mxu0 0
      %1070 = vmatmul.mubr.bf16.gmra.mrb[0].mxu0 %v1035
      %v1071 = vpop.f32.mrb[0].mxu0
      %v1072 = vadd.f32 0.0, %v1071
      %v1073 = vpop.f32.mrb[0].mxu0
      %v1074 = vpop.f32.mrb[0].mxu0
      %v1075 = vpop.f32.mrb[0].mxu0
      %1076 = vdwg.mxu0
      %v1077 = vadd.f32 %v909, %v1072
      %vm1078 = vcmask 523264
      %v1079 = vsel %vm1078, %v1077, 0.0
      %1080 = vadd.xlane.f32.xlu0 %v1079
      %v1081 = vpop.xlane.xlu0 %1080
      %v1082 = vrcp.pop 64.0
      %v1083 = vmul.f32 %v1081, %v1082
      %v1084 = vsub.f32 %v1077, %v1083
      %v1085 = vmul.f32 %v1084, %v1084
      %v1086 = vsel %vm1078, %v1085, 0.0
      %1087 = vadd.xlane.f32.xlu0 %v1086
      %v1088 = vpop.xlane.xlu0 %1087
      %v1089 = vmul.f32 %v1088, %v1082
      %v1090 = vadd.f32 %v1089, 1e-06
      %v1091 = vrsqrt.pop %v1090
      %v1092 = vmul.f32 %v1084, %v1091
      %v1093 = vld [vmem:[%s7] sm:$0x1]
      %v1095 = vlaneseq
      %v1096 = vshrl.u32 %v1095, 7
      %v1097 = vsub.s32 0, %v1096
      %v1098 = vrot.slane %v1093, %v1097
      %v1100 = vmul.f32 %v1092, %v1098
      %v1101 = vld [vmem:[%s8] sm:$0x1]
      %v1103 = vlaneseq
      %v1104 = vshrl.u32 %v1103, 7
      %v1105 = vsub.s32 0, %v1104
      %v1106 = vrot.slane %v1101, %v1105
      %v1108 = vadd.f32 %v1100, %v1106
      %v1109 = vpack.c.bf16 %v1108, %v1108
      %vm1110 = vcmask 519168
      %1111 = vst.msk [vmem:[%s381] sm:$0xf] %vm1110, %v1109
      %p1112 = scmp.lt.s32.totalorder %s20, 1
      %s1113 = scalar_select %p1112, %s20, 1
      %s1114 = smul.addr %s1113, 4
      %s1115 = scalar_lea.vmem %s9, %s1114
      // Predicated region
      $region57: #{forward.21} parent=55 // pred_check
        %p1116 = pneg %p247
      $region58: #{forward.21} parent=55 // pred_check_branch
        %1118 = sbr.rel (%p1116) target = $region60
      $region59: #{forward.21} parent=55 // pred_region
        _
      $region60: #{forward.21} parent=55 // pred_fallthru
        _
    $region56: #{forward.21} parent=5 // pred_fallthru
      _
    %p1119 = scmp.le.s32.totalorder 2, %s15
    // Predicated region
    $region61: #{forward.21} parent=5 // pred_check
      %p1120 = pneg %p1119
    $region62: #{forward.21} parent=5 // pred_check_branch
      %1122 = sbr.rel (%p1120) target = $region64
    $region63: #{forward.21} parent=5 // pred_region
      %s1123 = ssub.s32 %s15, 2
      // Predicated region
      $region65: #{forward.21} parent=63 // pred_check
        %p1124 = pneg %p253
      $region66: #{forward.21} parent=63 // pred_check_branch
        %1126 = sbr.rel (%p1124) target = $region68
      $region67: #{forward.21} parent=63 // pred_region
        %p1127 = scmp.lt.s32.totalorder %s21, 1
        %s1128 = scalar_select %p1127, %s21, 1
        %s1129 = smul.addr %s1128, 4
        %s1130 = scalar_lea.vmem %s9, %s1129
      $region68: #{forward.21} parent=63 // pred_fallthru
        _
    $region64: #{forward.21} parent=5 // pred_fallthru
      _
  $region6: #{forward.21} parent=0 // loop_footer
    %s19 = sadd.s32 1, %s15
  $region7: #{forward.21} parent=0 // loop_footer_branch
    %14 = sbr.rel target = $region3
  $region8: #{forward.21} parent=0 // loop_exit
    _

// kernel: forward.28
$region0: #{forward.28}
  #allocation0 [shape = 'u32[]', space=smem, size = 0x4, offset = 0x4, fixed_abs, tag = 'smem constant byte address 0x4 - core index']
  #allocation1 [shape = 'u32[144,128]{1,0:T(1,128)}', space=vmem, size = 0x12000, scoped, tag = 'internal scratch']
  #allocation2 [shape = 'f32[16,64]{1,0:T(8,128)}', space=vmem, size = 0x2000, scoped, tag = 'scratch operand']
  %s0 = inlined_call_operand.vmem [shape: bf16[16,64], index: 0, kind: input, shape index: {}]
  %s1 = inlined_call_operand.vmem [shape: bf16[64,64], index: 1, kind: input, shape index: {}]
  %s2 = inlined_call_operand.vmem [shape: f32[1,64], index: 2, kind: input, shape index: {}]
  %s3 = inlined_call_operand.vmem [shape: bf16[16,64], index: 3, kind: output, shape index: {}]
  %s4 = sld [smem:[#allocation0]]
  $region30: #{forward.28} parent=0
    _
  %s6 = ssub.s32 1, %s4
  %s7 = scalar_select 0, %s6, %s4
  // Predicated region
  $region2: #{forward.28} parent=0 // pred_check
    _
  $region3: #{forward.28} parent=0 // pred_check_branch
    %9 = sbr.rel (0) target = $region5
  $region4: #{forward.28} parent=0 // pred_region
    _
  $region5: #{forward.28} parent=0 // pred_fallthru
    _
  // Predicated region
  $region6: #{forward.28} parent=0 // pred_check
    _
  $region7: #{forward.28} parent=0 // pred_check_branch
    %11 = sbr.rel (0) target = $region9
  $region8: #{forward.28} parent=0 // pred_region
    _
  $region9: #{forward.28} parent=0 // pred_fallthru
    _
  // Predicated region
  $region10: #{forward.28} parent=0 // pred_check
    _
  $region11: #{forward.28} parent=0 // pred_check_branch
    %13 = sbr.rel (0) target = $region13
  $region12: #{forward.28} parent=0 // pred_region
    _
  $region13: #{forward.28} parent=0 // pred_fallthru
    _
  %p15 = scmp.eq.s32.totalorder 0, 0
  // Predicated region
  $region14: #{forward.28} parent=0 // pred_check
    %p16 = pneg %p15
  $region15: #{forward.28} parent=0 // pred_check_branch
    %18 = sbr.rel (%p16) target = $region17
  $region16: #{forward.28} parent=0 // pred_region
    %vm19 = vcmask 523264
    %20 = vst.msk [vmem:[#allocation2] sm:$0xff] %vm19, 0.0
    %21 = vst.msk [vmem:[#allocation2 + $0x8] sm:$0xff] %vm19, 0.0
  $region17: #{forward.28} parent=0 // pred_fallthru
    _
  %v22 = vld [vmem:[#allocation2] sm:$0xff]
  %v23 = vld [vmem:[#allocation2 + $0x8] sm:$0xff]
  %v24 = vld [vmem:[%s0] sm:$0xf]
  %v25 = vld [vmem:[%s0 + $0x4] sm:$0xf]
  %v26 = vld [vmem:[%s1] sm:$0xf]
  %v27 = vld [vmem:[%s1 + $0x4] sm:$0xf]
  %v28 = vld [vmem:[%s1 + $0x8] sm:$0xf]
  %v29 = vld [vmem:[%s1 + $0xc] sm:$0xf]
  %v30 = vld [vmem:[%s1 + $0x10] sm:$0xf]
  %v31 = vld [vmem:[%s1 + $0x14] sm:$0xf]
  %v32 = vld [vmem:[%s1 + $0x18] sm:$0xf]
  %v33 = vld [vmem:[%s1 + $0x1c] sm:$0xf]
  %v36 = vunpack.c.l.b16 %v24
  %v37 = vunpack.c.l.b16 %v25
  %v38 = vpack.c.b16 %v37, %v36
  %v47 = vunpack.c.l.b16 %v26
  %v48 = vunpack.c.l.b16 %v27
  %v49 = vunpack.c.l.b16 %v28
  %v50 = vunpack.c.l.b16 %v29
  %v51 = vunpack.c.l.b16 %v30
  %v52 = vunpack.c.l.b16 %v31
  %v53 = vunpack.c.l.b16 %v32
  %v54 = vunpack.c.l.b16 %v33
  %v55 = vpack.c.b16 %v48, %v47
  %v56 = vpack.c.b16 %v50, %v49
  %v57 = vpack.c.b16 %v52, %v51
  %v58 = vpack.c.b16 %v54, %v53
  %vm63 = vcmask 523264
  %v65 = vsel %vm63, %v38, 0
  %67 = vmatprep.subr.bf16.mxu0 0
  %68 = vmatpush1.bf16.msra.mxu0 %v55
  %69 = vmatprep.subr.bf16.mxu0 0
  %70 = vmatpush1.bf16.msra.mxu0 %v56
  %71 = vmatprep.subr.bf16.mxu0 0
  %72 = vmatpush1.bf16.msra.mxu0 %v57
  %73 = vmatprep.subr.bf16.mxu0 0
  %74 = vmatpush1.bf16.msra.mxu0 %v58
  %75 = vmatprep.subr.bf16.mxu0 0
  %76 = vmatpush1.bf16.msra.mxu0 0
  %77 = vmatprep.subr.bf16.mxu0 0
  %78 = vmatpush1.bf16.msra.mxu0 0
  %79 = vmatprep.subr.bf16.mxu0 0
  %80 = vmatpush1.bf16.msra.mxu0 0
  %81 = vmatprep.subr.bf16.mxu0 0
  %82 = vmatpush1.bf16.msra.mxu0 0
  %83 = vmatprep.subr.bf16.mxu0 0
  %84 = vmatpush1.bf16.msra.mxu0 0
  %85 = vmatprep.subr.bf16.mxu0 0
  %86 = vmatpush1.bf16.msra.mxu0 0
  %87 = vmatprep.subr.bf16.mxu0 0
  %88 = vmatpush1.bf16.msra.mxu0 0
  %89 = vmatprep.subr.bf16.mxu0 0
  %90 = vmatpush1.bf16.msra.mxu0 0
  %91 = vmatprep.subr.bf16.mxu0 0
  %92 = vmatpush1.bf16.msra.mxu0 0
  %93 = vmatprep.subr.bf16.mxu0 0
  %94 = vmatpush1.bf16.msra.mxu0 0
  %95 = vmatprep.subr.bf16.mxu0 0
  %96 = vmatpush1.bf16.msra.mxu0 0
  %97 = vmatprep.subr.bf16.mxu0 0
  %98 = vmatpush1.bf16.msra.mxu0 0
  %99 = vmatprep.mubr.bf16.mxu0 0
  %100 = vmatmul.mubr.bf16.gmra.mrb[0].mxu0 %v65
  %v101 = vpop.f32.mrb[0].mxu0
  %v102 = vadd.f32 0.0, %v101
  %v103 = vpop.f32.mrb[0].mxu0
  %v104 = vpop.f32.mrb[0].mxu0
  %v105 = vadd.f32 0.0, %v104
  %v106 = vpop.f32.mrb[0].mxu0
  %107 = vdwg.mxu0
  %v108 = vadd.f32 %v22, %v102
  %v109 = vadd.f32 %v23, %v105
  %110 = vst.msk [vmem:[#allocation2] sm:$0xff] %vm63, %v108
  %111 = vst.msk [vmem:[#allocation2 + $0x8] sm:$0xff] %vm63, %v109
  // Predicated region
  $region18: #{forward.28} parent=0 // pred_check
    %p112 = pneg %p15
  $region19: #{forward.28} parent=0 // pred_check_branch
    %114 = sbr.rel (%p112) target = $region21
  $region20: #{forward.28} parent=0 // pred_region
    %v115 = vld [vmem:[#allocation2] sm:$0xff]
    %v116 = vld [vmem:[#allocation2 + $0x8] sm:$0xff]
    %v117 = vld [vmem:[%s2] sm:$0x1]
    %v119 = vlaneseq
    %v120 = vshrl.u32 %v119, 7
    %v121 = vsub.s32 0, %v120
    %v122 = vrot.slane %v117, %v121
    %v124 = vadd.f32 %v115, %v122
    %v125 = vadd.f32 %v116, %v122
    %v126 = vpack.c.bf16 %v125, %v124
    %v128 = vunpack.c.l.b16 %v126
    %v129 = vunpack.c.h.b16 %v126
    %v130 = vpack.c.b16 %v128, %v128
    %v131 = vpack.c.b16 %v129, %v129
    %vm134 = vcmask 519168
    %135 = vst.msk [vmem:[%s3] sm:$0xf] %vm134, %v130
    %136 = vst.msk [vmem:[%s3 + $0x4] sm:$0xf] %vm134, %v131
  $region21: #{forward.28} parent=0 // pred_fallthru
    _
  // Predicated region
  $region22: #{forward.28} parent=0 // pred_check
    _
  $region23: #{forward.28} parent=0 // pred_check_branch
    %138 = sbr.rel (0) target = $region25
  $region24: #{forward.28} parent=0 // pred_region
    _
  $region25: #{forward.28} parent=0 // pred_fallthru
    _
  // Predicated region
  $region26: #{forward.28} parent=0 // pred_check
    _
  $region27: #{forward.28} parent=0 // pred_check_branch
    %140 = sbr.rel (0) target = $region29
  $region28: #{forward.28} parent=0 // pred_region
    _
  $region29: #{forward.28} parent=0 // pred_fallthru
    _

// kernel: forward.38
$region0: #{forward.38}
  #allocation0 [shape = 'u32[]', space=smem, size = 0x4, offset = 0x4, fixed_abs, tag = 'smem constant byte address 0x4 - core index']
  #allocation1 [shape = 'u32[144,128]{1,0:T(1,128)}', space=vmem, size = 0x12000, scoped, tag = 'internal scratch']
  %s0 = inlined_call_operand.vmem [shape: bf16[16,64], index: 0, kind: input, shape index: {}]
  %s1 = inlined_call_operand.vmem [shape: f32[1,64], index: 1, kind: input, shape index: {}]
  %s2 = inlined_call_operand.vmem [shape: f32[1,64], index: 2, kind: input, shape index: {}]
  %s3 = inlined_call_operand.vmem [shape: bf16[16,64], index: 3, kind: output, shape index: {}]
  %s4 = sld [smem:[#allocation0]]
  $region22: #{forward.38} parent=0
    _
  %s6 = ssub.s32 1, %s4
  %s7 = scalar_select 0, %s6, %s4
  // Predicated region
  $region2: #{forward.38} parent=0 // pred_check
    _
  $region3: #{forward.38} parent=0 // pred_check_branch
    %9 = sbr.rel (0) target = $region5
  $region4: #{forward.38} parent=0 // pred_region
    _
  $region5: #{forward.38} parent=0 // pred_fallthru
    _
  // Predicated region
  $region6: #{forward.38} parent=0 // pred_check
    _
  $region7: #{forward.38} parent=0 // pred_check_branch
    %11 = sbr.rel (0) target = $region9
  $region8: #{forward.38} parent=0 // pred_region
    _
  $region9: #{forward.38} parent=0 // pred_fallthru
    _
  // Predicated region
  $region10: #{forward.38} parent=0 // pred_check
    _
  $region11: #{forward.38} parent=0 // pred_check_branch
    %13 = sbr.rel (0) target = $region13
  $region12: #{forward.38} parent=0 // pred_region
    _
  $region13: #{forward.38} parent=0 // pred_fallthru
    _
  %v14 = vld [vmem:[%s0] sm:$0xf]
  %v15 = vld [vmem:[%s0 + $0x4] sm:$0xf]
  %v16 = vunpack.c.l.bf16 %v14
  %v17 = vunpack.c.l.bf16 %v15
  %vm18 = vcmask 523264
  %v19 = vsel %vm18, %v16, 0.0
  %20 = vadd.xlane.f32.xlu0 %v19
  %v21 = vpop.xlane.xlu0 %20
  %v22 = vsel %vm18, %v17, 0.0
  %23 = vadd.xlane.f32.xlu0 %v22
  %v24 = vpop.xlane.xlu0 %23
  %v25 = vrcp.pop 64.0
  %v26 = vmul.f32 %v21, %v25
  %v27 = vmul.f32 %v24, %v25
  %v28 = vsub.f32 %v16, %v26
  %v29 = vsub.f32 %v17, %v27
  %v30 = vmul.f32 %v28, %v28
  %v31 = vmul.f32 %v29, %v29
  %v32 = vsel %vm18, %v30, 0.0
  %33 = vadd.xlane.f32.xlu0 %v32
  %v34 = vpop.xlane.xlu0 %33
  %v35 = vsel %vm18, %v31, 0.0
  %36 = vadd.xlane.f32.xlu0 %v35
  %v37 = vpop.xlane.xlu0 %36
  %v38 = vmul.f32 %v34, %v25
  %v39 = vmul.f32 %v37, %v25
  %v40 = vadd.f32 %v38, 1e-06
  %v41 = vadd.f32 %v39, 1e-06
  %v42 = vrsqrt.pop %v40
  %v43 = vrsqrt.pop %v41
  %v44 = vmul.f32 %v28, %v42
  %v45 = vmul.f32 %v29, %v43
  %v46 = vld [vmem:[%s1] sm:$0x1]
  %v48 = vlaneseq
  %v49 = vshrl.u32 %v48, 7
  %v50 = vsub.s32 0, %v49
  %v51 = vrot.slane %v46, %v50
  %v53 = vmul.f32 %v44, %v51
  %v54 = vmul.f32 %v45, %v51
  %v55 = vld [vmem:[%s2] sm:$0x1]
  %v57 = vlaneseq
  %v58 = vshrl.u32 %v57, 7
  %v59 = vsub.s32 0, %v58
  %v60 = vrot.slane %v55, %v59
  %v62 = vadd.f32 %v53, %v60
  %v63 = vadd.f32 %v54, %v60
  %v64 = vpack.c.bf16 %v63, %v62
  %v66 = vunpack.c.l.b16 %v64
  %v67 = vunpack.c.h.b16 %v64
  %v68 = vpack.c.b16 %v66, %v66
  %v69 = vpack.c.b16 %v67, %v67
  %vm72 = vcmask 519168
  %73 = vst.msk [vmem:[%s3] sm:$0xf] %vm72, %v68
  %74 = vst.msk [vmem:[%s3 + $0x4] sm:$0xf] %vm72, %v69
  // Predicated region
  $region14: #{forward.38} parent=0 // pred_check
    _
  $region15: #{forward.38} parent=0 // pred_check_branch
    %76 = sbr.rel (0) target = $region17
  $region16: #{forward.38} parent=0 // pred_region
    _
  $region17: #{forward.38} parent=0 // pred_fallthru
    _
  // Predicated region
  $region18: #{forward.38} parent=0 // pred_check
    _
  $region19: #{forward.38} parent=0 // pred_check_branch
    %78 = sbr.rel (0) target = $region21
  $region20: #{forward.38} parent=0 // pred_region
    _
  $region21: #{forward.38} parent=0 // pred_fallthru
    _

// kernel: forward.30
$region0: #{forward.30}
  #allocation0 [shape = 'u32[]', space=smem, size = 0x4, offset = 0x4, fixed_abs, tag = 'smem constant byte address 0x4 - core index']
  #allocation1 [shape = 'u32[144,128]{1,0:T(1,128)}', space=vmem, size = 0x12000, scoped, tag = 'internal scratch']
  %s0 = inlined_call_operand.vmem [shape: bf16[2,8,64], index: 0, kind: input, shape index: {}]
  %s1 = inlined_call_operand.vmem [shape: bf16[2,8,128], index: 1, kind: input, shape index: {}]
  %s2 = inlined_call_operand.vmem [shape: f32[4,8,8], index: 2, kind: input, shape index: {}]
  %s3 = inlined_call_operand.vmem [shape: f32[2,1,8], index: 3, kind: input, shape index: {}]
  %s4 = inlined_call_operand.vmem [shape: bf16[64,64], index: 4, kind: input, shape index: {}]
  %s5 = inlined_call_operand.vmem [shape: f32[1,64], index: 5, kind: input, shape index: {}, may-alias: {5,8}]
  %s6 = inlined_call_operand.vmem [shape: bf16[2,8,64], index: 6, kind: input, shape index: {}]
  %s7 = inlined_call_operand.vmem [shape: f32[1,64], index: 7, kind: input, shape index: {}]
  %s8 = inlined_call_operand.vmem [shape: f32[1,64], index: 8, kind: input, shape index: {}, may-alias: {5,8}]
  %s9 = inlined_call_operand.vmem [shape: bf16[2,8,64], index: 9, kind: output, shape index: {}]
  %s10 = sld [smem:[#allocation0]]
  $region69: #{forward.30} parent=0
    _
  %s12 = ssub.s32 1, %s10
  %s13 = scalar_select 0, %s12, %s10
  loop: start=0, step=1, limit=4
  $region2: #{forward.30} parent=0 // loop_pre_header
    _
  $region3: #{forward.30} parent=0 // loop_header
    %s15 = sphi 0, %s19
    %p16 = scmp.ge.s32.totalorder %s15, 4
    %s25 = sphi 0, %s27
    %s28 = sphi 0, %s25
    %s29 = sphi 0, %s28
    %s45 = sphi 0, %s29
    %s51 = sphi 0, %s53
    %s54 = sphi 0, %s51
    %s55 = sphi 0, %s54
    %s71 = sphi 0, %s55
    %s75 = sphi 0, %s75
    %s77 = sphi 0, %s75
    %s78 = sphi 0, %s77
    %s92 = sphi 0, %s78
    %s98 = sphi 0, %s100
    %s101 = sphi 0, %s98
    %s102 = sphi 0, %s101
    %s118 = sphi 0, %s102
    %s122 = sphi 0, %s122
    %s124 = sphi 0, %s122
    %s125 = sphi 0, %s124
    %s139 = sphi 0, %s125
    %s143 = sphi 0, %s143
    %s145 = sphi 0, %s143
    %s146 = sphi 0, %s145
    %s160 = sphi 0, %s146
    %s166 = sphi 0, %s168
    %s169 = sphi 0, %s166
    %s170 = sphi 0, %s169
    %s186 = sphi 0, %s170
    %s190 = sphi 0, %s190
    %s192 = sphi 0, %s190
    %s193 = sphi 0, %s192
    %s207 = sphi 0, %s193
    %s211 = sphi 0, %s211
    %s213 = sphi 0, %s211
    %s214 = sphi 0, %s213
    %s228 = sphi 0, %s214
    %s234 = sphi 0, %s236
    %s237 = sphi 0, %s234
    %s238 = sphi 0, %s237
    %s254 = sphi 0, %s238
  $region4: #{forward.30} parent=0 // loop_header_branch
    %18 = sbr.rel (%p16) target = $region8
  $region5: #{forward.30} parent=0 // loop_body
    %s20 = ssub.s32 %s15, 1
    %s21 = ssub.s32 %s15, 2
    %s22 = sadd.s32 %s15, 1
    %s23 = ssub.s32 %s15, %s22
    %p24 = scmp.eq.s32.totalorder %s23, 0
    %s26 = sadd.s32 %s25, 1
    %s27 = scalar_select %p24, %s25, %s26
    %p30 = pneg %p24
    %p31 = scmp.eq.s32.totalorder %s15, 1
    %p32 = por %p30, %p31
    %p33 = scmp.ne.s32.totalorder %s25, %s28
    %p34 = scmp.eq.s32.totalorder %s15, 0
    %p35 = por %p33, %p34
    %p36 = scmp.ne.s32.totalorder %s25, %s28
    %p37 = scmp.eq.s32.totalorder %s20, 1
    %p38 = por %p36, %p37
    %p39 = scmp.ne.s32.totalorder %s28, %s29
    %p40 = scmp.eq.s32.totalorder %s20, 0
    %p41 = por %p39, %p40
    %p42 = scmp.ne.s32.totalorder %s28, %s29
    %p43 = scmp.eq.s32.totalorder %s21, 1
    %p44 = por %p42, %p43
    %p46 = scmp.ne.s32.totalorder %s29, %s45
    %p47 = scmp.eq.s32.totalorder %s21, 0
    %p48 = por %p46, %p47
    %s49 = ssub.s32 %s15, %s22
    %p50 = scmp.eq.s32.totalorder %s49, 0
    %s52 = sadd.s32 %s51, 1
    %s53 = scalar_select %p50, %s51, %s52
    %p56 = pneg %p50
    %p57 = scmp.eq.s32.totalorder %s15, 1
    %p58 = por %p56, %p57
    %p59 = scmp.ne.s32.totalorder %s51, %s54
    %p60 = scmp.eq.s32.totalorder %s15, 0
    %p61 = por %p59, %p60
    %p62 = scmp.ne.s32.totalorder %s51, %s54
    %p63 = scmp.eq.s32.totalorder %s20, 1
    %p64 = por %p62, %p63
    %p65 = scmp.ne.s32.totalorder %s54, %s55
    %p66 = scmp.eq.s32.totalorder %s20, 0
    %p67 = por %p65, %p66
    %p68 = scmp.ne.s32.totalorder %s54, %s55
    %p69 = scmp.eq.s32.totalorder %s21, 1
    %p70 = por %p68, %p69
    %p72 = scmp.ne.s32.totalorder %s55, %s71
    %p73 = scmp.eq.s32.totalorder %s21, 0
    %p74 = por %p72, %p73
    %s76 = sadd.s32 %s75, 1
    %p79 = scmp.eq.s32.totalorder %s15, 1
    %p80 = scmp.ne.s32.totalorder %s75, %s77
    %p81 = scmp.eq.s32.totalorder %s15, 0
    %p82 = por %p80, %p81
    %p83 = scmp.ne.s32.totalorder %s75, %s77
    %p84 = scmp.eq.s32.totalorder %s20, 1
    %p85 = por %p83, %p84
    %p86 = scmp.ne.s32.totalorder %s77, %s78
    %p87 = scmp.eq.s32.totalorder %s20, 0
    %p88 = por %p86, %p87
    %p89 = scmp.ne.s32.totalorder %s77, %s78
    %p90 = scmp.eq.s32.totalorder %s21, 1
    %p91 = por %p89, %p90
    %p93 = scmp.ne.s32.totalorder %s78, %s92
    %p94 = scmp.eq.s32.totalorder %s21, 0
    %p95 = por %p93, %p94
    %s96 = ssub.s32 %s15, %s22
    %p97 = scmp.eq.s32.totalorder %s96, 0
    %s99 = sadd.s32 %s98, 1
    %s100 = scalar_select %p97, %s98, %s99
    %p103 = pneg %p97
    %p104 = scmp.eq.s32.totalorder %s15, 1
    %p105 = por %p103, %p104
    %p106 = scmp.ne.s32.totalorder %s98, %s101
    %p107 = scmp.eq.s32.totalorder %s15, 0
    %p108 = por %p106, %p107
    %p109 = scmp.ne.s32.totalorder %s98, %s101
    %p110 = scmp.eq.s32.totalorder %s20, 1
    %p111 = por %p109, %p110
    %p112 = scmp.ne.s32.totalorder %s101, %s102
    %p113 = scmp.eq.s32.totalorder %s20, 0
    %p114 = por %p112, %p113
    %p115 = scmp.ne.s32.totalorder %s101, %s102
    %p116 = scmp.eq.s32.totalorder %s21, 1
    %p117 = por %p115, %p116
    %p119 = scmp.ne.s32.totalorder %s102, %s118
    %p120 = scmp.eq.s32.totalorder %s21, 0
    %p121 = por %p119, %p120
    %s123 = sadd.s32 %s122, 1
    %p126 = scmp.eq.s32.totalorder %s15, 1
    %p127 = scmp.ne.s32.totalorder %s122, %s124
    %p128 = scmp.eq.s32.totalorder %s15, 0
    %p129 = por %p127, %p128
    %p130 = scmp.ne.s32.totalorder %s122, %s124
    %p131 = scmp.eq.s32.totalorder %s20, 1
    %p132 = por %p130, %p131
    %p133 = scmp.ne.s32.totalorder %s124, %s125
    %p134 = scmp.eq.s32.totalorder %s20, 0
    %p135 = por %p133, %p134
    %p136 = scmp.ne.s32.totalorder %s124, %s125
    %p137 = scmp.eq.s32.totalorder %s21, 1
    %p138 = por %p136, %p137
    %p140 = scmp.ne.s32.totalorder %s125, %s139
    %p141 = scmp.eq.s32.totalorder %s21, 0
    %p142 = por %p140, %p141
    %s144 = sadd.s32 %s143, 1
    %p147 = scmp.eq.s32.totalorder %s15, 1
    %p148 = scmp.ne.s32.totalorder %s143, %s145
    %p149 = scmp.eq.s32.totalorder %s15, 0
    %p150 = por %p148, %p149
    %p151 = scmp.ne.s32.totalorder %s143, %s145
    %p152 = scmp.eq.s32.totalorder %s20, 1
    %p153 = por %p151, %p152
    %p154 = scmp.ne.s32.totalorder %s145, %s146
    %p155 = scmp.eq.s32.totalorder %s20, 0
    %p156 = por %p154, %p155
    %p157 = scmp.ne.s32.totalorder %s145, %s146
    %p158 = scmp.eq.s32.totalorder %s21, 1
    %p159 = por %p157, %p158
    %p161 = scmp.ne.s32.totalorder %s146, %s160
    %p162 = scmp.eq.s32.totalorder %s21, 0
    %p163 = por %p161, %p162
    %s164 = ssub.s32 %s15, %s22
    %p165 = scmp.eq.s32.totalorder %s164, 0
    %s167 = sadd.s32 %s166, 1
    %s168 = scalar_select %p165, %s166, %s167
    %p171 = pneg %p165
    %p172 = scmp.eq.s32.totalorder %s15, 1
    %p173 = por %p171, %p172
    %p174 = scmp.ne.s32.totalorder %s166, %s169
    %p175 = scmp.eq.s32.totalorder %s15, 0
    %p176 = por %p174, %p175
    %p177 = scmp.ne.s32.totalorder %s166, %s169
    %p178 = scmp.eq.s32.totalorder %s20, 1
    %p179 = por %p177, %p178
    %p180 = scmp.ne.s32.totalorder %s169, %s170
    %p181 = scmp.eq.s32.totalorder %s20, 0
    %p182 = por %p180, %p181
    %p183 = scmp.ne.s32.totalorder %s169, %s170
    %p184 = scmp.eq.s32.totalorder %s21, 1
    %p185 = por %p183, %p184
    %p187 = scmp.ne.s32.totalorder %s170, %s186
    %p188 = scmp.eq.s32.totalorder %s21, 0
    %p189 = por %p187, %p188
    %s191 = sadd.s32 %s190, 1
    %p194 = scmp.eq.s32.totalorder %s15, 1
    %p195 = scmp.ne.s32.totalorder %s190, %s192
    %p196 = scmp.eq.s32.totalorder %s15, 0
    %p197 = por %p195, %p196
    %p198 = scmp.ne.s32.totalorder %s190, %s192
    %p199 = scmp.eq.s32.totalorder %s20, 1
    %p200 = por %p198, %p199
    %p201 = scmp.ne.s32.totalorder %s192, %s193
    %p202 = scmp.eq.s32.totalorder %s20, 0
    %p203 = por %p201, %p202
    %p204 = scmp.ne.s32.totalorder %s192, %s193
    %p205 = scmp.eq.s32.totalorder %s21, 1
    %p206 = por %p204, %p205
    %p208 = scmp.ne.s32.totalorder %s193, %s207
    %p209 = scmp.eq.s32.totalorder %s21, 0
    %p210 = por %p208, %p209
    %s212 = sadd.s32 %s211, 1
    %p215 = scmp.eq.s32.totalorder %s15, 1
    %p216 = scmp.ne.s32.totalorder %s211, %s213
    %p217 = scmp.eq.s32.totalorder %s15, 0
    %p218 = por %p216, %p217
    %p219 = scmp.ne.s32.totalorder %s211, %s213
    %p220 = scmp.eq.s32.totalorder %s20, 1
    %p221 = por %p219, %p220
    %p222 = scmp.ne.s32.totalorder %s213, %s214
    %p223 = scmp.eq.s32.totalorder %s20, 0
    %p224 = por %p222, %p223
    %p225 = scmp.ne.s32.totalorder %s213, %s214
    %p226 = scmp.eq.s32.totalorder %s21, 1
    %p227 = por %p225, %p226
    %p229 = scmp.ne.s32.totalorder %s214, %s228
    %p230 = scmp.eq.s32.totalorder %s21, 0
    %p231 = por %p229, %p230
    %s232 = ssub.s32 %s15, %s22
    %p233 = scmp.eq.s32.totalorder %s232, 0
    %s235 = sadd.s32 %s234, 1
    %s236 = scalar_select %p233, %s234, %s235
    %p239 = pneg %p233
    %p240 = scmp.eq.s32.totalorder %s15, 1
    %p241 = por %p239, %p240
    %p242 = scmp.ne.s32.totalorder %s234, %s237
    %p243 = scmp.eq.s32.totalorder %s15, 0
    %p244 = por %p242, %p243
    %p245 = scmp.ne.s32.totalorder %s234, %s237
    %p246 = scmp.eq.s32.totalorder %s20, 1
    %p247 = por %p245, %p246
    %p248 = scmp.ne.s32.totalorder %s237, %s238
    %p249 = scmp.eq.s32.totalorder %s20, 0
    %p250 = por %p248, %p249
    %p251 = scmp.ne.s32.totalorder %s237, %s238
    %p252 = scmp.eq.s32.totalorder %s21, 1
    %p253 = por %p251, %p252
    %p255 = scmp.ne.s32.totalorder %s238, %s254
    %p256 = scmp.eq.s32.totalorder %s21, 0
    %p257 = por %p255, %p256
    %p258 = scmp.le.s32.totalorder 1, %s15
    %p259 = scmp.lt.s32.totalorder %s15, 3
    %p260 = pnand %p258, %p259
    %p261 = pneg %p260
    // Predicated region
    $region9: #{forward.30} parent=5 // pred_check
      _
    $region10: #{forward.30} parent=5 // pred_check_branch
      %263 = sbr.rel (%p260) target = $region12
    $region11: #{forward.30} parent=5 // pred_region
      %s264 = ssub.s32 %s15, 1
      // Predicated region
      $region13: #{forward.30} parent=11 // pred_check
        %p265 = pneg %p88
      $region14: #{forward.30} parent=11 // pred_check_branch
        %267 = sbr.rel (%p265) target = $region16
      $region15: #{forward.30} parent=11 // pred_region
        _
      $region16: #{forward.30} parent=11 // pred_fallthru
        _
      // Predicated region
      $region17: #{forward.30} parent=11 // pred_check
        %p268 = pneg %p135
      $region18: #{forward.30} parent=11 // pred_check_branch
        %270 = sbr.rel (%p268) target = $region20
      $region19: #{forward.30} parent=11 // pred_region
        _
      $region20: #{forward.30} parent=11 // pred_fallthru
        _
      // Predicated region
      $region21: #{forward.30} parent=11 // pred_check
        %p271 = pneg %p156
      $region22: #{forward.30} parent=11 // pred_check_branch
        %273 = sbr.rel (%p271) target = $region24
      $region23: #{forward.30} parent=11 // pred_region
        _
      $region24: #{forward.30} parent=11 // pred_fallthru
        _
      // Predicated region
      $region25: #{forward.30} parent=11 // pred_check
        %p274 = pneg %p203
      $region26: #{forward.30} parent=11 // pred_check_branch
        %276 = sbr.rel (%p274) target = $region28
      $region27: #{forward.30} parent=11 // pred_region
        _
      $region28: #{forward.30} parent=11 // pred_fallthru
        _
      // Predicated region
      $region29: #{forward.30} parent=11 // pred_check
        %p277 = pneg %p224
      $region30: #{forward.30} parent=11 // pred_check_branch
        %279 = sbr.rel (%p277) target = $region32
      $region31: #{forward.30} parent=11 // pred_region
        _
      $region32: #{forward.30} parent=11 // pred_fallthru
        _
    $region12: #{forward.30} parent=5 // pred_fallthru
      _
    %p280 = scmp.lt.s32.totalorder %s15, 2
    // Predicated region
    $region33: #{forward.30} parent=5 // pred_check
      %p281 = pneg %p280
    $region34: #{forward.30} parent=5 // pred_check_branch
      %283 = sbr.rel (%p281) target = $region36
    $region35: #{forward.30} parent=5 // pred_region
      // Predicated region
      $region37: #{forward.30} parent=35 // pred_check
        %p284 = pneg %p35
      $region38: #{forward.30} parent=35 // pred_check_branch
        %286 = sbr.rel (%p284) target = $region40
      $region39: #{forward.30} parent=35 // pred_region
        %p287 = scmp.lt.s32.totalorder %s15, 1
        %s288 = scalar_select %p287, %s15, 1
        %s289 = smul.addr %s288, 4
        %s290 = scalar_lea.vmem %s0, %s289
      $region40: #{forward.30} parent=35 // pred_fallthru
        _
      // Predicated region
      $region41: #{forward.30} parent=35 // pred_check
        %p291 = pneg %p61
      $region42: #{forward.30} parent=35 // pred_check_branch
        %293 = sbr.rel (%p291) target = $region44
      $region43: #{forward.30} parent=35 // pred_region
        %p294 = scmp.lt.s32.totalorder %s15, 1
        %s295 = scalar_select %p294, %s15, 1
        %s296 = smul.addr %s295, 4
        %s297 = scalar_lea.vmem %s1, %s296
      $region44: #{forward.30} parent=35 // pred_fallthru
        _
      // Predicated region
      $region45: #{forward.30} parent=35 // pred_check
        %p298 = pneg %p108
      $region46: #{forward.30} parent=35 // pred_check_branch
        %300 = sbr.rel (%p298) target = $region48
      $region47: #{forward.30} parent=35 // pred_region
        %p301 = scmp.lt.s32.totalorder %s15, 1
        %s302 = scalar_select %p301, %s15, 1
        %s303 = scalar_lea.vmem %s3, %s302
      $region48: #{forward.30} parent=35 // pred_fallthru
        _
      // Predicated region
      $region49: #{forward.30} parent=35 // pred_check
        %p304 = pneg %p176
      $region50: #{forward.30} parent=35 // pred_check_branch
        %306 = sbr.rel (%p304) target = $region52
      $region51: #{forward.30} parent=35 // pred_region
        %p307 = scmp.lt.s32.totalorder %s15, 1
        %s308 = scalar_select %p307, %s15, 1
        %s309 = smul.addr %s308, 4
        %s310 = scalar_lea.vmem %s6, %s309
      $region52: #{forward.30} parent=35 // pred_fallthru
        _
    $region36: #{forward.30} parent=5 // pred_fallthru
      _
    %p311 = scmp.le.s32.totalorder 1, %s15
    %p312 = scmp.lt.s32.totalorder %s15, 3
    %p313 = pnand %p311, %p312
    %p314 = pneg %p313
    // Predicated region
    $region53: #{forward.30} parent=5 // pred_check
      _
    $region54: #{forward.30} parent=5 // pred_check_branch
      %316 = sbr.rel (%p313) target = $region56
    $region55: #{forward.30} parent=5 // pred_region
      %s317 = ssub.s32 %s15, 1
      %p318 = scmp.lt.s32.totalorder %s20, 1
      %s319 = scalar_select %p318, %s20, 1
      %s320 = smul.addr %s319, 4
      %s321 = scalar_lea.vmem %s0, %s320
      %p322 = pneg %p41
      %p323 = pneg %p38
      %p324 = scmp.lt.s32.totalorder %s20, 1
      %s325 = scalar_select %p324, %s20, 1
      %s326 = smul.addr %s325, 4
      %s327 = scalar_lea.vmem %s1, %s326
      %p328 = pneg %p67
      %p329 = pneg %p64
      %p330 = pneg %p88
      %p331 = pneg %p85
      %p332 = scmp.lt.s32.totalorder %s20, 1
      %s333 = scalar_select %p332, %s20, 1
      %s334 = scalar_lea.vmem %s3, %s333
      %p335 = pneg %p114
      %p336 = pneg %p111
      %p337 = pneg %p135
      %p338 = pneg %p132
      %p339 = pneg %p156
      %p340 = pneg %p153
      %p341 = scmp.lt.s32.totalorder %s20, 1
      %s342 = scalar_select %p341, %s20, 1
      %s343 = smul.addr %s342, 4
      %s344 = scalar_lea.vmem %s6, %s343
      %p345 = pneg %p182
      %p346 = pneg %p179
      %p347 = pneg %p203
      %p348 = pneg %p200
      %p349 = pneg %p224
      %p350 = pneg %p221
      %p351 = pneg %p250
      %p352 = pneg %p247
      %p353 = scmp.lt.s32.totalorder %s20, 1
      %s354 = scalar_select %p353, %s20, 1
      %s355 = smul.addr %s354, 4
      %s356 = scalar_lea.vmem %s9, %s355
      %p357 = scmp.lt.s32.totalorder %s20, 1
      %s358 = scalar_select %p357, %s20, 1
      %s359 = smul.addr %s358, 4
      %s360 = scalar_lea.vmem %s0, %s359
      %p361 = scmp.lt.s32.totalorder %s20, 1
      %s362 = scalar_select %p361, %s20, 1
      %s363 = smul.addr %s362, 4
      %s364 = scalar_lea.vmem %s1, %s363
      %p365 = scmp.lt.s32.totalorder %s20, 1
      %s366 = scalar_select %p365, %s20, 1
      %s367 = scalar_lea.vmem %s3, %s366
      %p368 = scmp.lt.s32.totalorder %s20, 1
      %s369 = scalar_select %p368, %s20, 1
      %s370 = smul.addr %s369, 4
      %s371 = scalar_lea.vmem %s6, %s370
      %p372 = scmp.lt.s32.totalorder %s20, 1
      %s373 = scalar_select %p372, %s20, 1
      %s374 = smul.addr %s373, 4
      %s375 = scalar_lea.vmem %s9, %s374
      %v377 = vld [vmem:[%s360] sm:$0xf]
      %v378 = vld [vmem:[%s364] sm:$0xf]
      %v379 = vld [vmem:[%s367] sm:$0x1]
      %v380 = vld [vmem:[%s371] sm:$0xf]
      %v381 = vunpack.c.l.bf16 %v380
      %v382 = vld [vmem:[%s5] sm:$0x1]
      %v384 = vlaneseq
      %v385 = vshrl.u32 %v384, 7
      %v386 = vsub.s32 0, %v385
      %v387 = vrot.slane %v382, %v386
      %v389 = vadd.f32 %v381, %v387
      %vm390 = vcmask 130048
      %v392 = vsel %vm390, %v377, 0
      %v395 = vsel %vm390, %v378, 0
      %397 = vmatprep.subr.bf16.mxu0 0
      %398 = vmatpush1.bf16.xpose.msra.mxu0 %v395
      %399 = vmatprep.subr.bf16.mxu0 0
      %400 = vmatpush1.bf16.xpose.msra.mxu0 0
      %401 = vmatprep.subr.bf16.mxu0 0
      %402 = vmatpush1.bf16.xpose.msra.mxu0 0
      %403 = vmatprep.subr.bf16.mxu0 0
      %404 = vmatpush1.bf16.xpose.msra.mxu0 0
      %405 = vmatprep.subr.bf16.mxu0 0
      %406 = vmatpush1.bf16.xpose.msra.mxu0 0
      %407 = vmatprep.subr.bf16.mxu0 0
      %408 = vmatpush1.bf16.xpose.msra.mxu0 0
      %409 = vmatprep.subr.bf16.mxu0 0
      %410 = vmatpush1.bf16.xpose.msra.mxu0 0
      %411 = vmatprep.subr.bf16.mxu0 0
      %412 = vmatpush1.bf16.xpose.msra.mxu0 0
      %413 = vmatprep.subr.bf16.mxu0 0
      %414 = vmatpush1.bf16.xpose.msra.mxu0 0
      %415 = vmatprep.subr.bf16.mxu0 0
      %416 = vmatpush1.bf16.xpose.msra.mxu0 0
      %417 = vmatprep.subr.bf16.mxu0 0
      %418 = vmatpush1.bf16.xpose.msra.mxu0 0
      %419 = vmatprep.subr.bf16.mxu0 0
      %420 = vmatpush1.bf16.xpose.msra.mxu0 0
      %421 = vmatprep.subr.bf16.mxu0 0
      %422 = vmatpush1.bf16.xpose.msra.mxu0 0
      %423 = vmatprep.subr.bf16.mxu0 0
      %424 = vmatpush1.bf16.xpose.msra.mxu0 0
      %425 = vmatprep.subr.bf16.mxu0 0
      %426 = vmatpush1.bf16.xpose.msra.mxu0 0
      %427 = vmatprep.subr.bf16.mxu0 0
      %428 = vmatpush1.bf16.xpose.msra.mxu0 0
      %429 = vmatprep.mubr.bf16.mxu0 0
      %430 = vmatmul.mubr.bf16.gmra.mrb[0].mxu0 %v392
      %v431 = vpop.f32.mrb[0].mxu0
      %v432 = vadd.f32 0.0, %v431
      %v433 = vpop.f32.mrb[0].mxu0
      %v434 = vpop.f32.mrb[0].mxu0
      %v435 = vpop.f32.mrb[0].mxu0
      %436 = vdwg.mxu0
      %v437 = vmul.f32 %v432, 0.25
      %v438 = vld [vmem:[%s2] sm:$0xff]
      %v439 = vadd.f32 %v437, %v438
      %v441 = vlaneseq
      %v442 = vshrl.u32 %v441, 7
      %v443 = vsub.s32 0, %v442
      %v444 = vrot.slane %v379, %v443
      %v446 = vadd.f32 %v439, %v444
      %vm447 = vcmask 64512
      %v448 = vsel %vm447, %v446, -inf
      %449 = vmax.xlane.f32.xlu0 %v448
      %v450 = vpop.xlane.xlu0 %449
      %v451 = vsub.f32 %v446, %v450
      %v452 = vmul.f32 %v451, 1.442695
      %v453 = vpow.pop %v452
      %v454 = vsel %vm447, %v453, 0.0
      %455 = vadd.xlane.f32.xlu0 %v454
      %v456 = vpop.xlane.xlu0 %455
      %v457 = vrcp.pop %v456
      %v458 = vmul.f32 %v453, %v457
      %v459 = vpack.c.bf16 %v458, %v458
      %v461 = vunpack.c.l.b16 %v378
      %v462 = vpack.c.b16 %v461, %v461
      %463 = vrot.lane.b32.xlu0 %v462, 64
      %v464 = vpop.permute.xlu0 %463
      %v466 = vsel %vm447, %v459, 0
      %vm468 = vcmask 1043456
      %v470 = vsel %vm468, %v464, 0
      %472 = vmatprep.subr.bf16.mxu0 0
      %473 = vmatpush1.bf16.msra.mxu0 %v470
      %474 = vmatprep.subr.bf16.mxu0 0
      %475 = vmatpush1.bf16.msra.mxu0 0
      %476 = vmatprep.subr.bf16.mxu0 0
      %477 = vmatpush1.bf16.msra.mxu0 0
      %478 = vmatprep.subr.bf16.mxu0 0
      %479 = vmatpush1.bf16.msra.mxu0 0
      %480 = vmatprep.subr.bf16.mxu0 0
      %481 = vmatpush1.bf16.msra.mxu0 0
      %482 = vmatprep.subr.bf16.mxu0 0
      %483 = vmatpush1.bf16.msra.mxu0 0
      %484 = vmatprep.subr.bf16.mxu0 0
      %485 = vmatpush1.bf16.msra.mxu0 0
      %486 = vmatprep.subr.bf16.mxu0 0
      %487 = vmatpush1.bf16.msra.mxu0 0
      %488 = vmatprep.subr.bf16.mxu0 0
      %489 = vmatpush1.bf16.msra.mxu0 0
      %490 = vmatprep.subr.bf16.mxu0 0
      %491 = vmatpush1.bf16.msra.mxu0 0
      %492 = vmatprep.subr.bf16.mxu0 0
      %493 = vmatpush1.bf16.msra.mxu0 0
      %494 = vmatprep.subr.bf16.mxu0 0
      %495 = vmatpush1.bf16.msra.mxu0 0
      %496 = vmatprep.subr.bf16.mxu0 0
      %497 = vmatpush1.bf16.msra.mxu0 0
      %498 = vmatprep.subr.bf16.mxu0 0
      %499 = vmatpush1.bf16.msra.mxu0 0
      %500 = vmatprep.subr.bf16.mxu0 0
      %501 = vmatpush1.bf16.msra.mxu0 0
      %502 = vmatprep.subr.bf16.mxu0 0
      %503 = vmatpush1.bf16.msra.mxu0 0
      %504 = vmatprep.mubr.bf16.mxu0 0
      %505 = vmatmul.mubr.bf16.gmra.mrb[0].mxu0 %v466
      %v506 = vpop.f32.mrb[0].mxu0
      %v507 = vadd.f32 0.0, %v506
      %v508 = vpop.f32.mrb[0].mxu0
      %v509 = vpop.f32.mrb[0].mxu0
      %v510 = vpop.f32.mrb[0].mxu0
      %511 = vdwg.mxu0
      %v512 = vpack.c.bf16 %v507, %v507
      %v513 = vld [vmem:[%s4] sm:$0xf]
      %v514 = vld [vmem:[%s4 + $0x4] sm:$0xf]
      %v517 = vunpack.c.l.b16 %v513
      %v518 = vunpack.c.l.b16 %v514
      %v519 = vpack.c.b16 %v518, %v517
      %v522 = vsel %vm390, %v512, 0
      %524 = vmatprep.subr.bf16.mxu0 0
      %525 = vmatpush1.bf16.msra.mxu0 %v519
      %526 = vmatprep.subr.bf16.mxu0 0
      %527 = vmatpush1.bf16.msra.mxu0 0
      %528 = vmatprep.subr.bf16.mxu0 0
      %529 = vmatpush1.bf16.msra.mxu0 0
      %530 = vmatprep.subr.bf16.mxu0 0
      %531 = vmatpush1.bf16.msra.mxu0 0
      %532 = vmatprep.subr.bf16.mxu0 0
      %533 = vmatpush1.bf16.msra.mxu0 0
      %534 = vmatprep.subr.bf16.mxu0 0
      %535 = vmatpush1.bf16.msra.mxu0 0
      %536 = vmatprep.subr.bf16.mxu0 0
      %537 = vmatpush1.bf16.msra.mxu0 0
      %538 = vmatprep.subr.bf16.mxu0 0
      %539 = vmatpush1.bf16.msra.mxu0 0
      %540 = vmatprep.subr.bf16.mxu0 0
      %541 = vmatpush1.bf16.msra.mxu0 0
      %542 = vmatprep.subr.bf16.mxu0 0
      %543 = vmatpush1.bf16.msra.mxu0 0
      %544 = vmatprep.subr.bf16.mxu0 0
      %545 = vmatpush1.bf16.msra.mxu0 0
      %546 = vmatprep.subr.bf16.mxu0 0
      %547 = vmatpush1.bf16.msra.mxu0 0
      %548 = vmatprep.subr.bf16.mxu0 0
      %549 = vmatpush1.bf16.msra.mxu0 0
      %550 = vmatprep.subr.bf16.mxu0 0
      %551 = vmatpush1.bf16.msra.mxu0 0
      %552 = vmatprep.subr.bf16.mxu0 0
      %553 = vmatpush1.bf16.msra.mxu0 0
      %554 = vmatprep.subr.bf16.mxu0 0
      %555 = vmatpush1.bf16.msra.mxu0 0
      %556 = vmatprep.mubr.bf16.mxu0 0
      %557 = vmatmul.mubr.bf16.gmra.mrb[0].mxu0 %v522
      %v558 = vpop.f32.mrb[0].mxu0
      %v559 = vadd.f32 0.0, %v558
      %v560 = vpop.f32.mrb[0].mxu0
      %v561 = vpop.f32.mrb[0].mxu0
      %v562 = vpop.f32.mrb[0].mxu0
      %563 = vdwg.mxu0
      %v564 = vadd.f32 %v389, %v559
      %v566 = vunpack.c.l.b16 %v377
      %v567 = vpack.c.b16 %v566, %v566
      %568 = vrot.lane.b32.xlu0 %v567, 112
      %v569 = vpop.permute.xlu0 %568
      %570 = vrot.lane.b32.xlu0 %v462, 112
      %v571 = vpop.permute.xlu0 %570
      %v573 = vsel %vm390, %v569, 0
      %v576 = vsel %vm390, %v571, 0
      %578 = vmatprep.subr.bf16.mxu0 0
      %579 = vmatpush1.bf16.xpose.msra.mxu0 %v576
      %580 = vmatprep.subr.bf16.mxu0 0
      %581 = vmatpush1.bf16.xpose.msra.mxu0 0
      %582 = vmatprep.subr.bf16.mxu0 0
      %583 = vmatpush1.bf16.xpose.msra.mxu0 0
      %584 = vmatprep.subr.bf16.mxu0 0
      %585 = vmatpush1.bf16.xpose.msra.mxu0 0
      %586 = vmatprep.subr.bf16.mxu0 0
      %587 = vmatpush1.bf16.xpose.msra.mxu0 0
      %588 = vmatprep.subr.bf16.mxu0 0
      %589 = vmatpush1.bf16.xpose.msra.mxu0 0
      %590 = vmatprep.subr.bf16.mxu0 0
      %591 = vmatpush1.bf16.xpose.msra.mxu0 0
      %592 = vmatprep.subr.bf16.mxu0 0
      %593 = vmatpush1.bf16.xpose.msra.mxu0 0
      %594 = vmatprep.subr.bf16.mxu0 0
      %595 = vmatpush1.bf16.xpose.msra.mxu0 0
      %596 = vmatprep.subr.bf16.mxu0 0
      %597 = vmatpush1.bf16.xpose.msra.mxu0 0
      %598 = vmatprep.subr.bf16.mxu0 0
      %599 = vmatpush1.bf16.xpose.msra.mxu0 0
      %600 = vmatprep.subr.bf16.mxu0 0
      %601 = vmatpush1.bf16.xpose.msra.mxu0 0
      %602 = vmatprep.subr.bf16.mxu0 0
      %603 = vmatpush1.bf16.xpose.msra.mxu0 0
      %604 = vmatprep.subr.bf16.mxu0 0
      %605 = vmatpush1.bf16.xpose.msra.mxu0 0
      %606 = vmatprep.subr.bf16.mxu0 0
      %607 = vmatpush1.bf16.xpose.msra.mxu0 0
      %608 = vmatprep.subr.bf16.mxu0 0
      %609 = vmatpush1.bf16.xpose.msra.mxu0 0
      %610 = vmatprep.mubr.bf16.mxu0 0
      %611 = vmatmul.mubr.bf16.gmra.mrb[0].mxu0 %v573
      %v612 = vpop.f32.mrb[0].mxu0
      %v613 = vadd.f32 0.0, %v612
      %v614 = vpop.f32.mrb[0].mxu0
      %v615 = vpop.f32.mrb[0].mxu0
      %v616 = vpop.f32.mrb[0].mxu0
      %617 = vdwg.mxu0
      %v618 = vmul.f32 %v613, 0.25
      %s619 = scalar_lea.vmem %s2, 8
      %v620 = vld [vmem:[%s619] sm:$0xff]
      %v621 = vadd.f32 %v618, %v620
      %v622 = vadd.f32 %v621, %v444
      %v623 = vsel %vm447, %v622, -inf
      %624 = vmax.xlane.f32.xlu0 %v623
      %v625 = vpop.xlane.xlu0 %624
      %v626 = vsub.f32 %v622, %v625
      %v627 = vmul.f32 %v626, 1.442695
      %v628 = vpow.pop %v627
      %v629 = vsel %vm447, %v628, 0.0
      %630 = vadd.xlane.f32.xlu0 %v629
      %v631 = vpop.xlane.xlu0 %630
      %v632 = vrcp.pop %v631
      %v633 = vmul.f32 %v628, %v632
      %v634 = vpack.c.bf16 %v633, %v633
      %635 = vrot.lane.b32.xlu0 %v462, 48
      %v636 = vpop.permute.xlu0 %635
      %v638 = vsel %vm447, %v634, 0
      %v641 = vsel %vm468, %v636, 0
      %643 = vmatprep.subr.bf16.mxu0 0
      %644 = vmatpush1.bf16.msra.mxu0 %v641
      %645 = vmatprep.subr.bf16.mxu0 0
      %646 = vmatpush1.bf16.msra.mxu0 0
      %647 = vmatprep.subr.bf16.mxu0 0
      %648 = vmatpush1.bf16.msra.mxu0 0
      %649 = vmatprep.subr.bf16.mxu0 0
      %650 = vmatpush1.bf16.msra.mxu0 0
      %651 = vmatprep.subr.bf16.mxu0 0
      %652 = vmatpush1.bf16.msra.mxu0 0
      %653 = vmatprep.subr.bf16.mxu0 0
      %654 = vmatpush1.bf16.msra.mxu0 0
      %655 = vmatprep.subr.bf16.mxu0 0
      %656 = vmatpush1.bf16.msra.mxu0 0
      %657 = vmatprep.subr.bf16.mxu0 0
      %658 = vmatpush1.bf16.msra.mxu0 0
      %659 = vmatprep.subr.bf16.mxu0 0
      %660 = vmatpush1.bf16.msra.mxu0 0
      %661 = vmatprep.subr.bf16.mxu0 0
      %662 = vmatpush1.bf16.msra.mxu0 0
      %663 = vmatprep.subr.bf16.mxu0 0
      %664 = vmatpush1.bf16.msra.mxu0 0
      %665 = vmatprep.subr.bf16.mxu0 0
      %666 = vmatpush1.bf16.msra.mxu0 0
      %667 = vmatprep.subr.bf16.mxu0 0
      %668 = vmatpush1.bf16.msra.mxu0 0
      %669 = vmatprep.subr.bf16.mxu0 0
      %670 = vmatpush1.bf16.msra.mxu0 0
      %671 = vmatprep.subr.bf16.mxu0 0
      %672 = vmatpush1.bf16.msra.mxu0 0
      %673 = vmatprep.subr.bf16.mxu0 0
      %674 = vmatpush1.bf16.msra.mxu0 0
      %675 = vmatprep.mubr.bf16.mxu0 0
      %676 = vmatmul.mubr.bf16.gmra.mrb[0].mxu0 %v638
      %v677 = vpop.f32.mrb[0].mxu0
      %v678 = vadd.f32 0.0, %v677
      %v679 = vpop.f32.mrb[0].mxu0
      %v680 = vpop.f32.mrb[0].mxu0
      %v681 = vpop.f32.mrb[0].mxu0
      %682 = vdwg.mxu0
      %v683 = vpack.c.bf16 %v678, %v678
      %v684 = vld [vmem:[%s4 + $0x8] sm:$0xf]
      %v685 = vld [vmem:[%s4 + $0xc] sm:$0xf]
      %v688 = vunpack.c.l.b16 %v684
      %v689 = vunpack.c.l.b16 %v685
      %v690 = vpack.c.b16 %v689, %v688
      %v693 = vsel %vm390, %v683, 0
      %695 = vmatprep.subr.bf16.mxu0 0
      %696 = vmatpush1.bf16.msra.mxu0 %v690
      %697 = vmatprep.subr.bf16.mxu0 0
      %698 = vmatpush1.bf16.msra.mxu0 0
      %699 = vmatprep.subr.bf16.mxu0 0
      %700 = vmatpush1.bf16.msra.mxu0 0
      %701 = vmatprep.subr.bf16.mxu0 0
      %702 = vmatpush1.bf16.msra.mxu0 0
      %703 = vmatprep.subr.bf16.mxu0 0
      %704 = vmatpush1.bf16.msra.mxu0 0
      %705 = vmatprep.subr.bf16.mxu0 0
      %706 = vmatpush1.bf16.msra.mxu0 0
      %707 = vmatprep.subr.bf16.mxu0 0
      %708 = vmatpush1.bf16.msra.mxu0 0
      %709 = vmatprep.subr.bf16.mxu0 0
      %710 = vmatpush1.bf16.msra.mxu0 0
      %711 = vmatprep.subr.bf16.mxu0 0
      %712 = vmatpush1.bf16.msra.mxu0 0
      %713 = vmatprep.subr.bf16.mxu0 0
      %714 = vmatpush1.bf16.msra.mxu0 0
      %715 = vmatprep.subr.bf16.mxu0 0
      %716 = vmatpush1.bf16.msra.mxu0 0
      %717 = vmatprep.subr.bf16.mxu0 0
      %718 = vmatpush1.bf16.msra.mxu0 0
      %719 = vmatprep.subr.bf16.mxu0 0
      %720 = vmatpush1.bf16.msra.mxu0 0
      %721 = vmatprep.subr.bf16.mxu0 0
      %722 = vmatpush1.bf16.msra.mxu0 0
      %723 = vmatprep.subr.bf16.mxu0 0
      %724 = vmatpush1.bf16.msra.mxu0 0
      %725 = vmatprep.subr.bf16.mxu0 0
      %726 = vmatpush1.bf16.msra.mxu0 0
      %727 = vmatprep.mubr.bf16.mxu0 0
      %728 = vmatmul.mubr.bf16.gmra.mrb[0].mxu0 %v693
      %v729 = vpop.f32.mrb[0].mxu0
      %v730 = vadd.f32 0.0, %v729
      %v731 = vpop.f32.mrb[0].mxu0
      %v732 = vpop.f32.mrb[0].mxu0
      %v733 = vpop.f32.mrb[0].mxu0
      %734 = vdwg.mxu0
      %v735 = vadd.f32 %v564, %v730
      %736 = vrot.lane.b32.xlu0 %v567, 96
      %v737 = vpop.permute.xlu0 %736
      %738 = vrot.lane.b32.xlu0 %v462, 96
      %v739 = vpop.permute.xlu0 %738
      %v741 = vsel %vm390, %v737, 0
      %v744 = vsel %vm390, %v739, 0
      %746 = vmatprep.subr.bf16.mxu0 0
      %747 = vmatpush1.bf16.xpose.msra.mxu0 %v744
      %748 = vmatprep.subr.bf16.mxu0 0
      %749 = vmatpush1.bf16.xpose.msra.mxu0 0
      %750 = vmatprep.subr.bf16.mxu0 0
      %751 = vmatpush1.bf16.xpose.msra.mxu0 0
      %752 = vmatprep.subr.bf16.mxu0 0
      %753 = vmatpush1.bf16.xpose.msra.mxu0 0
      %754 = vmatprep.subr.bf16.mxu0 0
      %755 = vmatpush1.bf16.xpose.msra.mxu0 0
      %756 = vmatprep.subr.bf16.mxu0 0
      %757 = vmatpush1.bf16.xpose.msra.mxu0 0
      %758 = vmatprep.subr.bf16.mxu0 0
      %759 = vmatpush1.bf16.xpose.msra.mxu0 0
      %760 = vmatprep.subr.bf16.mxu0 0
      %761 = vmatpush1.bf16.xpose.msra.mxu0 0
      %762 = vmatprep.subr.bf16.mxu0 0
      %763 = vmatpush1.bf16.xpose.msra.mxu0 0
      %764 = vmatprep.subr.bf16.mxu0 0
      %765 = vmatpush1.bf16.xpose.msra.mxu0 0
      %766 = vmatprep.subr.bf16.mxu0 0
      %767 = vmatpush1.bf16.xpose.msra.mxu0 0
      %768 = vmatprep.subr.bf16.mxu0 0
      %769 = vmatpush1.bf16.xpose.msra.mxu0 0
      %770 = vmatprep.subr.bf16.mxu0 0
      %771 = vmatpush1.bf16.xpose.msra.mxu0 0
      %772 = vmatprep.subr.bf16.mxu0 0
      %773 = vmatpush1.bf16.xpose.msra.mxu0 0
      %774 = vmatprep.subr.bf16.mxu0 0
      %775 = vmatpush1.bf16.xpose.msra.mxu0 0
      %776 = vmatprep.subr.bf16.mxu0 0
      %777 = vmatpush1.bf16.xpose.msra.mxu0 0
      %778 = vmatprep.mubr.bf16.mxu0 0
      %779 = vmatmul.mubr.bf16.gmra.mrb[0].mxu0 %v741
      %v780 = vpop.f32.mrb[0].mxu0
      %v781 = vadd.f32 0.0, %v780
      %v782 = vpop.f32.mrb[0].mxu0
      %v783 = vpop.f32.mrb[0].mxu0
      %v784 = vpop.f32.mrb[0].mxu0
      %785 = vdwg.mxu0
      %v786 = vmul.f32 %v781, 0.25
      %s787 = scalar_lea.vmem %s2, 16
      %v788 = vld [vmem:[%s787] sm:$0xff]
      %v789 = vadd.f32 %v786, %v788
      %v790 = vadd.f32 %v789, %v444
      %v791 = vsel %vm447, %v790, -inf
      %792 = vmax.xlane.f32.xlu0 %v791
      %v793 = vpop.xlane.xlu0 %792
      %v794 = vsub.f32 %v790, %v793
      %v795 = vmul.f32 %v794, 1.442695
      %v796 = vpow.pop %v795
      %v797 = vsel %vm447, %v796, 0.0
      %798 = vadd.xlane.f32.xlu0 %v797
      %v799 = vpop.xlane.xlu0 %798
      %v800 = vrcp.pop %v799
      %v801 = vmul.f32 %v796, %v800
      %v802 = vpack.c.bf16 %v801, %v801
      %803 = vrot.lane.b32.xlu0 %v462, 32
      %v804 = vpop.permute.xlu0 %803
      %v806 = vsel %vm447, %v802, 0
      %v809 = vsel %vm468, %v804, 0
      %811 = vmatprep.subr.bf16.mxu0 0
      %812 = vmatpush1.bf16.msra.mxu0 %v809
      %813 = vmatprep.subr.bf16.mxu0 0
      %814 = vmatpush1.bf16.msra.mxu0 0
      %815 = vmatprep.subr.bf16.mxu0 0
      %816 = vmatpush1.bf16.msra.mxu0 0
      %817 = vmatprep.subr.bf16.mxu0 0
      %818 = vmatpush1.bf16.msra.mxu0 0
      %819 = vmatprep.subr.bf16.mxu0 0
      %820 = vmatpush1.bf16.msra.mxu0 0
      %821 = vmatprep.subr.bf16.mxu0 0
      %822 = vmatpush1.bf16.msra.mxu0 0
      %823 = vmatprep.subr.bf16.mxu0 0
      %824 = vmatpush1.bf16.msra.mxu0 0
      %825 = vmatprep.subr.bf16.mxu0 0
      %826 = vmatpush1.bf16.msra.mxu0 0
      %827 = vmatprep.subr.bf16.mxu0 0
      %828 = vmatpush1.bf16.msra.mxu0 0
      %829 = vmatprep.subr.bf16.mxu0 0
      %830 = vmatpush1.bf16.msra.mxu0 0
      %831 = vmatprep.subr.bf16.mxu0 0
      %832 = vmatpush1.bf16.msra.mxu0 0
      %833 = vmatprep.subr.bf16.mxu0 0
      %834 = vmatpush1.bf16.msra.mxu0 0
      %835 = vmatprep.subr.bf16.mxu0 0
      %836 = vmatpush1.bf16.msra.mxu0 0
      %837 = vmatprep.subr.bf16.mxu0 0
      %838 = vmatpush1.bf16.msra.mxu0 0
      %839 = vmatprep.subr.bf16.mxu0 0
      %840 = vmatpush1.bf16.msra.mxu0 0
      %841 = vmatprep.subr.bf16.mxu0 0
      %842 = vmatpush1.bf16.msra.mxu0 0
      %843 = vmatprep.mubr.bf16.mxu0 0
      %844 = vmatmul.mubr.bf16.gmra.mrb[0].mxu0 %v806
      %v845 = vpop.f32.mrb[0].mxu0
      %v846 = vadd.f32 0.0, %v845
      %v847 = vpop.f32.mrb[0].mxu0
      %v848 = vpop.f32.mrb[0].mxu0
      %v849 = vpop.f32.mrb[0].mxu0
      %850 = vdwg.mxu0
      %v851 = vpack.c.bf16 %v846, %v846
      %v852 = vld [vmem:[%s4 + $0x10] sm:$0xf]
      %v853 = vld [vmem:[%s4 + $0x14] sm:$0xf]
      %v856 = vunpack.c.l.b16 %v852
      %v857 = vunpack.c.l.b16 %v853
      %v858 = vpack.c.b16 %v857, %v856
      %v861 = vsel %vm390, %v851, 0
      %863 = vmatprep.subr.bf16.mxu0 0
      %864 = vmatpush1.bf16.msra.mxu0 %v858
      %865 = vmatprep.subr.bf16.mxu0 0
      %866 = vmatpush1.bf16.msra.mxu0 0
      %867 = vmatprep.subr.bf16.mxu0 0
      %868 = vmatpush1.bf16.msra.mxu0 0
      %869 = vmatprep.subr.bf16.mxu0 0
      %870 = vmatpush1.bf16.msra.mxu0 0
      %871 = vmatprep.subr.bf16.mxu0 0
      %872 = vmatpush1.bf16.msra.mxu0 0
      %873 = vmatprep.subr.bf16.mxu0 0
      %874 = vmatpush1.bf16.msra.mxu0 0
      %875 = vmatprep.subr.bf16.mxu0 0
      %876 = vmatpush1.bf16.msra.mxu0 0
      %877 = vmatprep.subr.bf16.mxu0 0
      %878 = vmatpush1.bf16.msra.mxu0 0
      %879 = vmatprep.subr.bf16.mxu0 0
      %880 = vmatpush1.bf16.msra.mxu0 0
      %881 = vmatprep.subr.bf16.mxu0 0
      %882 = vmatpush1.bf16.msra.mxu0 0
      %883 = vmatprep.subr.bf16.mxu0 0
      %884 = vmatpush1.bf16.msra.mxu0 0
      %885 = vmatprep.subr.bf16.mxu0 0
      %886 = vmatpush1.bf16.msra.mxu0 0
      %887 = vmatprep.subr.bf16.mxu0 0
      %888 = vmatpush1.bf16.msra.mxu0 0
      %889 = vmatprep.subr.bf16.mxu0 0
      %890 = vmatpush1.bf16.msra.mxu0 0
      %891 = vmatprep.subr.bf16.mxu0 0
      %892 = vmatpush1.bf16.msra.mxu0 0
      %893 = vmatprep.subr.bf16.mxu0 0
      %894 = vmatpush1.bf16.msra.mxu0 0
      %895 = vmatprep.mubr.bf16.mxu0 0
      %896 = vmatmul.mubr.bf16.gmra.mrb[0].mxu0 %v861
      %v897 = vpop.f32.mrb[0].mxu0
      %v898 = vadd.f32 0.0, %v897
      %v899 = vpop.f32.mrb[0].mxu0
      %v900 = vpop.f32.mrb[0].mxu0
      %v901 = vpop.f32.mrb[0].mxu0
      %902 = vdwg.mxu0
      %v903 = vadd.f32 %v735, %v898
      %904 = vrot.lane.b32.xlu0 %v567, 80
      %v905 = vpop.permute.xlu0 %904
      %906 = vrot.lane.b32.xlu0 %v462, 80
      %v907 = vpop.permute.xlu0 %906
      %v909 = vsel %vm390, %v905, 0
      %v912 = vsel %vm390, %v907, 0
      %914 = vmatprep.subr.bf16.mxu0 0
      %915 = vmatpush1.bf16.xpose.msra.mxu0 %v912
      %916 = vmatprep.subr.bf16.mxu0 0
      %917 = vmatpush1.bf16.xpose.msra.mxu0 0
      %918 = vmatprep.subr.bf16.mxu0 0
      %919 = vmatpush1.bf16.xpose.msra.mxu0 0
      %920 = vmatprep.subr.bf16.mxu0 0
      %921 = vmatpush1.bf16.xpose.msra.mxu0 0
      %922 = vmatprep.subr.bf16.mxu0 0
      %923 = vmatpush1.bf16.xpose.msra.mxu0 0
      %924 = vmatprep.subr.bf16.mxu0 0
      %925 = vmatpush1.bf16.xpose.msra.mxu0 0
      %926 = vmatprep.subr.bf16.mxu0 0
      %927 = vmatpush1.bf16.xpose.msra.mxu0 0
      %928 = vmatprep.subr.bf16.mxu0 0
      %929 = vmatpush1.bf16.xpose.msra.mxu0 0
      %930 = vmatprep.subr.bf16.mxu0 0
      %931 = vmatpush1.bf16.xpose.msra.mxu0 0
      %932 = vmatprep.subr.bf16.mxu0 0
      %933 = vmatpush1.bf16.xpose.msra.mxu0 0
      %934 = vmatprep.subr.bf16.mxu0 0
      %935 = vmatpush1.bf16.xpose.msra.mxu0 0
      %936 = vmatprep.subr.bf16.mxu0 0
      %937 = vmatpush1.bf16.xpose.msra.mxu0 0
      %938 = vmatprep.subr.bf16.mxu0 0
      %939 = vmatpush1.bf16.xpose.msra.mxu0 0
      %940 = vmatprep.subr.bf16.mxu0 0
      %941 = vmatpush1.bf16.xpose.msra.mxu0 0
      %942 = vmatprep.subr.bf16.mxu0 0
      %943 = vmatpush1.bf16.xpose.msra.mxu0 0
      %944 = vmatprep.subr.bf16.mxu0 0
      %945 = vmatpush1.bf16.xpose.msra.mxu0 0
      %946 = vmatprep.mubr.bf16.mxu0 0
      %947 = vmatmul.mubr.bf16.gmra.mrb[0].mxu0 %v909
      %v948 = vpop.f32.mrb[0].mxu0
      %v949 = vadd.f32 0.0, %v948
      %v950 = vpop.f32.mrb[0].mxu0
      %v951 = vpop.f32.mrb[0].mxu0
      %v952 = vpop.f32.mrb[0].mxu0
      %953 = vdwg.mxu0
      %v954 = vmul.f32 %v949, 0.25
      %s955 = scalar_lea.vmem %s2, 24
      %v956 = vld [vmem:[%s955] sm:$0xff]
      %v957 = vadd.f32 %v954, %v956
      %v958 = vadd.f32 %v957, %v444
      %v959 = vsel %vm447, %v958, -inf
      %960 = vmax.xlane.f32.xlu0 %v959
      %v961 = vpop.xlane.xlu0 %960
      %v962 = vsub.f32 %v958, %v961
      %v963 = vmul.f32 %v962, 1.442695
      %v964 = vpow.pop %v963
      %v965 = vsel %vm447, %v964, 0.0
      %966 = vadd.xlane.f32.xlu0 %v965
      %v967 = vpop.xlane.xlu0 %966
      %v968 = vrcp.pop %v967
      %v969 = vmul.f32 %v964, %v968
      %v970 = vpack.c.bf16 %v969, %v969
      %971 = vrot.lane.b32.xlu0 %v462, 16
      %v972 = vpop.permute.xlu0 %971
      %v974 = vsel %vm447, %v970, 0
      %v977 = vsel %vm468, %v972, 0
      %979 = vmatprep.subr.bf16.mxu0 0
      %980 = vmatpush1.bf16.msra.mxu0 %v977
      %981 = vmatprep.subr.bf16.mxu0 0
      %982 = vmatpush1.bf16.msra.mxu0 0
      %983 = vmatprep.subr.bf16.mxu0 0
      %984 = vmatpush1.bf16.msra.mxu0 0
      %985 = vmatprep.subr.bf16.mxu0 0
      %986 = vmatpush1.bf16.msra.mxu0 0
      %987 = vmatprep.subr.bf16.mxu0 0
      %988 = vmatpush1.bf16.msra.mxu0 0
      %989 = vmatprep.subr.bf16.mxu0 0
      %990 = vmatpush1.bf16.msra.mxu0 0
      %991 = vmatprep.subr.bf16.mxu0 0
      %992 = vmatpush1.bf16.msra.mxu0 0
      %993 = vmatprep.subr.bf16.mxu0 0
      %994 = vmatpush1.bf16.msra.mxu0 0
      %995 = vmatprep.subr.bf16.mxu0 0
      %996 = vmatpush1.bf16.msra.mxu0 0
      %997 = vmatprep.subr.bf16.mxu0 0
      %998 = vmatpush1.bf16.msra.mxu0 0
      %999 = vmatprep.subr.bf16.mxu0 0
      %1000 = vmatpush1.bf16.msra.mxu0 0
      %1001 = vmatprep.subr.bf16.mxu0 0
      %1002 = vmatpush1.bf16.msra.mxu0 0
      %1003 = vmatprep.subr.bf16.mxu0 0
      %1004 = vmatpush1.bf16.msra.mxu0 0
      %1005 = vmatprep.subr.bf16.mxu0 0
      %1006 = vmatpush1.bf16.msra.mxu0 0
      %1007 = vmatprep.subr.bf16.mxu0 0
      %1008 = vmatpush1.bf16.msra.mxu0 0
      %1009 = vmatprep.subr.bf16.mxu0 0
      %1010 = vmatpush1.bf16.msra.mxu0 0
      %1011 = vmatprep.mubr.bf16.mxu0 0
      %1012 = vmatmul.mubr.bf16.gmra.mrb[0].mxu0 %v974
      %v1013 = vpop.f32.mrb[0].mxu0
      %v1014 = vadd.f32 0.0, %v1013
      %v1015 = vpop.f32.mrb[0].mxu0
      %v1016 = vpop.f32.mrb[0].mxu0
      %v1017 = vpop.f32.mrb[0].mxu0
      %1018 = vdwg.mxu0
      %v1019 = vpack.c.bf16 %v1014, %v1014
      %v1020 = vld [vmem:[%s4 + $0x18] sm:$0xf]
      %v1021 = vld [vmem:[%s4 + $0x1c] sm:$0xf]
      %v1024 = vunpack.c.l.b16 %v1020
      %v1025 = vunpack.c.l.b16 %v1021
      %v1026 = vpack.c.b16 %v1025, %v1024
      %v1029 = vsel %vm390, %v1019, 0
      %1031 = vmatprep.subr.bf16.mxu0 0
      %1032 = vmatpush1.bf16.msra.mxu0 %v1026
      %1033 = vmatprep.subr.bf16.mxu0 0
      %1034 = vmatpush1.bf16.msra.mxu0 0
      %1035 = vmatprep.subr.bf16.mxu0 0
      %1036 = vmatpush1.bf16.msra.mxu0 0
      %1037 = vmatprep.subr.bf16.mxu0 0
      %1038 = vmatpush1.bf16.msra.mxu0 0
      %1039 = vmatprep.subr.bf16.mxu0 0
      %1040 = vmatpush1.bf16.msra.mxu0 0
      %1041 = vmatprep.subr.bf16.mxu0 0
      %1042 = vmatpush1.bf16.msra.mxu0 0
      %1043 = vmatprep.subr.bf16.mxu0 0
      %1044 = vmatpush1.bf16.msra.mxu0 0
      %1045 = vmatprep.subr.bf16.mxu0 0
      %1046 = vmatpush1.bf16.msra.mxu0 0
      %1047 = vmatprep.subr.bf16.mxu0 0
      %1048 = vmatpush1.bf16.msra.mxu0 0
      %1049 = vmatprep.subr.bf16.mxu0 0
      %1050 = vmatpush1.bf16.msra.mxu0 0
      %1051 = vmatprep.subr.bf16.mxu0 0
      %1052 = vmatpush1.bf16.msra.mxu0 0
      %1053 = vmatprep.subr.bf16.mxu0 0
      %1054 = vmatpush1.bf16.msra.mxu0 0
      %1055 = vmatprep.subr.bf16.mxu0 0
      %1056 = vmatpush1.bf16.msra.mxu0 0
      %1057 = vmatprep.subr.bf16.mxu0 0
      %1058 = vmatpush1.bf16.msra.mxu0 0
      %1059 = vmatprep.subr.bf16.mxu0 0
      %1060 = vmatpush1.bf16.msra.mxu0 0
      %1061 = vmatprep.subr.bf16.mxu0 0
      %1062 = vmatpush1.bf16.msra.mxu0 0
      %1063 = vmatprep.mubr.bf16.mxu0 0
      %1064 = vmatmul.mubr.bf16.gmra.mrb[0].mxu0 %v1029
      %v1065 = vpop.f32.mrb[0].mxu0
      %v1066 = vadd.f32 0.0, %v1065
      %v1067 = vpop.f32.mrb[0].mxu0
      %v1068 = vpop.f32.mrb[0].mxu0
      %v1069 = vpop.f32.mrb[0].mxu0
      %1070 = vdwg.mxu0
      %v1071 = vadd.f32 %v903, %v1066
      %vm1072 = vcmask 523264
      %v1073 = vsel %vm1072, %v1071, 0.0
      %1074 = vadd.xlane.f32.xlu0 %v1073
      %v1075 = vpop.xlane.xlu0 %1074
      %v1076 = vrcp.pop 64.0
      %v1077 = vmul.f32 %v1075, %v1076
      %v1078 = vsub.f32 %v1071, %v1077
      %v1079 = vmul.f32 %v1078, %v1078
      %v1080 = vsel %vm1072, %v1079, 0.0
      %1081 = vadd.xlane.f32.xlu0 %v1080
      %v1082 = vpop.xlane.xlu0 %1081
      %v1083 = vmul.f32 %v1082, %v1076
      %v1084 = vadd.f32 %v1083, 1e-06
      %v1085 = vrsqrt.pop %v1084
      %v1086 = vmul.f32 %v1078, %v1085
      %v1087 = vld [vmem:[%s7] sm:$0x1]
      %v1089 = vlaneseq
      %v1090 = vshrl.u32 %v1089, 7
      %v1091 = vsub.s32 0, %v1090
      %v1092 = vrot.slane %v1087, %v1091
      %v1094 = vmul.f32 %v1086, %v1092
      %v1095 = vld [vmem:[%s8] sm:$0x1]
      %v1097 = vlaneseq
      %v1098 = vshrl.u32 %v1097, 7
      %v1099 = vsub.s32 0, %v1098
      %v1100 = vrot.slane %v1095, %v1099
      %v1102 = vadd.f32 %v1094, %v1100
      %v1103 = vpack.c.bf16 %v1102, %v1102
      %vm1104 = vcmask 519168
      %1105 = vst.msk [vmem:[%s375] sm:$0xf] %vm1104, %v1103
      %p1106 = scmp.lt.s32.totalorder %s20, 1
      %s1107 = scalar_select %p1106, %s20, 1
      %s1108 = smul.addr %s1107, 4
      %s1109 = scalar_lea.vmem %s9, %s1108
      // Predicated region
      $region57: #{forward.30} parent=55 // pred_check
        %p1110 = pneg %p247
      $region58: #{forward.30} parent=55 // pred_check_branch
        %1112 = sbr.rel (%p1110) target = $region60
      $region59: #{forward.30} parent=55 // pred_region
        _
      $region60: #{forward.30} parent=55 // pred_fallthru
        _
    $region56: #{forward.30} parent=5 // pred_fallthru
      _
    %p1113 = scmp.le.s32.totalorder 2, %s15
    // Predicated region
    $region61: #{forward.30} parent=5 // pred_check
      %p1114 = pneg %p1113
    $region62: #{forward.30} parent=5 // pred_check_branch
      %1116 = sbr.rel (%p1114) target = $region64
    $region63: #{forward.30} parent=5 // pred_region
      %s1117 = ssub.s32 %s15, 2
      // Predicated region
      $region65: #{forward.30} parent=63 // pred_check
        %p1118 = pneg %p253
      $region66: #{forward.30} parent=63 // pred_check_branch
        %1120 = sbr.rel (%p1118) target = $region68
      $region67: #{forward.30} parent=63 // pred_region
        %p1121 = scmp.lt.s32.totalorder %s21, 1
        %s1122 = scalar_select %p1121, %s21, 1
        %s1123 = smul.addr %s1122, 4
        %s1124 = scalar_lea.vmem %s9, %s1123
      $region68: #{forward.30} parent=63 // pred_fallthru
        _
    $region64: #{forward.30} parent=5 // pred_fallthru
      _
  $region6: #{forward.30} parent=0 // loop_footer
    %s19 = sadd.s32 1, %s15
  $region7: #{forward.30} parent=0 // loop_footer_branch
    %14 = sbr.rel target = $region3
  $region8: #{forward.30} parent=0 // loop_exit
    _

// kernel: forward.39
$region0: #{forward.39}
  #allocation0 [shape = 'u32[]', space=smem, size = 0x4, offset = 0x4, fixed_abs, tag = 'smem constant byte address 0x4 - core index']
  #allocation1 [shape = 'u32[144,128]{1,0:T(1,128)}', space=vmem, size = 0x12000, scoped, tag = 'internal scratch']
  #allocation2 [shape = 'f32[16,128]{1,0:T(8,128)}', space=vmem, size = 0x2000, scoped, tag = 'scratch operand']
  %s0 = inlined_call_operand.vmem [shape: bf16[16,64], index: 0, kind: input, shape index: {}]
  %s1 = inlined_call_operand.vmem [shape: bf16[64,128], index: 1, kind: input, shape index: {}]
  %s2 = inlined_call_operand.vmem [shape: f32[1,128], index: 2, kind: input, shape index: {}]
  %s3 = inlined_call_operand.vmem [shape: f32[16,128], index: 3, kind: output, shape index: {}]
  %s4 = sld [smem:[#allocation0]]
  $region30: #{forward.39} parent=0
    _
  %s6 = ssub.s32 1, %s4
  %s7 = scalar_select 0, %s6, %s4
  // Predicated region
  $region2: #{forward.39} parent=0 // pred_check
    _
  $region3: #{forward.39} parent=0 // pred_check_branch
    %9 = sbr.rel (0) target = $region5
  $region4: #{forward.39} parent=0 // pred_region
    _
  $region5: #{forward.39} parent=0 // pred_fallthru
    _
  // Predicated region
  $region6: #{forward.39} parent=0 // pred_check
    _
  $region7: #{forward.39} parent=0 // pred_check_branch
    %11 = sbr.rel (0) target = $region9
  $region8: #{forward.39} parent=0 // pred_region
    _
  $region9: #{forward.39} parent=0 // pred_fallthru
    _
  // Predicated region
  $region10: #{forward.39} parent=0 // pred_check
    _
  $region11: #{forward.39} parent=0 // pred_check_branch
    %13 = sbr.rel (0) target = $region13
  $region12: #{forward.39} parent=0 // pred_region
    _
  $region13: #{forward.39} parent=0 // pred_fallthru
    _
  %p15 = scmp.eq.s32.totalorder 0, 0
  // Predicated region
  $region14: #{forward.39} parent=0 // pred_check
    %p16 = pneg %p15
  $region15: #{forward.39} parent=0 // pred_check_branch
    %18 = sbr.rel (%p16) target = $region17
  $region16: #{forward.39} parent=0 // pred_region
    %19 = vst [vmem:[#allocation2] sm:$0xff] 0.0
    %20 = vst [vmem:[#allocation2 + $0x8] sm:$0xff] 0.0
  $region17: #{forward.39} parent=0 // pred_fallthru
    _
  %v21 = vld [vmem:[#allocation2] sm:$0xff]
  %v22 = vld [vmem:[#allocation2 + $0x8] sm:$0xff]
  %v23 = vld [vmem:[%s0] sm:$0xf]
  %v24 = vld [vmem:[%s0 + $0x4] sm:$0xf]
  %v25 = vld [vmem:[%s1] sm:$0xf]
  %v26 = vld [vmem:[%s1 + $0x4] sm:$0xf]
  %v27 = vld [vmem:[%s1 + $0x8] sm:$0xf]
  %v28 = vld [vmem:[%s1 + $0xc] sm:$0xf]
  %v29 = vld [vmem:[%s1 + $0x10] sm:$0xf]
  %v30 = vld [vmem:[%s1 + $0x14] sm:$0xf]
  %v31 = vld [vmem:[%s1 + $0x18] sm:$0xf]
  %v32 = vld [vmem:[%s1 + $0x1c] sm:$0xf]
  %v35 = vunpack.c.l.b16 %v23
  %v36 = vunpack.c.l.b16 %v24
  %v37 = vpack.c.b16 %v36, %v35
  %v46 = vunpack.c.l.b16 %v25
  %v47 = vunpack.c.l.b16 %v26
  %v48 = vunpack.c.l.b16 %v27
  %v49 = vunpack.c.l.b16 %v28
  %v50 = vunpack.c.l.b16 %v29
  %v51 = vunpack.c.l.b16 %v30
  %v52 = vunpack.c.l.b16 %v31
  %v53 = vunpack.c.l.b16 %v32
  %v54 = vpack.c.b16 %v47, %v46
  %v55 = vpack.c.b16 %v49, %v48
  %v56 = vpack.c.b16 %v51, %v50
  %v57 = vpack.c.b16 %v53, %v52
  %vm62 = vcmask 523264
  %v64 = vsel %vm62, %v37, 0
  %66 = vmatprep.subr.bf16.mxu0 0
  %67 = vmatpush1.bf16.msra.mxu0 %v54
  %68 = vmatprep.subr.bf16.mxu0 0
  %69 = vmatpush1.bf16.msra.mxu0 %v55
  %70 = vmatprep.subr.bf16.mxu0 0
  %71 = vmatpush1.bf16.msra.mxu0 %v56
  %72 = vmatprep.subr.bf16.mxu0 0
  %73 = vmatpush1.bf16.msra.mxu0 %v57
  %74 = vmatprep.subr.bf16.mxu0 0
  %75 = vmatpush1.bf16.msra.mxu0 0
  %76 = vmatprep.subr.bf16.mxu0 0
  %77 = vmatpush1.bf16.msra.mxu0 0
  %78 = vmatprep.subr.bf16.mxu0 0
  %79 = vmatpush1.bf16.msra.mxu0 0
  %80 = vmatprep.subr.bf16.mxu0 0
  %81 = vmatpush1.bf16.msra.mxu0 0
  %82 = vmatprep.subr.bf16.mxu0 0
  %83 = vmatpush1.bf16.msra.mxu0 0
  %84 = vmatprep.subr.bf16.mxu0 0
  %85 = vmatpush1.bf16.msra.mxu0 0
  %86 = vmatprep.subr.bf16.mxu0 0
  %87 = vmatpush1.bf16.msra.mxu0 0
  %88 = vmatprep.subr.bf16.mxu0 0
  %89 = vmatpush1.bf16.msra.mxu0 0
  %90 = vmatprep.subr.bf16.mxu0 0
  %91 = vmatpush1.bf16.msra.mxu0 0
  %92 = vmatprep.subr.bf16.mxu0 0
  %93 = vmatpush1.bf16.msra.mxu0 0
  %94 = vmatprep.subr.bf16.mxu0 0
  %95 = vmatpush1.bf16.msra.mxu0 0
  %96 = vmatprep.subr.bf16.mxu0 0
  %97 = vmatpush1.bf16.msra.mxu0 0
  %98 = vmatprep.mubr.bf16.mxu0 0
  %99 = vmatmul.mubr.bf16.gmra.mrb[0].mxu0 %v64
  %v100 = vpop.f32.mrb[0].mxu0
  %v101 = vadd.f32 0.0, %v100
  %v102 = vpop.f32.mrb[0].mxu0
  %v103 = vpop.f32.mrb[0].mxu0
  %v104 = vadd.f32 0.0, %v103
  %v105 = vpop.f32.mrb[0].mxu0
  %106 = vdwg.mxu0
  %v107 = vadd.f32 %v21, %v101
  %v108 = vadd.f32 %v22, %v104
  %109 = vst [vmem:[#allocation2] sm:$0xff] %v107
  %110 = vst [vmem:[#allocation2 + $0x8] sm:$0xff] %v108
  // Predicated region
  $region18: #{forward.39} parent=0 // pred_check
    %p111 = pneg %p15
  $region19: #{forward.39} parent=0 // pred_check_branch
    %113 = sbr.rel (%p111) target = $region21
  $region20: #{forward.39} parent=0 // pred_region
    %v114 = vld [vmem:[#allocation2] sm:$0xff]
    %v115 = vld [vmem:[#allocation2 + $0x8] sm:$0xff]
    %v116 = vld [vmem:[%s2] sm:$0x1]
    %v118 = vlaneseq
    %v119 = vshrl.u32 %v118, 7
    %v120 = vsub.s32 0, %v119
    %v121 = vrot.slane %v116, %v120
    %v123 = vadd.f32 %v114, %v121
    %v124 = vadd.f32 %v115, %v121
    %125 = vst [vmem:[%s3] sm:$0xff] %v123
    %126 = vst [vmem:[%s3 + $0x8] sm:$0xff] %v124
  $region21: #{forward.39} parent=0 // pred_fallthru
    _
  // Predicated region
  $region22: #{forward.39} parent=0 // pred_check
    _
  $region23: #{forward.39} parent=0 // pred_check_branch
    %128 = sbr.rel (0) target = $region25
  $region24: #{forward.39} parent=0 // pred_region
    _
  $region25: #{forward.39} parent=0 // pred_fallthru
    _
  // Predicated region
  $region26: #{forward.39} parent=0 // pred_check
    _
  $region27: #{forward.39} parent=0 // pred_check_branch
    %130 = sbr.rel (0) target = $region29
  $region28: #{forward.39} parent=0 // pred_region
    _
  $region29: #{forward.39} parent=0 // pred_fallthru
    _

</llo_original>
